<compile_context>
chip_gen: v7x
topology: tpu7x:2x2x1
jax: 0.10.0
libtpu: 0.0.40
codegen_flags: <defaults>
</compile_context>

<pallas_src>
import math

import jax
import jax.numpy as jnp
from jax.experimental import pallas as pl
from jax.experimental.pallas import tpu as pltpu

VOCAB = 256
HIDDEN = 32
GATE_PAD = 128          # each GRU gate padded to a full 128-lane block


def seq2seq_kernel(enc_x_ref, dec_x_ref,
                   ewih_ref, ewhh_ref, ebi_ref, ebhn_ref,
                   dwih_ref, dwhh_ref, dbi_ref, dbhn_ref,
                   fcw_ref, fcb_ref,
                   out_ref):
    GP = GATE_PAD
    src_len = enc_x_ref.shape[0]
    tgt_len = dec_x_ref.shape[0]

    # ---- input-side gate pre-activations for ALL timesteps (batched, M=len)
    # These do not depend on h, so they sit off the recurrent critical chain.
    enc_gi = jnp.dot(enc_x_ref[...], ewih_ref[...],
                     preferred_element_type=jnp.float32) + ebi_ref[...]
    dec_gi = jnp.dot(dec_x_ref[...], dwih_ref[...],
                     preferred_element_type=jnp.float32) + dbi_ref[...]

    def gru_step(gi_row, h, whh_ref, bhn_ref):
        # gi_row: (1, 3*GP) precomputed x@W_ih + [b_ir+b_hr | b_iz+b_hz | b_in]
        # h: (1, GP); padded lanes (>= HIDDEN) are zero and provably stay zero
        # (gi/gh are zero there, so new_h_pad = 0.5 * h_pad = 0).
        gh = jnp.dot(h, whh_ref[...], preferred_element_type=jnp.float32)
        rz = jax.nn.sigmoid(gi_row[:, :2 * GP] + gh[:, :2 * GP])   # fused r|z
        r = rz[:, :GP]
        z = rz[:, GP:]
        n = jnp.tanh(gi_row[:, 2 * GP:] + r * (gh[:, 2 * GP:] + bhn_ref[...]))
        return (1.0 - z) * n + z * h

    # ---- encoder GRU over the source sequence (init state = zeros) ----
    h = jnp.zeros((1, GP), jnp.float32)
    for i in range(src_len):                      # tiny trip count, fully unrolled
        h = gru_step(enc_gi[i:i + 1, :], h, ewhh_ref, ebhn_ref)

    # ---- decoder GRU (teacher-forced inputs already embedded/batched) ----
    hs = []
    for i in range(tgt_len):
        h = gru_step(dec_gi[i:i + 1, :], h, dwhh_ref, dbhn_ref)
        hs.append(h)
    hdec = jnp.concatenate(hs, axis=0)            # (tgt_len, GP) — stays in vregs

    # ---- fc head: one well-shaped matmul + single lane-dense store ----
    out_ref[...] = (jnp.dot(hdec, fcw_ref[...],
                            preferred_element_type=jnp.float32)
                    + fcb_ref[...])


def _pack_gru(w_ih, w_hh, b_ih, b_hh, hidden, gate_pad):
    """Repack PyTorch GRU weights (3H, H_in) into lane-aligned fused layout."""
    H, GP = hidden, gate_pad
    wih = jnp.zeros((GP, 3 * GP), jnp.float32)    # input dim padded to GP lanes
    whh = jnp.zeros((GP, 3 * GP), jnp.float32)
    bi = jnp.zeros((1, 3 * GP), jnp.float32)
    bhn = jnp.zeros((1, GP), jnp.float32)
    for g in range(3):
        wih = wih.at[:H, g * GP:g * GP + H].set(w_ih[g * H:(g + 1) * H, :].T)
        whh = whh.at[:H, g * GP:g * GP + H].set(w_hh[g * H:(g + 1) * H, :].T)
    bi = bi.at[0, 0 * GP:0 * GP + H].set(b_ih[0:H] + b_hh[0:H])            # r
    bi = bi.at[0, 1 * GP:1 * GP + H].set(b_ih[H:2 * H] + b_hh[H:2 * H])    # z
    bi = bi.at[0, 2 * GP:2 * GP + H].set(b_ih[2 * H:3 * H])                # n (input side)
    bhn = bhn.at[0, :H].set(b_hh[2 * H:3 * H])                             # n (hidden side)
    return wih, whh, bi, bhn


def make_params(key, vocab, hidden):
    ks = jax.random.split(key, 11)
    s = float(1.0 / math.sqrt(hidden))

    def u(k, shape, scale):
        return jax.random.uniform(k, shape, jnp.float32, -scale, scale)

    return dict(
        embedding=u(ks[0], (vocab, hidden), 1.0),
        enc_w_ih=u(ks[1], (3 * hidden, hidden), s),
        enc_w_hh=u(ks[2], (3 * hidden, hidden), s),
        enc_b_ih=u(ks[3], (3 * hidden,), s),
        enc_b_hh=u(ks[4], (3 * hidden,), s),
        dec_w_ih=u(ks[5], (3 * hidden, hidden), s),
        dec_w_hh=u(ks[6], (3 * hidden, hidden), s),
        dec_b_ih=u(ks[7], (3 * hidden,), s),
        dec_b_hh=u(ks[8], (3 * hidden,), s),
        fc_w=u(ks[9], (vocab, hidden), s),
        fc_b=u(ks[10], (vocab,), s),
    )


def pack_params(params):
    """One-time host-side repacking (hoisted out of the per-call path)."""
    emb = params["embedding"]
    V, H = emb.shape
    GP = GATE_PAD
    emb_pad = jnp.zeros((V, GP), jnp.float32).at[:, :H].set(emb)
    ewih, ewhh, ebi, ebhn = _pack_gru(params["enc_w_ih"], params["enc_w_hh"],
                                      params["enc_b_ih"], params["enc_b_hh"], H, GP)
    dwih, dwhh, dbi, dbhn = _pack_gru(params["dec_w_ih"], params["dec_w_hh"],
                                      params["dec_b_ih"], params["dec_b_hh"], H, GP)
    fcw = jnp.zeros((GP, V), jnp.float32).at[:H, :].set(params["fc_w"].T)
    fcb = params["fc_b"].reshape(1, V)
    return dict(emb=emb_pad,
                ewih=ewih, ewhh=ewhh, ebi=ebi, ebhn=ebhn,
                dwih=dwih, dwhh=dwhh, dbi=dbi, dbhn=dbhn,
                fcw=fcw, fcb=fcb)


@jax.jit
def seq2seq_forward(packed, inputs, targets):
    """inputs: int32 [src_len]; targets: int32 [tgt_len] -> float32 [tgt_len, V].

    NOTE: matches torch.stack(outputs).squeeze() only for tgt_len > 1.
    """
    GP = GATE_PAD
    V = packed["fcb"].shape[1]
    tgt_len = targets.shape[0]

    inputs = inputs.astype(jnp.int32)
    targets = targets.astype(jnp.int32)
    # Teacher forcing: decoder inputs are [0, targets[0], ..., targets[-2]].
    dec_tokens = jnp.concatenate([jnp.zeros((1,), jnp.int32), targets[:-1]])
    enc_x = jnp.take(packed["emb"], inputs, axis=0)        # (src_len, GP)
    dec_x = jnp.take(packed["emb"], dec_tokens, axis=0)    # (tgt_len, GP)

    vspec = pl.BlockSpec(memory_space=pltpu.MemorySpace.VMEM)
    grid_spec = pltpu.PrefetchScalarGridSpec(
        num_scalar_prefetch=0,
        grid=(1,),
        in_specs=[vspec] * 12,
        out_specs=vspec,
    )

    return pl.pallas_call(
        seq2seq_kernel,
        out_shape=jax.ShapeDtypeStruct((tgt_len, V), jnp.float32),
        grid_spec=grid_spec,
        compiler_params=pltpu.CompilerParams(
            dimension_semantics=("arbitrary",)),
    )(enc_x, dec_x,
      packed["ewih"], packed["ewhh"], packed["ebi"], packed["ebhn"],
      packed["dwih"], packed["dwhh"], packed["dbi"], packed["dbhn"],
      packed["fcw"], packed["fcb"])


def seq2seq_reference(params, inputs, targets):
    """Pure-JAX reference mirroring the PyTorch forward."""
    emb = params["embedding"]
    H = emb.shape[1]

    def gru_cell(x, h, w_ih, w_hh, b_ih, b_hh):
        gi = x @ w_ih.T + b_ih
        gh = h @ w_hh.T + b_hh
        r = jax.nn.sigmoid(gi[:, :H] + gh[:, :H])
        z = jax.nn.sigmoid(gi[:, H:2 * H] + gh[:, H:2 * H])
        n = jnp.tanh(gi[:, 2 * H:] + r * gh[:, 2 * H:])
        return (1.0 - z) * n + z * h

    h = jnp.zeros((1, H), jnp.float32)
    for t in range(inputs.shape[0]):
        x = emb[inputs[t]][None, :]
        h = gru_cell(x, h, params["enc_w_ih"], params["enc_w_hh"],
                     params["enc_b_ih"], params["enc_b_hh"])
    outs = []
    tok = jnp.array(0, dtype=targets.dtype)
    for t in range(targets.shape[0]):
        x = emb[tok][None, :]
        h = gru_cell(x, h, params["dec_w_ih"], params["dec_w_hh"],
                     params["dec_b_ih"], params["dec_b_hh"])
        outs.append(h @ params["fc_w"].T + params["fc_b"])
        tok = targets[t]
    return jnp.concatenate(outs, axis=0)


if __name__ == "__main__":
    key = jax.random.PRNGKey(0)
    pkey, ikey, tkey = jax.random.split(key, 3)

    params = make_params(pkey, VOCAB, HIDDEN)
    packed = pack_params(params)

    src_len, tgt_len = 8, 8
    inputs = jax.random.randint(ikey, (src_len,), 0, VOCAB, dtype=jnp.int32)
    targets = jax.random.randint(tkey, (tgt_len,), 0, VOCAB, dtype=jnp.int32)

    out = seq2seq_forward(packed, inputs, targets)
    jax.block_until_ready(out)

    ref = seq2seq_reference(params, inputs, targets)
    assert out.shape == (tgt_len, VOCAB), out.shape
    assert jnp.allclose(out, ref, atol=1e-3, rtol=1e-3), \
        float(jnp.max(jnp.abs(out - ref)))
    print("KERNEL_OK")
</pallas_src>

<mosaic_0001>
module attributes {stable_mosaic.version = 11 : i64} {
  func.func @seq2seq_kernel(%arg0: i32, %arg1: memref<8x128xf32, #tpu.memory_space<vmem>>, %arg2: memref<8x128xf32, #tpu.memory_space<vmem>>, %arg3: memref<128x384xf32, #tpu.memory_space<vmem>>, %arg4: memref<128x384xf32, #tpu.memory_space<vmem>>, %arg5: memref<1x384xf32, #tpu.memory_space<vmem>>, %arg6: memref<1x128xf32, #tpu.memory_space<vmem>>, %arg7: memref<128x384xf32, #tpu.memory_space<vmem>>, %arg8: memref<128x384xf32, #tpu.memory_space<vmem>>, %arg9: memref<1x384xf32, #tpu.memory_space<vmem>>, %arg10: memref<1x128xf32, #tpu.memory_space<vmem>>, %arg11: memref<128x256xf32, #tpu.memory_space<vmem>>, %arg12: memref<1x256xf32, #tpu.memory_space<vmem>>, %arg13: memref<8x256xf32, #tpu.memory_space<vmem>>) attributes {dimension_semantics = [#tpu.dimension_semantics<arbitrary>], iteration_bounds = array<i64: 1>, scalar_prefetch = 0 : i64, scratch_operands = 0 : i64, tpu.core_type = #tpu.core_type<tc>, window_params = [{pipeline_mode = #tpu.pipeline_mode<synchronous>, transform_indices = @transform_0, window_bounds = array<i64: 8, 128>}, {pipeline_mode = #tpu.pipeline_mode<synchronous>, transform_indices = @transform_1, window_bounds = array<i64: 8, 128>}, {pipeline_mode = #tpu.pipeline_mode<synchronous>, transform_indices = @transform_2, window_bounds = array<i64: 128, 384>}, {pipeline_mode = #tpu.pipeline_mode<synchronous>, transform_indices = @transform_3, window_bounds = array<i64: 128, 384>}, {pipeline_mode = #tpu.pipeline_mode<synchronous>, transform_indices = @transform_4, window_bounds = array<i64: 1, 384>}, {pipeline_mode = #tpu.pipeline_mode<synchronous>, transform_indices = @transform_5, window_bounds = array<i64: 1, 128>}, {pipeline_mode = #tpu.pipeline_mode<synchronous>, transform_indices = @transform_6, window_bounds = array<i64: 128, 384>}, {pipeline_mode = #tpu.pipeline_mode<synchronous>, transform_indices = @transform_7, window_bounds = array<i64: 128, 384>}, {pipeline_mode = #tpu.pipeline_mode<synchronous>, transform_indices = @transform_8, window_bounds = array<i64: 1, 384>}, {pipeline_mode = #tpu.pipeline_mode<synchronous>, transform_indices = @transform_9, window_bounds = array<i64: 1, 128>}, {pipeline_mode = #tpu.pipeline_mode<synchronous>, transform_indices = @transform_10, window_bounds = array<i64: 128, 256>}, {pipeline_mode = #tpu.pipeline_mode<synchronous>, transform_indices = @transform_11, window_bounds = array<i64: 1, 256>}, {pipeline_mode = #tpu.pipeline_mode<synchronous>, transform_indices = @transform_12, window_bounds = array<i64: 8, 256>}]} {
    %c0 = arith.constant 0 : index
    %c0_0 = arith.constant 0 : index
    %0 = vector.load %arg1[%c0, %c0_0] : memref<8x128xf32, #tpu.memory_space<vmem>>, vector<8x128xf32>
    %c0_1 = arith.constant 0 : index
    %c0_2 = arith.constant 0 : index
    %1 = vector.load %arg3[%c0_1, %c0_2] : memref<128x384xf32, #tpu.memory_space<vmem>>, vector<128x384xf32>
    %cst = arith.constant dense<0.000000e+00> : vector<8x384xf32>
    %2 = tpu.matmul %0, %1, %cst {dimension_numbers = #tpu.dot_dimension_numbers<[1], [0], [0], [1], [0, 0, 1, 1], [], []>} : vector<8x128xf32>, vector<128x384xf32>, vector<8x384xf32> -> vector<8x384xf32>
    %c0_3 = arith.constant 0 : index
    %c0_4 = arith.constant 0 : index
    %3 = vector.load %arg5[%c0_3, %c0_4] : memref<1x384xf32, #tpu.memory_space<vmem>>, vector<1x384xf32>
    %4 = vector.broadcast %3 : vector<1x384xf32> to vector<8x384xf32>
    %5 = arith.addf %2, %4 : vector<8x384xf32>
    %c0_5 = arith.constant 0 : index
    %c0_6 = arith.constant 0 : index
    %6 = vector.load %arg2[%c0_5, %c0_6] : memref<8x128xf32, #tpu.memory_space<vmem>>, vector<8x128xf32>
    %c0_7 = arith.constant 0 : index
    %c0_8 = arith.constant 0 : index
    %7 = vector.load %arg7[%c0_7, %c0_8] : memref<128x384xf32, #tpu.memory_space<vmem>>, vector<128x384xf32>
    %cst_9 = arith.constant dense<0.000000e+00> : vector<8x384xf32>
    %8 = tpu.matmul %6, %7, %cst_9 {dimension_numbers = #tpu.dot_dimension_numbers<[1], [0], [0], [1], [0, 0, 1, 1], [], []>} : vector<8x128xf32>, vector<128x384xf32>, vector<8x384xf32> -> vector<8x384xf32>
    %c0_10 = arith.constant 0 : index
    %c0_11 = arith.constant 0 : index
    %9 = vector.load %arg9[%c0_10, %c0_11] : memref<1x384xf32, #tpu.memory_space<vmem>>, vector<1x384xf32>
    %10 = vector.broadcast %9 : vector<1x384xf32> to vector<8x384xf32>
    %11 = arith.addf %8, %10 : vector<8x384xf32>
    %cst_12 = arith.constant 0.000000e+00 : f32
    %12 = vector.broadcast %cst_12 : f32 to vector<1x128xf32>
    %13 = vector.extract_strided_slice %5 {offsets = [0, 0], sizes = [1, 384], strides = [1, 1]} : vector<8x384xf32> to vector<1x384xf32>
    %c0_13 = arith.constant 0 : index
    %c0_14 = arith.constant 0 : index
    %14 = vector.load %arg4[%c0_13, %c0_14] : memref<128x384xf32, #tpu.memory_space<vmem>>, vector<128x384xf32>
    %cst_15 = arith.constant dense<0.000000e+00> : vector<1x384xf32>
    %15 = tpu.matmul %12, %14, %cst_15 {dimension_numbers = #tpu.dot_dimension_numbers<[1], [0], [0], [1], [0, 0, 1, 1], [], []>} : vector<1x128xf32>, vector<128x384xf32>, vector<1x384xf32> -> vector<1x384xf32>
    %16 = vector.extract_strided_slice %13 {offsets = [0, 0], sizes = [1, 256], strides = [1, 1]} : vector<1x384xf32> to vector<1x256xf32>
    %17 = vector.extract_strided_slice %15 {offsets = [0, 0], sizes = [1, 256], strides = [1, 1]} : vector<1x384xf32> to vector<1x256xf32>
    %18 = arith.addf %16, %17 : vector<1x256xf32>
    %19 = arith.negf %18 : vector<1x256xf32>
    %20 = math.exp %19 : vector<1x256xf32>
    %cst_16 = arith.constant 1.000000e+00 : f32
    %21 = vector.broadcast %cst_16 : f32 to vector<1x256xf32>
    %22 = arith.addf %21, %20 : vector<1x256xf32>
    %23 = arith.divf %21, %22 : vector<1x256xf32>
    %24 = vector.extract_strided_slice %23 {offsets = [0, 0], sizes = [1, 128], strides = [1, 1]} : vector<1x256xf32> to vector<1x128xf32>
    %25 = vector.extract_strided_slice %23 {offsets = [0, 128], sizes = [1, 128], strides = [1, 1]} : vector<1x256xf32> to vector<1x128xf32>
    %26 = vector.extract_strided_slice %13 {offsets = [0, 256], sizes = [1, 128], strides = [1, 1]} : vector<1x384xf32> to vector<1x128xf32>
    %27 = vector.extract_strided_slice %15 {offsets = [0, 256], sizes = [1, 128], strides = [1, 1]} : vector<1x384xf32> to vector<1x128xf32>
    %c0_17 = arith.constant 0 : index
    %c0_18 = arith.constant 0 : index
    %28 = vector.load %arg6[%c0_17, %c0_18] : memref<1x128xf32, #tpu.memory_space<vmem>>, vector<1x128xf32>
    %29 = arith.addf %27, %28 : vector<1x128xf32>
    %30 = arith.mulf %24, %29 : vector<1x128xf32>
    %31 = arith.addf %26, %30 : vector<1x128xf32>
    %32 = math.tanh %31 : vector<1x128xf32>
    %cst_19 = arith.constant 1.000000e+00 : f32
    %33 = vector.broadcast %cst_19 : f32 to vector<1x128xf32>
    %34 = arith.subf %33, %25 : vector<1x128xf32>
    %35 = arith.mulf %34, %32 : vector<1x128xf32>
    %36 = arith.mulf %25, %12 : vector<1x128xf32>
    %37 = arith.addf %35, %36 : vector<1x128xf32>
    %38 = vector.extract_strided_slice %5 {offsets = [1, 0], sizes = [1, 384], strides = [1, 1]} : vector<8x384xf32> to vector<1x384xf32>
    %c0_20 = arith.constant 0 : index
    %c0_21 = arith.constant 0 : index
    %39 = vector.load %arg4[%c0_20, %c0_21] : memref<128x384xf32, #tpu.memory_space<vmem>>, vector<128x384xf32>
    %cst_22 = arith.constant dense<0.000000e+00> : vector<1x384xf32>
    %40 = tpu.matmul %37, %39, %cst_22 {dimension_numbers = #tpu.dot_dimension_numbers<[1], [0], [0], [1], [0, 0, 1, 1], [], []>} : vector<1x128xf32>, vector<128x384xf32>, vector<1x384xf32> -> vector<1x384xf32>
    %41 = vector.extract_strided_slice %38 {offsets = [0, 0], sizes = [1, 256], strides = [1, 1]} : vector<1x384xf32> to vector<1x256xf32>
    %42 = vector.extract_strided_slice %40 {offsets = [0, 0], sizes = [1, 256], strides = [1, 1]} : vector<1x384xf32> to vector<1x256xf32>
    %43 = arith.addf %41, %42 : vector<1x256xf32>
    %44 = arith.negf %43 : vector<1x256xf32>
    %45 = math.exp %44 : vector<1x256xf32>
    %cst_23 = arith.constant 1.000000e+00 : f32
    %46 = vector.broadcast %cst_23 : f32 to vector<1x256xf32>
    %47 = arith.addf %46, %45 : vector<1x256xf32>
    %48 = arith.divf %46, %47 : vector<1x256xf32>
    %49 = vector.extract_strided_slice %48 {offsets = [0, 0], sizes = [1, 128], strides = [1, 1]} : vector<1x256xf32> to vector<1x128xf32>
    %50 = vector.extract_strided_slice %48 {offsets = [0, 128], sizes = [1, 128], strides = [1, 1]} : vector<1x256xf32> to vector<1x128xf32>
    %51 = vector.extract_strided_slice %38 {offsets = [0, 256], sizes = [1, 128], strides = [1, 1]} : vector<1x384xf32> to vector<1x128xf32>
    %52 = vector.extract_strided_slice %40 {offsets = [0, 256], sizes = [1, 128], strides = [1, 1]} : vector<1x384xf32> to vector<1x128xf32>
    %c0_24 = arith.constant 0 : index
    %c0_25 = arith.constant 0 : index
    %53 = vector.load %arg6[%c0_24, %c0_25] : memref<1x128xf32, #tpu.memory_space<vmem>>, vector<1x128xf32>
    %54 = arith.addf %52, %53 : vector<1x128xf32>
    %55 = arith.mulf %49, %54 : vector<1x128xf32>
    %56 = arith.addf %51, %55 : vector<1x128xf32>
    %57 = math.tanh %56 : vector<1x128xf32>
    %cst_26 = arith.constant 1.000000e+00 : f32
    %58 = vector.broadcast %cst_26 : f32 to vector<1x128xf32>
    %59 = arith.subf %58, %50 : vector<1x128xf32>
    %60 = arith.mulf %59, %57 : vector<1x128xf32>
    %61 = arith.mulf %50, %37 : vector<1x128xf32>
    %62 = arith.addf %60, %61 : vector<1x128xf32>
    %63 = vector.extract_strided_slice %5 {offsets = [2, 0], sizes = [1, 384], strides = [1, 1]} : vector<8x384xf32> to vector<1x384xf32>
    %c0_27 = arith.constant 0 : index
    %c0_28 = arith.constant 0 : index
    %64 = vector.load %arg4[%c0_27, %c0_28] : memref<128x384xf32, #tpu.memory_space<vmem>>, vector<128x384xf32>
    %cst_29 = arith.constant dense<0.000000e+00> : vector<1x384xf32>
    %65 = tpu.matmul %62, %64, %cst_29 {dimension_numbers = #tpu.dot_dimension_numbers<[1], [0], [0], [1], [0, 0, 1, 1], [], []>} : vector<1x128xf32>, vector<128x384xf32>, vector<1x384xf32> -> vector<1x384xf32>
    %66 = vector.extract_strided_slice %63 {offsets = [0, 0], sizes = [1, 256], strides = [1, 1]} : vector<1x384xf32> to vector<1x256xf32>
    %67 = vector.extract_strided_slice %65 {offsets = [0, 0], sizes = [1, 256], strides = [1, 1]} : vector<1x384xf32> to vector<1x256xf32>
    %68 = arith.addf %66, %67 : vector<1x256xf32>
    %69 = arith.negf %68 : vector<1x256xf32>
    %70 = math.exp %69 : vector<1x256xf32>
    %cst_30 = arith.constant 1.000000e+00 : f32
    %71 = vector.broadcast %cst_30 : f32 to vector<1x256xf32>
    %72 = arith.addf %71, %70 : vector<1x256xf32>
    %73 = arith.divf %71, %72 : vector<1x256xf32>
    %74 = vector.extract_strided_slice %73 {offsets = [0, 0], sizes = [1, 128], strides = [1, 1]} : vector<1x256xf32> to vector<1x128xf32>
    %75 = vector.extract_strided_slice %73 {offsets = [0, 128], sizes = [1, 128], strides = [1, 1]} : vector<1x256xf32> to vector<1x128xf32>
    %76 = vector.extract_strided_slice %63 {offsets = [0, 256], sizes = [1, 128], strides = [1, 1]} : vector<1x384xf32> to vector<1x128xf32>
    %77 = vector.extract_strided_slice %65 {offsets = [0, 256], sizes = [1, 128], strides = [1, 1]} : vector<1x384xf32> to vector<1x128xf32>
    %c0_31 = arith.constant 0 : index
    %c0_32 = arith.constant 0 : index
    %78 = vector.load %arg6[%c0_31, %c0_32] : memref<1x128xf32, #tpu.memory_space<vmem>>, vector<1x128xf32>
    %79 = arith.addf %77, %78 : vector<1x128xf32>
    %80 = arith.mulf %74, %79 : vector<1x128xf32>
    %81 = arith.addf %76, %80 : vector<1x128xf32>
    %82 = math.tanh %81 : vector<1x128xf32>
    %cst_33 = arith.constant 1.000000e+00 : f32
    %83 = vector.broadcast %cst_33 : f32 to vector<1x128xf32>
    %84 = arith.subf %83, %75 : vector<1x128xf32>
    %85 = arith.mulf %84, %82 : vector<1x128xf32>
    %86 = arith.mulf %75, %62 : vector<1x128xf32>
    %87 = arith.addf %85, %86 : vector<1x128xf32>
    %88 = vector.extract_strided_slice %5 {offsets = [3, 0], sizes = [1, 384], strides = [1, 1]} : vector<8x384xf32> to vector<1x384xf32>
    %c0_34 = arith.constant 0 : index
    %c0_35 = arith.constant 0 : index
    %89 = vector.load %arg4[%c0_34, %c0_35] : memref<128x384xf32, #tpu.memory_space<vmem>>, vector<128x384xf32>
    %cst_36 = arith.constant dense<0.000000e+00> : vector<1x384xf32>
    %90 = tpu.matmul %87, %89, %cst_36 {dimension_numbers = #tpu.dot_dimension_numbers<[1], [0], [0], [1], [0, 0, 1, 1], [], []>} : vector<1x128xf32>, vector<128x384xf32>, vector<1x384xf32> -> vector<1x384xf32>
    %91 = vector.extract_strided_slice %88 {offsets = [0, 0], sizes = [1, 256], strides = [1, 1]} : vector<1x384xf32> to vector<1x256xf32>
    %92 = vector.extract_strided_slice %90 {offsets = [0, 0], sizes = [1, 256], strides = [1, 1]} : vector<1x384xf32> to vector<1x256xf32>
    %93 = arith.addf %91, %92 : vector<1x256xf32>
    %94 = arith.negf %93 : vector<1x256xf32>
    %95 = math.exp %94 : vector<1x256xf32>
    %cst_37 = arith.constant 1.000000e+00 : f32
    %96 = vector.broadcast %cst_37 : f32 to vector<1x256xf32>
    %97 = arith.addf %96, %95 : vector<1x256xf32>
    %98 = arith.divf %96, %97 : vector<1x256xf32>
    %99 = vector.extract_strided_slice %98 {offsets = [0, 0], sizes = [1, 128], strides = [1, 1]} : vector<1x256xf32> to vector<1x128xf32>
    %100 = vector.extract_strided_slice %98 {offsets = [0, 128], sizes = [1, 128], strides = [1, 1]} : vector<1x256xf32> to vector<1x128xf32>
    %101 = vector.extract_strided_slice %88 {offsets = [0, 256], sizes = [1, 128], strides = [1, 1]} : vector<1x384xf32> to vector<1x128xf32>
    %102 = vector.extract_strided_slice %90 {offsets = [0, 256], sizes = [1, 128], strides = [1, 1]} : vector<1x384xf32> to vector<1x128xf32>
    %c0_38 = arith.constant 0 : index
    %c0_39 = arith.constant 0 : index
    %103 = vector.load %arg6[%c0_38, %c0_39] : memref<1x128xf32, #tpu.memory_space<vmem>>, vector<1x128xf32>
    %104 = arith.addf %102, %103 : vector<1x128xf32>
    %105 = arith.mulf %99, %104 : vector<1x128xf32>
    %106 = arith.addf %101, %105 : vector<1x128xf32>
    %107 = math.tanh %106 : vector<1x128xf32>
    %cst_40 = arith.constant 1.000000e+00 : f32
    %108 = vector.broadcast %cst_40 : f32 to vector<1x128xf32>
    %109 = arith.subf %108, %100 : vector<1x128xf32>
    %110 = arith.mulf %109, %107 : vector<1x128xf32>
    %111 = arith.mulf %100, %87 : vector<1x128xf32>
    %112 = arith.addf %110, %111 : vector<1x128xf32>
    %113 = vector.extract_strided_slice %5 {offsets = [4, 0], sizes = [1, 384], strides = [1, 1]} : vector<8x384xf32> to vector<1x384xf32>
    %c0_41 = arith.constant 0 : index
    %c0_42 = arith.constant 0 : index
    %114 = vector.load %arg4[%c0_41, %c0_42] : memref<128x384xf32, #tpu.memory_space<vmem>>, vector<128x384xf32>
    %cst_43 = arith.constant dense<0.000000e+00> : vector<1x384xf32>
    %115 = tpu.matmul %112, %114, %cst_43 {dimension_numbers = #tpu.dot_dimension_numbers<[1], [0], [0], [1], [0, 0, 1, 1], [], []>} : vector<1x128xf32>, vector<128x384xf32>, vector<1x384xf32> -> vector<1x384xf32>
    %116 = vector.extract_strided_slice %113 {offsets = [0, 0], sizes = [1, 256], strides = [1, 1]} : vector<1x384xf32> to vector<1x256xf32>
    %117 = vector.extract_strided_slice %115 {offsets = [0, 0], sizes = [1, 256], strides = [1, 1]} : vector<1x384xf32> to vector<1x256xf32>
    %118 = arith.addf %116, %117 : vector<1x256xf32>
    %119 = arith.negf %118 : vector<1x256xf32>
    %120 = math.exp %119 : vector<1x256xf32>
    %cst_44 = arith.constant 1.000000e+00 : f32
    %121 = vector.broadcast %cst_44 : f32 to vector<1x256xf32>
    %122 = arith.addf %121, %120 : vector<1x256xf32>
    %123 = arith.divf %121, %122 : vector<1x256xf32>
    %124 = vector.extract_strided_slice %123 {offsets = [0, 0], sizes = [1, 128], strides = [1, 1]} : vector<1x256xf32> to vector<1x128xf32>
    %125 = vector.extract_strided_slice %123 {offsets = [0, 128], sizes = [1, 128], strides = [1, 1]} : vector<1x256xf32> to vector<1x128xf32>
    %126 = vector.extract_strided_slice %113 {offsets = [0, 256], sizes = [1, 128], strides = [1, 1]} : vector<1x384xf32> to vector<1x128xf32>
    %127 = vector.extract_strided_slice %115 {offsets = [0, 256], sizes = [1, 128], strides = [1, 1]} : vector<1x384xf32> to vector<1x128xf32>
    %c0_45 = arith.constant 0 : index
    %c0_46 = arith.constant 0 : index
    %128 = vector.load %arg6[%c0_45, %c0_46] : memref<1x128xf32, #tpu.memory_space<vmem>>, vector<1x128xf32>
    %129 = arith.addf %127, %128 : vector<1x128xf32>
    %130 = arith.mulf %124, %129 : vector<1x128xf32>
    %131 = arith.addf %126, %130 : vector<1x128xf32>
    %132 = math.tanh %131 : vector<1x128xf32>
    %cst_47 = arith.constant 1.000000e+00 : f32
    %133 = vector.broadcast %cst_47 : f32 to vector<1x128xf32>
    %134 = arith.subf %133, %125 : vector<1x128xf32>
    %135 = arith.mulf %134, %132 : vector<1x128xf32>
    %136 = arith.mulf %125, %112 : vector<1x128xf32>
    %137 = arith.addf %135, %136 : vector<1x128xf32>
    %138 = vector.extract_strided_slice %5 {offsets = [5, 0], sizes = [1, 384], strides = [1, 1]} : vector<8x384xf32> to vector<1x384xf32>
    %c0_48 = arith.constant 0 : index
    %c0_49 = arith.constant 0 : index
    %139 = vector.load %arg4[%c0_48, %c0_49] : memref<128x384xf32, #tpu.memory_space<vmem>>, vector<128x384xf32>
    %cst_50 = arith.constant dense<0.000000e+00> : vector<1x384xf32>
    %140 = tpu.matmul %137, %139, %cst_50 {dimension_numbers = #tpu.dot_dimension_numbers<[1], [0], [0], [1], [0, 0, 1, 1], [], []>} : vector<1x128xf32>, vector<128x384xf32>, vector<1x384xf32> -> vector<1x384xf32>
    %141 = vector.extract_strided_slice %138 {offsets = [0, 0], sizes = [1, 256], strides = [1, 1]} : vector<1x384xf32> to vector<1x256xf32>
    %142 = vector.extract_strided_slice %140 {offsets = [0, 0], sizes = [1, 256], strides = [1, 1]} : vector<1x384xf32> to vector<1x256xf32>
    %143 = arith.addf %141, %142 : vector<1x256xf32>
    %144 = arith.negf %143 : vector<1x256xf32>
    %145 = math.exp %144 : vector<1x256xf32>
    %cst_51 = arith.constant 1.000000e+00 : f32
    %146 = vector.broadcast %cst_51 : f32 to vector<1x256xf32>
    %147 = arith.addf %146, %145 : vector<1x256xf32>
    %148 = arith.divf %146, %147 : vector<1x256xf32>
    %149 = vector.extract_strided_slice %148 {offsets = [0, 0], sizes = [1, 128], strides = [1, 1]} : vector<1x256xf32> to vector<1x128xf32>
    %150 = vector.extract_strided_slice %148 {offsets = [0, 128], sizes = [1, 128], strides = [1, 1]} : vector<1x256xf32> to vector<1x128xf32>
    %151 = vector.extract_strided_slice %138 {offsets = [0, 256], sizes = [1, 128], strides = [1, 1]} : vector<1x384xf32> to vector<1x128xf32>
    %152 = vector.extract_strided_slice %140 {offsets = [0, 256], sizes = [1, 128], strides = [1, 1]} : vector<1x384xf32> to vector<1x128xf32>
    %c0_52 = arith.constant 0 : index
    %c0_53 = arith.constant 0 : index
    %153 = vector.load %arg6[%c0_52, %c0_53] : memref<1x128xf32, #tpu.memory_space<vmem>>, vector<1x128xf32>
    %154 = arith.addf %152, %153 : vector<1x128xf32>
    %155 = arith.mulf %149, %154 : vector<1x128xf32>
    %156 = arith.addf %151, %155 : vector<1x128xf32>
    %157 = math.tanh %156 : vector<1x128xf32>
    %cst_54 = arith.constant 1.000000e+00 : f32
    %158 = vector.broadcast %cst_54 : f32 to vector<1x128xf32>
    %159 = arith.subf %158, %150 : vector<1x128xf32>
    %160 = arith.mulf %159, %157 : vector<1x128xf32>
    %161 = arith.mulf %150, %137 : vector<1x128xf32>
    %162 = arith.addf %160, %161 : vector<1x128xf32>
    %163 = vector.extract_strided_slice %5 {offsets = [6, 0], sizes = [1, 384], strides = [1, 1]} : vector<8x384xf32> to vector<1x384xf32>
    %c0_55 = arith.constant 0 : index
    %c0_56 = arith.constant 0 : index
    %164 = vector.load %arg4[%c0_55, %c0_56] : memref<128x384xf32, #tpu.memory_space<vmem>>, vector<128x384xf32>
    %cst_57 = arith.constant dense<0.000000e+00> : vector<1x384xf32>
    %165 = tpu.matmul %162, %164, %cst_57 {dimension_numbers = #tpu.dot_dimension_numbers<[1], [0], [0], [1], [0, 0, 1, 1], [], []>} : vector<1x128xf32>, vector<128x384xf32>, vector<1x384xf32> -> vector<1x384xf32>
    %166 = vector.extract_strided_slice %163 {offsets = [0, 0], sizes = [1, 256], strides = [1, 1]} : vector<1x384xf32> to vector<1x256xf32>
    %167 = vector.extract_strided_slice %165 {offsets = [0, 0], sizes = [1, 256], strides = [1, 1]} : vector<1x384xf32> to vector<1x256xf32>
    %168 = arith.addf %166, %167 : vector<1x256xf32>
    %169 = arith.negf %168 : vector<1x256xf32>
    %170 = math.exp %169 : vector<1x256xf32>
    %cst_58 = arith.constant 1.000000e+00 : f32
    %171 = vector.broadcast %cst_58 : f32 to vector<1x256xf32>
    %172 = arith.addf %171, %170 : vector<1x256xf32>
    %173 = arith.divf %171, %172 : vector<1x256xf32>
    %174 = vector.extract_strided_slice %173 {offsets = [0, 0], sizes = [1, 128], strides = [1, 1]} : vector<1x256xf32> to vector<1x128xf32>
    %175 = vector.extract_strided_slice %173 {offsets = [0, 128], sizes = [1, 128], strides = [1, 1]} : vector<1x256xf32> to vector<1x128xf32>
    %176 = vector.extract_strided_slice %163 {offsets = [0, 256], sizes = [1, 128], strides = [1, 1]} : vector<1x384xf32> to vector<1x128xf32>
    %177 = vector.extract_strided_slice %165 {offsets = [0, 256], sizes = [1, 128], strides = [1, 1]} : vector<1x384xf32> to vector<1x128xf32>
    %c0_59 = arith.constant 0 : index
    %c0_60 = arith.constant 0 : index
    %178 = vector.load %arg6[%c0_59, %c0_60] : memref<1x128xf32, #tpu.memory_space<vmem>>, vector<1x128xf32>
    %179 = arith.addf %177, %178 : vector<1x128xf32>
    %180 = arith.mulf %174, %179 : vector<1x128xf32>
    %181 = arith.addf %176, %180 : vector<1x128xf32>
    %182 = math.tanh %181 : vector<1x128xf32>
    %cst_61 = arith.constant 1.000000e+00 : f32
    %183 = vector.broadcast %cst_61 : f32 to vector<1x128xf32>
    %184 = arith.subf %183, %175 : vector<1x128xf32>
    %185 = arith.mulf %184, %182 : vector<1x128xf32>
    %186 = arith.mulf %175, %162 : vector<1x128xf32>
    %187 = arith.addf %185, %186 : vector<1x128xf32>
    %188 = vector.extract_strided_slice %5 {offsets = [7, 0], sizes = [1, 384], strides = [1, 1]} : vector<8x384xf32> to vector<1x384xf32>
    %c0_62 = arith.constant 0 : index
    %c0_63 = arith.constant 0 : index
    %189 = vector.load %arg4[%c0_62, %c0_63] : memref<128x384xf32, #tpu.memory_space<vmem>>, vector<128x384xf32>
    %cst_64 = arith.constant dense<0.000000e+00> : vector<1x384xf32>
    %190 = tpu.matmul %187, %189, %cst_64 {dimension_numbers = #tpu.dot_dimension_numbers<[1], [0], [0], [1], [0, 0, 1, 1], [], []>} : vector<1x128xf32>, vector<128x384xf32>, vector<1x384xf32> -> vector<1x384xf32>
    %191 = vector.extract_strided_slice %188 {offsets = [0, 0], sizes = [1, 256], strides = [1, 1]} : vector<1x384xf32> to vector<1x256xf32>
    %192 = vector.extract_strided_slice %190 {offsets = [0, 0], sizes = [1, 256], strides = [1, 1]} : vector<1x384xf32> to vector<1x256xf32>
    %193 = arith.addf %191, %192 : vector<1x256xf32>
    %194 = arith.negf %193 : vector<1x256xf32>
    %195 = math.exp %194 : vector<1x256xf32>
    %cst_65 = arith.constant 1.000000e+00 : f32
    %196 = vector.broadcast %cst_65 : f32 to vector<1x256xf32>
    %197 = arith.addf %196, %195 : vector<1x256xf32>
    %198 = arith.divf %196, %197 : vector<1x256xf32>
    %199 = vector.extract_strided_slice %198 {offsets = [0, 0], sizes = [1, 128], strides = [1, 1]} : vector<1x256xf32> to vector<1x128xf32>
    %200 = vector.extract_strided_slice %198 {offsets = [0, 128], sizes = [1, 128], strides = [1, 1]} : vector<1x256xf32> to vector<1x128xf32>
    %201 = vector.extract_strided_slice %188 {offsets = [0, 256], sizes = [1, 128], strides = [1, 1]} : vector<1x384xf32> to vector<1x128xf32>
    %202 = vector.extract_strided_slice %190 {offsets = [0, 256], sizes = [1, 128], strides = [1, 1]} : vector<1x384xf32> to vector<1x128xf32>
    %c0_66 = arith.constant 0 : index
    %c0_67 = arith.constant 0 : index
    %203 = vector.load %arg6[%c0_66, %c0_67] : memref<1x128xf32, #tpu.memory_space<vmem>>, vector<1x128xf32>
    %204 = arith.addf %202, %203 : vector<1x128xf32>
    %205 = arith.mulf %199, %204 : vector<1x128xf32>
    %206 = arith.addf %201, %205 : vector<1x128xf32>
    %207 = math.tanh %206 : vector<1x128xf32>
    %cst_68 = arith.constant 1.000000e+00 : f32
    %208 = vector.broadcast %cst_68 : f32 to vector<1x128xf32>
    %209 = arith.subf %208, %200 : vector<1x128xf32>
    %210 = arith.mulf %209, %207 : vector<1x128xf32>
    %211 = arith.mulf %200, %187 : vector<1x128xf32>
    %212 = arith.addf %210, %211 : vector<1x128xf32>
    %213 = vector.extract_strided_slice %11 {offsets = [0, 0], sizes = [1, 384], strides = [1, 1]} : vector<8x384xf32> to vector<1x384xf32>
    %c0_69 = arith.constant 0 : index
    %c0_70 = arith.constant 0 : index
    %214 = vector.load %arg8[%c0_69, %c0_70] : memref<128x384xf32, #tpu.memory_space<vmem>>, vector<128x384xf32>
    %cst_71 = arith.constant dense<0.000000e+00> : vector<1x384xf32>
    %215 = tpu.matmul %212, %214, %cst_71 {dimension_numbers = #tpu.dot_dimension_numbers<[1], [0], [0], [1], [0, 0, 1, 1], [], []>} : vector<1x128xf32>, vector<128x384xf32>, vector<1x384xf32> -> vector<1x384xf32>
    %216 = vector.extract_strided_slice %213 {offsets = [0, 0], sizes = [1, 256], strides = [1, 1]} : vector<1x384xf32> to vector<1x256xf32>
    %217 = vector.extract_strided_slice %215 {offsets = [0, 0], sizes = [1, 256], strides = [1, 1]} : vector<1x384xf32> to vector<1x256xf32>
    %218 = arith.addf %216, %217 : vector<1x256xf32>
    %219 = arith.negf %218 : vector<1x256xf32>
    %220 = math.exp %219 : vector<1x256xf32>
    %cst_72 = arith.constant 1.000000e+00 : f32
    %221 = vector.broadcast %cst_72 : f32 to vector<1x256xf32>
    %222 = arith.addf %221, %220 : vector<1x256xf32>
    %223 = arith.divf %221, %222 : vector<1x256xf32>
    %224 = vector.extract_strided_slice %223 {offsets = [0, 0], sizes = [1, 128], strides = [1, 1]} : vector<1x256xf32> to vector<1x128xf32>
    %225 = vector.extract_strided_slice %223 {offsets = [0, 128], sizes = [1, 128], strides = [1, 1]} : vector<1x256xf32> to vector<1x128xf32>
    %226 = vector.extract_strided_slice %213 {offsets = [0, 256], sizes = [1, 128], strides = [1, 1]} : vector<1x384xf32> to vector<1x128xf32>
    %227 = vector.extract_strided_slice %215 {offsets = [0, 256], sizes = [1, 128], strides = [1, 1]} : vector<1x384xf32> to vector<1x128xf32>
    %c0_73 = arith.constant 0 : index
    %c0_74 = arith.constant 0 : index
    %228 = vector.load %arg10[%c0_73, %c0_74] : memref<1x128xf32, #tpu.memory_space<vmem>>, vector<1x128xf32>
    %229 = arith.addf %227, %228 : vector<1x128xf32>
    %230 = arith.mulf %224, %229 : vector<1x128xf32>
    %231 = arith.addf %226, %230 : vector<1x128xf32>
    %232 = math.tanh %231 : vector<1x128xf32>
    %cst_75 = arith.constant 1.000000e+00 : f32
    %233 = vector.broadcast %cst_75 : f32 to vector<1x128xf32>
    %234 = arith.subf %233, %225 : vector<1x128xf32>
    %235 = arith.mulf %234, %232 : vector<1x128xf32>
    %236 = arith.mulf %225, %212 : vector<1x128xf32>
    %237 = arith.addf %235, %236 : vector<1x128xf32>
    %238 = vector.extract_strided_slice %11 {offsets = [1, 0], sizes = [1, 384], strides = [1, 1]} : vector<8x384xf32> to vector<1x384xf32>
    %c0_76 = arith.constant 0 : index
    %c0_77 = arith.constant 0 : index
    %239 = vector.load %arg8[%c0_76, %c0_77] : memref<128x384xf32, #tpu.memory_space<vmem>>, vector<128x384xf32>
    %cst_78 = arith.constant dense<0.000000e+00> : vector<1x384xf32>
    %240 = tpu.matmul %237, %239, %cst_78 {dimension_numbers = #tpu.dot_dimension_numbers<[1], [0], [0], [1], [0, 0, 1, 1], [], []>} : vector<1x128xf32>, vector<128x384xf32>, vector<1x384xf32> -> vector<1x384xf32>
    %241 = vector.extract_strided_slice %238 {offsets = [0, 0], sizes = [1, 256], strides = [1, 1]} : vector<1x384xf32> to vector<1x256xf32>
    %242 = vector.extract_strided_slice %240 {offsets = [0, 0], sizes = [1, 256], strides = [1, 1]} : vector<1x384xf32> to vector<1x256xf32>
    %243 = arith.addf %241, %242 : vector<1x256xf32>
    %244 = arith.negf %243 : vector<1x256xf32>
    %245 = math.exp %244 : vector<1x256xf32>
    %cst_79 = arith.constant 1.000000e+00 : f32
    %246 = vector.broadcast %cst_79 : f32 to vector<1x256xf32>
    %247 = arith.addf %246, %245 : vector<1x256xf32>
    %248 = arith.divf %246, %247 : vector<1x256xf32>
    %249 = vector.extract_strided_slice %248 {offsets = [0, 0], sizes = [1, 128], strides = [1, 1]} : vector<1x256xf32> to vector<1x128xf32>
    %250 = vector.extract_strided_slice %248 {offsets = [0, 128], sizes = [1, 128], strides = [1, 1]} : vector<1x256xf32> to vector<1x128xf32>
    %251 = vector.extract_strided_slice %238 {offsets = [0, 256], sizes = [1, 128], strides = [1, 1]} : vector<1x384xf32> to vector<1x128xf32>
    %252 = vector.extract_strided_slice %240 {offsets = [0, 256], sizes = [1, 128], strides = [1, 1]} : vector<1x384xf32> to vector<1x128xf32>
    %c0_80 = arith.constant 0 : index
    %c0_81 = arith.constant 0 : index
    %253 = vector.load %arg10[%c0_80, %c0_81] : memref<1x128xf32, #tpu.memory_space<vmem>>, vector<1x128xf32>
    %254 = arith.addf %252, %253 : vector<1x128xf32>
    %255 = arith.mulf %249, %254 : vector<1x128xf32>
    %256 = arith.addf %251, %255 : vector<1x128xf32>
    %257 = math.tanh %256 : vector<1x128xf32>
    %cst_82 = arith.constant 1.000000e+00 : f32
    %258 = vector.broadcast %cst_82 : f32 to vector<1x128xf32>
    %259 = arith.subf %258, %250 : vector<1x128xf32>
    %260 = arith.mulf %259, %257 : vector<1x128xf32>
    %261 = arith.mulf %250, %237 : vector<1x128xf32>
    %262 = arith.addf %260, %261 : vector<1x128xf32>
    %263 = vector.extract_strided_slice %11 {offsets = [2, 0], sizes = [1, 384], strides = [1, 1]} : vector<8x384xf32> to vector<1x384xf32>
    %c0_83 = arith.constant 0 : index
    %c0_84 = arith.constant 0 : index
    %264 = vector.load %arg8[%c0_83, %c0_84] : memref<128x384xf32, #tpu.memory_space<vmem>>, vector<128x384xf32>
    %cst_85 = arith.constant dense<0.000000e+00> : vector<1x384xf32>
    %265 = tpu.matmul %262, %264, %cst_85 {dimension_numbers = #tpu.dot_dimension_numbers<[1], [0], [0], [1], [0, 0, 1, 1], [], []>} : vector<1x128xf32>, vector<128x384xf32>, vector<1x384xf32> -> vector<1x384xf32>
    %266 = vector.extract_strided_slice %263 {offsets = [0, 0], sizes = [1, 256], strides = [1, 1]} : vector<1x384xf32> to vector<1x256xf32>
    %267 = vector.extract_strided_slice %265 {offsets = [0, 0], sizes = [1, 256], strides = [1, 1]} : vector<1x384xf32> to vector<1x256xf32>
    %268 = arith.addf %266, %267 : vector<1x256xf32>
    %269 = arith.negf %268 : vector<1x256xf32>
    %270 = math.exp %269 : vector<1x256xf32>
    %cst_86 = arith.constant 1.000000e+00 : f32
    %271 = vector.broadcast %cst_86 : f32 to vector<1x256xf32>
    %272 = arith.addf %271, %270 : vector<1x256xf32>
    %273 = arith.divf %271, %272 : vector<1x256xf32>
    %274 = vector.extract_strided_slice %273 {offsets = [0, 0], sizes = [1, 128], strides = [1, 1]} : vector<1x256xf32> to vector<1x128xf32>
    %275 = vector.extract_strided_slice %273 {offsets = [0, 128], sizes = [1, 128], strides = [1, 1]} : vector<1x256xf32> to vector<1x128xf32>
    %276 = vector.extract_strided_slice %263 {offsets = [0, 256], sizes = [1, 128], strides = [1, 1]} : vector<1x384xf32> to vector<1x128xf32>
    %277 = vector.extract_strided_slice %265 {offsets = [0, 256], sizes = [1, 128], strides = [1, 1]} : vector<1x384xf32> to vector<1x128xf32>
    %c0_87 = arith.constant 0 : index
    %c0_88 = arith.constant 0 : index
    %278 = vector.load %arg10[%c0_87, %c0_88] : memref<1x128xf32, #tpu.memory_space<vmem>>, vector<1x128xf32>
    %279 = arith.addf %277, %278 : vector<1x128xf32>
    %280 = arith.mulf %274, %279 : vector<1x128xf32>
    %281 = arith.addf %276, %280 : vector<1x128xf32>
    %282 = math.tanh %281 : vector<1x128xf32>
    %cst_89 = arith.constant 1.000000e+00 : f32
    %283 = vector.broadcast %cst_89 : f32 to vector<1x128xf32>
    %284 = arith.subf %283, %275 : vector<1x128xf32>
    %285 = arith.mulf %284, %282 : vector<1x128xf32>
    %286 = arith.mulf %275, %262 : vector<1x128xf32>
    %287 = arith.addf %285, %286 : vector<1x128xf32>
    %288 = vector.extract_strided_slice %11 {offsets = [3, 0], sizes = [1, 384], strides = [1, 1]} : vector<8x384xf32> to vector<1x384xf32>
    %c0_90 = arith.constant 0 : index
    %c0_91 = arith.constant 0 : index
    %289 = vector.load %arg8[%c0_90, %c0_91] : memref<128x384xf32, #tpu.memory_space<vmem>>, vector<128x384xf32>
    %cst_92 = arith.constant dense<0.000000e+00> : vector<1x384xf32>
    %290 = tpu.matmul %287, %289, %cst_92 {dimension_numbers = #tpu.dot_dimension_numbers<[1], [0], [0], [1], [0, 0, 1, 1], [], []>} : vector<1x128xf32>, vector<128x384xf32>, vector<1x384xf32> -> vector<1x384xf32>
    %291 = vector.extract_strided_slice %288 {offsets = [0, 0], sizes = [1, 256], strides = [1, 1]} : vector<1x384xf32> to vector<1x256xf32>
    %292 = vector.extract_strided_slice %290 {offsets = [0, 0], sizes = [1, 256], strides = [1, 1]} : vector<1x384xf32> to vector<1x256xf32>
    %293 = arith.addf %291, %292 : vector<1x256xf32>
    %294 = arith.negf %293 : vector<1x256xf32>
    %295 = math.exp %294 : vector<1x256xf32>
    %cst_93 = arith.constant 1.000000e+00 : f32
    %296 = vector.broadcast %cst_93 : f32 to vector<1x256xf32>
    %297 = arith.addf %296, %295 : vector<1x256xf32>
    %298 = arith.divf %296, %297 : vector<1x256xf32>
    %299 = vector.extract_strided_slice %298 {offsets = [0, 0], sizes = [1, 128], strides = [1, 1]} : vector<1x256xf32> to vector<1x128xf32>
    %300 = vector.extract_strided_slice %298 {offsets = [0, 128], sizes = [1, 128], strides = [1, 1]} : vector<1x256xf32> to vector<1x128xf32>
    %301 = vector.extract_strided_slice %288 {offsets = [0, 256], sizes = [1, 128], strides = [1, 1]} : vector<1x384xf32> to vector<1x128xf32>
    %302 = vector.extract_strided_slice %290 {offsets = [0, 256], sizes = [1, 128], strides = [1, 1]} : vector<1x384xf32> to vector<1x128xf32>
    %c0_94 = arith.constant 0 : index
    %c0_95 = arith.constant 0 : index
    %303 = vector.load %arg10[%c0_94, %c0_95] : memref<1x128xf32, #tpu.memory_space<vmem>>, vector<1x128xf32>
    %304 = arith.addf %302, %303 : vector<1x128xf32>
    %305 = arith.mulf %299, %304 : vector<1x128xf32>
    %306 = arith.addf %301, %305 : vector<1x128xf32>
    %307 = math.tanh %306 : vector<1x128xf32>
    %cst_96 = arith.constant 1.000000e+00 : f32
    %308 = vector.broadcast %cst_96 : f32 to vector<1x128xf32>
    %309 = arith.subf %308, %300 : vector<1x128xf32>
    %310 = arith.mulf %309, %307 : vector<1x128xf32>
    %311 = arith.mulf %300, %287 : vector<1x128xf32>
    %312 = arith.addf %310, %311 : vector<1x128xf32>
    %313 = vector.extract_strided_slice %11 {offsets = [4, 0], sizes = [1, 384], strides = [1, 1]} : vector<8x384xf32> to vector<1x384xf32>
    %c0_97 = arith.constant 0 : index
    %c0_98 = arith.constant 0 : index
    %314 = vector.load %arg8[%c0_97, %c0_98] : memref<128x384xf32, #tpu.memory_space<vmem>>, vector<128x384xf32>
    %cst_99 = arith.constant dense<0.000000e+00> : vector<1x384xf32>
    %315 = tpu.matmul %312, %314, %cst_99 {dimension_numbers = #tpu.dot_dimension_numbers<[1], [0], [0], [1], [0, 0, 1, 1], [], []>} : vector<1x128xf32>, vector<128x384xf32>, vector<1x384xf32> -> vector<1x384xf32>
    %316 = vector.extract_strided_slice %313 {offsets = [0, 0], sizes = [1, 256], strides = [1, 1]} : vector<1x384xf32> to vector<1x256xf32>
    %317 = vector.extract_strided_slice %315 {offsets = [0, 0], sizes = [1, 256], strides = [1, 1]} : vector<1x384xf32> to vector<1x256xf32>
    %318 = arith.addf %316, %317 : vector<1x256xf32>
    %319 = arith.negf %318 : vector<1x256xf32>
    %320 = math.exp %319 : vector<1x256xf32>
    %cst_100 = arith.constant 1.000000e+00 : f32
    %321 = vector.broadcast %cst_100 : f32 to vector<1x256xf32>
    %322 = arith.addf %321, %320 : vector<1x256xf32>
    %323 = arith.divf %321, %322 : vector<1x256xf32>
    %324 = vector.extract_strided_slice %323 {offsets = [0, 0], sizes = [1, 128], strides = [1, 1]} : vector<1x256xf32> to vector<1x128xf32>
    %325 = vector.extract_strided_slice %323 {offsets = [0, 128], sizes = [1, 128], strides = [1, 1]} : vector<1x256xf32> to vector<1x128xf32>
    %326 = vector.extract_strided_slice %313 {offsets = [0, 256], sizes = [1, 128], strides = [1, 1]} : vector<1x384xf32> to vector<1x128xf32>
    %327 = vector.extract_strided_slice %315 {offsets = [0, 256], sizes = [1, 128], strides = [1, 1]} : vector<1x384xf32> to vector<1x128xf32>
    %c0_101 = arith.constant 0 : index
    %c0_102 = arith.constant 0 : index
    %328 = vector.load %arg10[%c0_101, %c0_102] : memref<1x128xf32, #tpu.memory_space<vmem>>, vector<1x128xf32>
    %329 = arith.addf %327, %328 : vector<1x128xf32>
    %330 = arith.mulf %324, %329 : vector<1x128xf32>
    %331 = arith.addf %326, %330 : vector<1x128xf32>
    %332 = math.tanh %331 : vector<1x128xf32>
    %cst_103 = arith.constant 1.000000e+00 : f32
    %333 = vector.broadcast %cst_103 : f32 to vector<1x128xf32>
    %334 = arith.subf %333, %325 : vector<1x128xf32>
    %335 = arith.mulf %334, %332 : vector<1x128xf32>
    %336 = arith.mulf %325, %312 : vector<1x128xf32>
    %337 = arith.addf %335, %336 : vector<1x128xf32>
    %338 = vector.extract_strided_slice %11 {offsets = [5, 0], sizes = [1, 384], strides = [1, 1]} : vector<8x384xf32> to vector<1x384xf32>
    %c0_104 = arith.constant 0 : index
    %c0_105 = arith.constant 0 : index
    %339 = vector.load %arg8[%c0_104, %c0_105] : memref<128x384xf32, #tpu.memory_space<vmem>>, vector<128x384xf32>
    %cst_106 = arith.constant dense<0.000000e+00> : vector<1x384xf32>
    %340 = tpu.matmul %337, %339, %cst_106 {dimension_numbers = #tpu.dot_dimension_numbers<[1], [0], [0], [1], [0, 0, 1, 1], [], []>} : vector<1x128xf32>, vector<128x384xf32>, vector<1x384xf32> -> vector<1x384xf32>
    %341 = vector.extract_strided_slice %338 {offsets = [0, 0], sizes = [1, 256], strides = [1, 1]} : vector<1x384xf32> to vector<1x256xf32>
    %342 = vector.extract_strided_slice %340 {offsets = [0, 0], sizes = [1, 256], strides = [1, 1]} : vector<1x384xf32> to vector<1x256xf32>
    %343 = arith.addf %341, %342 : vector<1x256xf32>
    %344 = arith.negf %343 : vector<1x256xf32>
    %345 = math.exp %344 : vector<1x256xf32>
    %cst_107 = arith.constant 1.000000e+00 : f32
    %346 = vector.broadcast %cst_107 : f32 to vector<1x256xf32>
    %347 = arith.addf %346, %345 : vector<1x256xf32>
    %348 = arith.divf %346, %347 : vector<1x256xf32>
    %349 = vector.extract_strided_slice %348 {offsets = [0, 0], sizes = [1, 128], strides = [1, 1]} : vector<1x256xf32> to vector<1x128xf32>
    %350 = vector.extract_strided_slice %348 {offsets = [0, 128], sizes = [1, 128], strides = [1, 1]} : vector<1x256xf32> to vector<1x128xf32>
    %351 = vector.extract_strided_slice %338 {offsets = [0, 256], sizes = [1, 128], strides = [1, 1]} : vector<1x384xf32> to vector<1x128xf32>
    %352 = vector.extract_strided_slice %340 {offsets = [0, 256], sizes = [1, 128], strides = [1, 1]} : vector<1x384xf32> to vector<1x128xf32>
    %c0_108 = arith.constant 0 : index
    %c0_109 = arith.constant 0 : index
    %353 = vector.load %arg10[%c0_108, %c0_109] : memref<1x128xf32, #tpu.memory_space<vmem>>, vector<1x128xf32>
    %354 = arith.addf %352, %353 : vector<1x128xf32>
    %355 = arith.mulf %349, %354 : vector<1x128xf32>
    %356 = arith.addf %351, %355 : vector<1x128xf32>
    %357 = math.tanh %356 : vector<1x128xf32>
    %cst_110 = arith.constant 1.000000e+00 : f32
    %358 = vector.broadcast %cst_110 : f32 to vector<1x128xf32>
    %359 = arith.subf %358, %350 : vector<1x128xf32>
    %360 = arith.mulf %359, %357 : vector<1x128xf32>
    %361 = arith.mulf %350, %337 : vector<1x128xf32>
    %362 = arith.addf %360, %361 : vector<1x128xf32>
    %363 = vector.extract_strided_slice %11 {offsets = [6, 0], sizes = [1, 384], strides = [1, 1]} : vector<8x384xf32> to vector<1x384xf32>
    %c0_111 = arith.constant 0 : index
    %c0_112 = arith.constant 0 : index
    %364 = vector.load %arg8[%c0_111, %c0_112] : memref<128x384xf32, #tpu.memory_space<vmem>>, vector<128x384xf32>
    %cst_113 = arith.constant dense<0.000000e+00> : vector<1x384xf32>
    %365 = tpu.matmul %362, %364, %cst_113 {dimension_numbers = #tpu.dot_dimension_numbers<[1], [0], [0], [1], [0, 0, 1, 1], [], []>} : vector<1x128xf32>, vector<128x384xf32>, vector<1x384xf32> -> vector<1x384xf32>
    %366 = vector.extract_strided_slice %363 {offsets = [0, 0], sizes = [1, 256], strides = [1, 1]} : vector<1x384xf32> to vector<1x256xf32>
    %367 = vector.extract_strided_slice %365 {offsets = [0, 0], sizes = [1, 256], strides = [1, 1]} : vector<1x384xf32> to vector<1x256xf32>
    %368 = arith.addf %366, %367 : vector<1x256xf32>
    %369 = arith.negf %368 : vector<1x256xf32>
    %370 = math.exp %369 : vector<1x256xf32>
    %cst_114 = arith.constant 1.000000e+00 : f32
    %371 = vector.broadcast %cst_114 : f32 to vector<1x256xf32>
    %372 = arith.addf %371, %370 : vector<1x256xf32>
    %373 = arith.divf %371, %372 : vector<1x256xf32>
    %374 = vector.extract_strided_slice %373 {offsets = [0, 0], sizes = [1, 128], strides = [1, 1]} : vector<1x256xf32> to vector<1x128xf32>
    %375 = vector.extract_strided_slice %373 {offsets = [0, 128], sizes = [1, 128], strides = [1, 1]} : vector<1x256xf32> to vector<1x128xf32>
    %376 = vector.extract_strided_slice %363 {offsets = [0, 256], sizes = [1, 128], strides = [1, 1]} : vector<1x384xf32> to vector<1x128xf32>
    %377 = vector.extract_strided_slice %365 {offsets = [0, 256], sizes = [1, 128], strides = [1, 1]} : vector<1x384xf32> to vector<1x128xf32>
    %c0_115 = arith.constant 0 : index
    %c0_116 = arith.constant 0 : index
    %378 = vector.load %arg10[%c0_115, %c0_116] : memref<1x128xf32, #tpu.memory_space<vmem>>, vector<1x128xf32>
    %379 = arith.addf %377, %378 : vector<1x128xf32>
    %380 = arith.mulf %374, %379 : vector<1x128xf32>
    %381 = arith.addf %376, %380 : vector<1x128xf32>
    %382 = math.tanh %381 : vector<1x128xf32>
    %cst_117 = arith.constant 1.000000e+00 : f32
    %383 = vector.broadcast %cst_117 : f32 to vector<1x128xf32>
    %384 = arith.subf %383, %375 : vector<1x128xf32>
    %385 = arith.mulf %384, %382 : vector<1x128xf32>
    %386 = arith.mulf %375, %362 : vector<1x128xf32>
    %387 = arith.addf %385, %386 : vector<1x128xf32>
    %388 = vector.extract_strided_slice %11 {offsets = [7, 0], sizes = [1, 384], strides = [1, 1]} : vector<8x384xf32> to vector<1x384xf32>
    %c0_118 = arith.constant 0 : index
    %c0_119 = arith.constant 0 : index
    %389 = vector.load %arg8[%c0_118, %c0_119] : memref<128x384xf32, #tpu.memory_space<vmem>>, vector<128x384xf32>
    %cst_120 = arith.constant dense<0.000000e+00> : vector<1x384xf32>
    %390 = tpu.matmul %387, %389, %cst_120 {dimension_numbers = #tpu.dot_dimension_numbers<[1], [0], [0], [1], [0, 0, 1, 1], [], []>} : vector<1x128xf32>, vector<128x384xf32>, vector<1x384xf32> -> vector<1x384xf32>
    %391 = vector.extract_strided_slice %388 {offsets = [0, 0], sizes = [1, 256], strides = [1, 1]} : vector<1x384xf32> to vector<1x256xf32>
    %392 = vector.extract_strided_slice %390 {offsets = [0, 0], sizes = [1, 256], strides = [1, 1]} : vector<1x384xf32> to vector<1x256xf32>
    %393 = arith.addf %391, %392 : vector<1x256xf32>
    %394 = arith.negf %393 : vector<1x256xf32>
    %395 = math.exp %394 : vector<1x256xf32>
    %cst_121 = arith.constant 1.000000e+00 : f32
    %396 = vector.broadcast %cst_121 : f32 to vector<1x256xf32>
    %397 = arith.addf %396, %395 : vector<1x256xf32>
    %398 = arith.divf %396, %397 : vector<1x256xf32>
    %399 = vector.extract_strided_slice %398 {offsets = [0, 0], sizes = [1, 128], strides = [1, 1]} : vector<1x256xf32> to vector<1x128xf32>
    %400 = vector.extract_strided_slice %398 {offsets = [0, 128], sizes = [1, 128], strides = [1, 1]} : vector<1x256xf32> to vector<1x128xf32>
    %401 = vector.extract_strided_slice %388 {offsets = [0, 256], sizes = [1, 128], strides = [1, 1]} : vector<1x384xf32> to vector<1x128xf32>
    %402 = vector.extract_strided_slice %390 {offsets = [0, 256], sizes = [1, 128], strides = [1, 1]} : vector<1x384xf32> to vector<1x128xf32>
    %c0_122 = arith.constant 0 : index
    %c0_123 = arith.constant 0 : index
    %403 = vector.load %arg10[%c0_122, %c0_123] : memref<1x128xf32, #tpu.memory_space<vmem>>, vector<1x128xf32>
    %404 = arith.addf %402, %403 : vector<1x128xf32>
    %405 = arith.mulf %399, %404 : vector<1x128xf32>
    %406 = arith.addf %401, %405 : vector<1x128xf32>
    %407 = math.tanh %406 : vector<1x128xf32>
    %cst_124 = arith.constant 1.000000e+00 : f32
    %408 = vector.broadcast %cst_124 : f32 to vector<1x128xf32>
    %409 = arith.subf %408, %400 : vector<1x128xf32>
    %410 = arith.mulf %409, %407 : vector<1x128xf32>
    %411 = arith.mulf %400, %387 : vector<1x128xf32>
    %412 = arith.addf %410, %411 : vector<1x128xf32>
    %413 = tpu.concatenate %237, %262, %287, %312, %337, %362, %387, %412 in 0 : vector<1x128xf32>, vector<1x128xf32>, vector<1x128xf32>, vector<1x128xf32>, vector<1x128xf32>, vector<1x128xf32>, vector<1x128xf32>, vector<1x128xf32> -> vector<8x128xf32>
    %c0_125 = arith.constant 0 : index
    %c0_126 = arith.constant 0 : index
    %414 = vector.load %arg11[%c0_125, %c0_126] : memref<128x256xf32, #tpu.memory_space<vmem>>, vector<128x256xf32>
    %cst_127 = arith.constant dense<0.000000e+00> : vector<8x256xf32>
    %415 = tpu.matmul %413, %414, %cst_127 {dimension_numbers = #tpu.dot_dimension_numbers<[1], [0], [0], [1], [0, 0, 1, 1], [], []>} : vector<8x128xf32>, vector<128x256xf32>, vector<8x256xf32> -> vector<8x256xf32>
    %c0_128 = arith.constant 0 : index
    %c0_129 = arith.constant 0 : index
    %416 = vector.load %arg12[%c0_128, %c0_129] : memref<1x256xf32, #tpu.memory_space<vmem>>, vector<1x256xf32>
    %417 = vector.broadcast %416 : vector<1x256xf32> to vector<8x256xf32>
    %418 = arith.addf %415, %417 : vector<8x256xf32>
    %c0_130 = arith.constant 0 : index
    %c0_131 = arith.constant 0 : index
    %419 = vector.load %arg13[%c0_130, %c0_131] : memref<8x256xf32, #tpu.memory_space<vmem>>, vector<8x256xf32>
    tpu.vector_store %arg13[%c0_130, %c0_131], %418 {strides = array<i32>} : memref<8x256xf32, #tpu.memory_space<vmem>>, vector<8x256xf32>,
    return
  }
  func.func @transform_0(%arg0: i32) -> (i32, i32) {
    %c0_i32 = arith.constant 0 : i32
    %c0_i32_0 = arith.constant 0 : i32
    %c0_i32_1 = arith.constant 0 : i32
    return %c0_i32, %c0_i32_0 : i32, i32
  }
  func.func @transform_1(%arg0: i32) -> (i32, i32) {
    %c0_i32 = arith.constant 0 : i32
    %c0_i32_0 = arith.constant 0 : i32
    %c0_i32_1 = arith.constant 0 : i32
    return %c0_i32, %c0_i32_0 : i32, i32
  }
  func.func @transform_2(%arg0: i32) -> (i32, i32) {
    %c0_i32 = arith.constant 0 : i32
    %c0_i32_0 = arith.constant 0 : i32
    %c0_i32_1 = arith.constant 0 : i32
    return %c0_i32, %c0_i32_0 : i32, i32
  }
  func.func @transform_3(%arg0: i32) -> (i32, i32) {
    %c0_i32 = arith.constant 0 : i32
    %c0_i32_0 = arith.constant 0 : i32
    %c0_i32_1 = arith.constant 0 : i32
    return %c0_i32, %c0_i32_0 : i32, i32
  }
  func.func @transform_4(%arg0: i32) -> (i32, i32) {
    %c0_i32 = arith.constant 0 : i32
    %c0_i32_0 = arith.constant 0 : i32
    %c0_i32_1 = arith.constant 0 : i32
    return %c0_i32, %c0_i32_0 : i32, i32
  }
  func.func @transform_5(%arg0: i32) -> (i32, i32) {
    %c0_i32 = arith.constant 0 : i32
    %c0_i32_0 = arith.constant 0 : i32
    %c0_i32_1 = arith.constant 0 : i32
    return %c0_i32, %c0_i32_0 : i32, i32
  }
  func.func @transform_6(%arg0: i32) -> (i32, i32) {
    %c0_i32 = arith.constant 0 : i32
    %c0_i32_0 = arith.constant 0 : i32
    %c0_i32_1 = arith.constant 0 : i32
    return %c0_i32, %c0_i32_0 : i32, i32
  }
  func.func @transform_7(%arg0: i32) -> (i32, i32) {
    %c0_i32 = arith.constant 0 : i32
    %c0_i32_0 = arith.constant 0 : i32
    %c0_i32_1 = arith.constant 0 : i32
    return %c0_i32, %c0_i32_0 : i32, i32
  }
  func.func @transform_8(%arg0: i32) -> (i32, i32) {
    %c0_i32 = arith.constant 0 : i32
    %c0_i32_0 = arith.constant 0 : i32
    %c0_i32_1 = arith.constant 0 : i32
    return %c0_i32, %c0_i32_0 : i32, i32
  }
  func.func @transform_9(%arg0: i32) -> (i32, i32) {
    %c0_i32 = arith.constant 0 : i32
    %c0_i32_0 = arith.constant 0 : i32
    %c0_i32_1 = arith.constant 0 : i32
    return %c0_i32, %c0_i32_0 : i32, i32
  }
  func.func @transform_10(%arg0: i32) -> (i32, i32) {
    %c0_i32 = arith.constant 0 : i32
    %c0_i32_0 = arith.constant 0 : i32
    %c0_i32_1 = arith.constant 0 : i32
    return %c0_i32, %c0_i32_0 : i32, i32
  }
  func.func @transform_11(%arg0: i32) -> (i32, i32) {
    %c0_i32 = arith.constant 0 : i32
    %c0_i32_0 = arith.constant 0 : i32
    %c0_i32_1 = arith.constant 0 : i32
    return %c0_i32, %c0_i32_0 : i32, i32
  }
  func.func @transform_12(%arg0: i32) -> (i32, i32) {
    %c0_i32 = arith.constant 0 : i32
    %c0_i32_0 = arith.constant 0 : i32
    %c0_i32_1 = arith.constant 0 : i32
    return %c0_i32, %c0_i32_0 : i32, i32
  }
}

</mosaic_0001>

<llo_original>
// kernel: seq2seq_forward.1
$region0: #{seq2seq_forward.1}
  #allocation0 [shape = 'u32[]', space=smem, size = 0x4, offset = 0x4, fixed_abs, tag = 'smem constant byte address 0x4 - core index']
  #allocation1 [shape = 'u32[144,128]{1,0:T(1,128)}', space=vmem, size = 0x12000, scoped, tag = 'internal scratch']
  %s0 = inlined_call_operand.vmem [shape: f32[8,128], index: 0, kind: input, shape index: {}]
  %s1 = inlined_call_operand.vmem [shape: f32[8,128], index: 1, kind: input, shape index: {}]
  %s2 = inlined_call_operand.hbm [shape: f32[128,384], index: 2, kind: input, shape index: {}]
  %s3 = inlined_call_operand.hbm [shape: f32[128,384], index: 3, kind: input, shape index: {}]
  %s4 = inlined_call_operand.vmem [shape: f32[1,384], index: 4, kind: input, shape index: {}]
  %s5 = inlined_call_operand.hbm [shape: f32[1,128], index: 5, kind: input, shape index: {}]
  %s6 = inlined_call_operand.hbm [shape: f32[128,384], index: 6, kind: input, shape index: {}]
  %s7 = inlined_call_operand.hbm [shape: f32[128,384], index: 7, kind: input, shape index: {}]
  %s8 = inlined_call_operand.vmem [shape: f32[1,384], index: 8, kind: input, shape index: {}]
  %s9 = inlined_call_operand.hbm [shape: f32[1,128], index: 9, kind: input, shape index: {}]
  %s10 = inlined_call_operand.vmem [shape: f32[128,256], index: 10, kind: input, shape index: {}]
  %s11 = inlined_call_operand.hbm [shape: f32[1,256], index: 11, kind: input, shape index: {}]
  %s12 = inlined_call_operand.hbm [shape: f32[8,256], index: 12, kind: output, shape index: {}]
  %s13 = sld [smem:[#allocation0]]
  $region86: #{seq2seq_forward.1} parent=0
    _
  %s15 = ssub.s32 1, %s13
  %s16 = scalar_select 0, %s15, %s13
  $region1: #{seq2seq_forward.1} parent=0
    #allocation2 [shape = 'u8[196608]{0}', space=vmem, size = 0x30000, scoped, tag = 'input window, operand 2, single buffered']
    #allocation3 [shape = 's32[1]{0}', space=sflag, size = 0x4, scoped, tag = 'scoped memory for seq2seq_forward.1']
    #allocation4 [shape = 's32[1]{0}', space=sflag, size = 0x4, scoped, tag = 'scoped memory for seq2seq_forward.1']
    #allocation5 [shape = 'u8[196608]{0}', space=vmem, size = 0x30000, scoped, tag = 'input window, operand 3, single buffered']
    #allocation6 [shape = 's32[1]{0}', space=sflag, size = 0x4, scoped, tag = 'scoped memory for seq2seq_forward.1']
    #allocation7 [shape = 'u8[512]{0}', space=vmem, size = 0x400, scoped, tag = 'input window, operand 5, single buffered']
    #allocation8 [shape = 'u8[196608]{0}', space=vmem, size = 0x30000, scoped, tag = 'input window, operand 6, single buffered']
    #allocation9 [shape = 's32[1]{0}', space=sflag, size = 0x4, scoped, tag = 'scoped memory for seq2seq_forward.1']
    #allocation10 [shape = 'u8[196608]{0}', space=vmem, size = 0x30000, scoped, tag = 'input window, operand 7, single buffered']
    #allocation11 [shape = 'u8[512]{0}', space=vmem, size = 0x400, scoped, tag = 'input window, operand 9, single buffered']
    #allocation12 [shape = 's32[1]{0}', space=sflag, size = 0x4, scoped, tag = 'scoped memory for seq2seq_forward.1']
    #allocation13 [shape = 'u8[1024]{0}', space=vmem, size = 0x400, scoped, tag = 'input window, operand 11, single buffered']
    #allocation14 [shape = 'u8[8192]{0}', space=vmem, size = 0x2000, scoped, tag = 'output window, operand 0, single buffered']
    %17 = vsyncpa [#allocation3], 0
    %18 = vsyncpa [#allocation6], 0
    %19 = vsyncpa [#allocation9], 0
    %20 = vsyncpa [#allocation12], 0
    %21 = vsyncpa [#allocation4], 0
    // Predicated region
    $region2: #{seq2seq_forward.1} parent=1 // pred_check
      _
    $region3: #{seq2seq_forward.1} parent=1 // pred_check_branch
      %23 = sbr.rel (0) target = $region5
    $region4: #{seq2seq_forward.1} parent=1 // pred_region
      _
    $region5: #{seq2seq_forward.1} parent=1 // pred_fallthru
      _
    // Predicated region
    $region6: #{seq2seq_forward.1} parent=1 // pred_check
      _
    $region7: #{seq2seq_forward.1} parent=1 // pred_check_branch
      %25 = sbr.rel (0) target = $region9
    $region8: #{seq2seq_forward.1} parent=1 // pred_region
      _
    $region9: #{seq2seq_forward.1} parent=1 // pred_fallthru
      _
    // Predicated region
    $region10: #{seq2seq_forward.1} parent=1 // pred_check
      _
    $region11: #{seq2seq_forward.1} parent=1 // pred_check_branch
      %27 = sbr.rel (0) target = $region13
    $region12: #{seq2seq_forward.1} parent=1 // pred_region
      %s29 = ssub.s32 6144, 6144
      %30 = vsyncadd [#allocation3], %s29
      %s31 = sshll.u32 [#allocation2], 4
      %s32 = int_to_ptr.vmem [resolvable:$true] %s31
      %37 = dma.hbm_to_vmem [thread:$0]  %s2, 6144, %s32, [#allocation3], 384, 384, 24
    $region13: #{seq2seq_forward.1} parent=1 // pred_fallthru
      _
    // Predicated region
    $region14: #{seq2seq_forward.1} parent=1 // pred_check
      _
    $region15: #{seq2seq_forward.1} parent=1 // pred_check_branch
      %39 = sbr.rel (0) target = $region17
    $region16: #{seq2seq_forward.1} parent=1 // pred_region
      %s41 = ssub.s32 6144, 6144
      %42 = vsyncadd [#allocation6], %s41
      %s43 = sshll.u32 [#allocation5], 4
      %s44 = int_to_ptr.vmem [resolvable:$true] %s43
      %49 = dma.hbm_to_vmem [thread:$0]  %s3, 6144, %s44, [#allocation6], 384, 384, 24
    $region17: #{seq2seq_forward.1} parent=1 // pred_fallthru
      _
    // Predicated region
    $region18: #{seq2seq_forward.1} parent=1 // pred_check
      _
    $region19: #{seq2seq_forward.1} parent=1 // pred_check_branch
      %51 = sbr.rel (0) target = $region21
    $region20: #{seq2seq_forward.1} parent=1 // pred_region
      _
    $region21: #{seq2seq_forward.1} parent=1 // pred_fallthru
      _
    // Predicated region
    $region22: #{seq2seq_forward.1} parent=1 // pred_check
      _
    $region23: #{seq2seq_forward.1} parent=1 // pred_check_branch
      %53 = sbr.rel (0) target = $region25
    $region24: #{seq2seq_forward.1} parent=1 // pred_region
      %s55 = ssub.s32 16, 16
      %56 = vsyncadd [#allocation6], %s55
      %s58 = sshll.u32 [#allocation7], 4
      %s59 = int_to_ptr.vmem [resolvable:$true] %s58
      %61 = dma.hbm_to_vmem [thread:$0]  %s5, 16, %s59, [#allocation6]
    $region25: #{seq2seq_forward.1} parent=1 // pred_fallthru
      _
    // Predicated region
    $region26: #{seq2seq_forward.1} parent=1 // pred_check
      _
    $region27: #{seq2seq_forward.1} parent=1 // pred_check_branch
      %63 = sbr.rel (0) target = $region29
    $region28: #{seq2seq_forward.1} parent=1 // pred_region
      %s65 = ssub.s32 6144, 6144
      %66 = vsyncadd [#allocation9], %s65
      %s67 = sshll.u32 [#allocation8], 4
      %s68 = int_to_ptr.vmem [resolvable:$true] %s67
      %73 = dma.hbm_to_vmem [thread:$0]  %s6, 6144, %s68, [#allocation9], 384, 384, 24
    $region29: #{seq2seq_forward.1} parent=1 // pred_fallthru
      _
    // Predicated region
    $region30: #{seq2seq_forward.1} parent=1 // pred_check
      _
    $region31: #{seq2seq_forward.1} parent=1 // pred_check_branch
      %75 = sbr.rel (0) target = $region33
    $region32: #{seq2seq_forward.1} parent=1 // pred_region
      %s77 = ssub.s32 6144, 6144
      %78 = vsyncadd [#allocation9], %s77
      %s79 = sshll.u32 [#allocation10], 4
      %s80 = int_to_ptr.vmem [resolvable:$true] %s79
      %85 = dma.hbm_to_vmem [thread:$0]  %s7, 6144, %s80, [#allocation9], 384, 384, 24
    $region33: #{seq2seq_forward.1} parent=1 // pred_fallthru
      _
    // Predicated region
    $region34: #{seq2seq_forward.1} parent=1 // pred_check
      _
    $region35: #{seq2seq_forward.1} parent=1 // pred_check_branch
      %87 = sbr.rel (0) target = $region37
    $region36: #{seq2seq_forward.1} parent=1 // pred_region
      _
    $region37: #{seq2seq_forward.1} parent=1 // pred_fallthru
      _
    // Predicated region
    $region38: #{seq2seq_forward.1} parent=1 // pred_check
      _
    $region39: #{seq2seq_forward.1} parent=1 // pred_check_branch
      %89 = sbr.rel (0) target = $region41
    $region40: #{seq2seq_forward.1} parent=1 // pred_region
      %s91 = ssub.s32 16, 16
      %92 = vsyncadd [#allocation12], %s91
      %s94 = sshll.u32 [#allocation11], 4
      %s95 = int_to_ptr.vmem [resolvable:$true] %s94
      %97 = dma.hbm_to_vmem [thread:$0]  %s9, 16, %s95, [#allocation12]
    $region41: #{seq2seq_forward.1} parent=1 // pred_fallthru
      _
    // Predicated region
    $region42: #{seq2seq_forward.1} parent=1 // pred_check
      _
    $region43: #{seq2seq_forward.1} parent=1 // pred_check_branch
      %99 = sbr.rel (0) target = $region45
    $region44: #{seq2seq_forward.1} parent=1 // pred_region
      _
    $region45: #{seq2seq_forward.1} parent=1 // pred_fallthru
      _
    // Predicated region
    $region46: #{seq2seq_forward.1} parent=1 // pred_check
      _
    $region47: #{seq2seq_forward.1} parent=1 // pred_check_branch
      %101 = sbr.rel (0) target = $region49
    $region48: #{seq2seq_forward.1} parent=1 // pred_region
      %s103 = ssub.s32 32, 32
      %104 = vsyncadd [#allocation12], %s103
      %s106 = sshll.u32 [#allocation13], 4
      %s107 = int_to_ptr.vmem [resolvable:$true] %s106
      %109 = dma.hbm_to_vmem [thread:$0]  %s11, 32, %s107, [#allocation12]
    $region49: #{seq2seq_forward.1} parent=1 // pred_fallthru
      _
    // Predicated region
    $region50: #{seq2seq_forward.1} parent=1 // pred_check
      _
    $region51: #{seq2seq_forward.1} parent=1 // pred_check_branch
      %111 = sbr.rel (0) target = $region53
    $region52: #{seq2seq_forward.1} parent=1 // pred_region
      %112 = dma.done [#allocation3], 6144
    $region53: #{seq2seq_forward.1} parent=1 // pred_fallthru
      _
    // Predicated region
    $region54: #{seq2seq_forward.1} parent=1 // pred_check
      _
    $region55: #{seq2seq_forward.1} parent=1 // pred_check_branch
      %114 = sbr.rel (0) target = $region57
    $region56: #{seq2seq_forward.1} parent=1 // pred_region
      %115 = dma.done [#allocation6], 6144
    $region57: #{seq2seq_forward.1} parent=1 // pred_fallthru
      _
    // Predicated region
    $region58: #{seq2seq_forward.1} parent=1 // pred_check
      _
    $region59: #{seq2seq_forward.1} parent=1 // pred_check_branch
      %117 = sbr.rel (0) target = $region61
    $region60: #{seq2seq_forward.1} parent=1 // pred_region
      %118 = dma.done [#allocation6], 16
    $region61: #{seq2seq_forward.1} parent=1 // pred_fallthru
      _
    // Predicated region
    $region62: #{seq2seq_forward.1} parent=1 // pred_check
      _
    $region63: #{seq2seq_forward.1} parent=1 // pred_check_branch
      %120 = sbr.rel (0) target = $region65
    $region64: #{seq2seq_forward.1} parent=1 // pred_region
      %121 = dma.done [#allocation9], 6144
    $region65: #{seq2seq_forward.1} parent=1 // pred_fallthru
      _
    // Predicated region
    $region66: #{seq2seq_forward.1} parent=1 // pred_check
      _
    $region67: #{seq2seq_forward.1} parent=1 // pred_check_branch
      %123 = sbr.rel (0) target = $region69
    $region68: #{seq2seq_forward.1} parent=1 // pred_region
      %124 = dma.done [#allocation9], 6144
    $region69: #{seq2seq_forward.1} parent=1 // pred_fallthru
      _
    // Predicated region
    $region70: #{seq2seq_forward.1} parent=1 // pred_check
      _
    $region71: #{seq2seq_forward.1} parent=1 // pred_check_branch
      %126 = sbr.rel (0) target = $region73
    $region72: #{seq2seq_forward.1} parent=1 // pred_region
      %127 = dma.done [#allocation12], 16
    $region73: #{seq2seq_forward.1} parent=1 // pred_fallthru
      _
    // Predicated region
    $region74: #{seq2seq_forward.1} parent=1 // pred_check
      _
    $region75: #{seq2seq_forward.1} parent=1 // pred_check_branch
      %129 = sbr.rel (0) target = $region77
    $region76: #{seq2seq_forward.1} parent=1 // pred_region
      %130 = dma.done [#allocation12], 32
    $region77: #{seq2seq_forward.1} parent=1 // pred_fallthru
      _
    %v131 = vld [vmem:[%s0] sm:$0xff]
    %v132 = vld [vmem:[#allocation2] sm:$0xff]
    %v133 = vld [vmem:[#allocation2 + $0x8] sm:$0xff]
    %v134 = vld [vmem:[#allocation2 + $0x10] sm:$0xff]
    %v135 = vld [vmem:[#allocation2 + $0x18] sm:$0xff]
    %v136 = vld [vmem:[#allocation2 + $0x20] sm:$0xff]
    %v137 = vld [vmem:[#allocation2 + $0x28] sm:$0xff]
    %v138 = vld [vmem:[#allocation2 + $0x30] sm:$0xff]
    %v139 = vld [vmem:[#allocation2 + $0x38] sm:$0xff]
    %v140 = vld [vmem:[#allocation2 + $0x40] sm:$0xff]
    %v141 = vld [vmem:[#allocation2 + $0x48] sm:$0xff]
    %v142 = vld [vmem:[#allocation2 + $0x50] sm:$0xff]
    %v143 = vld [vmem:[#allocation2 + $0x58] sm:$0xff]
    %v144 = vld [vmem:[#allocation2 + $0x60] sm:$0xff]
    %v145 = vld [vmem:[#allocation2 + $0x68] sm:$0xff]
    %v146 = vld [vmem:[#allocation2 + $0x70] sm:$0xff]
    %v147 = vld [vmem:[#allocation2 + $0x78] sm:$0xff]
    %v148 = vld [vmem:[#allocation2 + $0x80] sm:$0xff]
    %v149 = vld [vmem:[#allocation2 + $0x88] sm:$0xff]
    %v150 = vld [vmem:[#allocation2 + $0x90] sm:$0xff]
    %v151 = vld [vmem:[#allocation2 + $0x98] sm:$0xff]
    %v152 = vld [vmem:[#allocation2 + $0xa0] sm:$0xff]
    %v153 = vld [vmem:[#allocation2 + $0xa8] sm:$0xff]
    %v154 = vld [vmem:[#allocation2 + $0xb0] sm:$0xff]
    %v155 = vld [vmem:[#allocation2 + $0xb8] sm:$0xff]
    %v156 = vld [vmem:[#allocation2 + $0xc0] sm:$0xff]
    %v157 = vld [vmem:[#allocation2 + $0xc8] sm:$0xff]
    %v158 = vld [vmem:[#allocation2 + $0xd0] sm:$0xff]
    %v159 = vld [vmem:[#allocation2 + $0xd8] sm:$0xff]
    %v160 = vld [vmem:[#allocation2 + $0xe0] sm:$0xff]
    %v161 = vld [vmem:[#allocation2 + $0xe8] sm:$0xff]
    %v162 = vld [vmem:[#allocation2 + $0xf0] sm:$0xff]
    %v163 = vld [vmem:[#allocation2 + $0xf8] sm:$0xff]
    %v164 = vld [vmem:[#allocation2 + $0x100] sm:$0xff]
    %v165 = vld [vmem:[#allocation2 + $0x108] sm:$0xff]
    %v166 = vld [vmem:[#allocation2 + $0x110] sm:$0xff]
    %v167 = vld [vmem:[#allocation2 + $0x118] sm:$0xff]
    %v168 = vld [vmem:[#allocation2 + $0x120] sm:$0xff]
    %v169 = vld [vmem:[#allocation2 + $0x128] sm:$0xff]
    %v170 = vld [vmem:[#allocation2 + $0x130] sm:$0xff]
    %v171 = vld [vmem:[#allocation2 + $0x138] sm:$0xff]
    %v172 = vld [vmem:[#allocation2 + $0x140] sm:$0xff]
    %v173 = vld [vmem:[#allocation2 + $0x148] sm:$0xff]
    %v174 = vld [vmem:[#allocation2 + $0x150] sm:$0xff]
    %v175 = vld [vmem:[#allocation2 + $0x158] sm:$0xff]
    %v176 = vld [vmem:[#allocation2 + $0x160] sm:$0xff]
    %v177 = vld [vmem:[#allocation2 + $0x168] sm:$0xff]
    %v178 = vld [vmem:[#allocation2 + $0x170] sm:$0xff]
    %v179 = vld [vmem:[#allocation2 + $0x178] sm:$0xff]
    %v180 = vld [vmem:[%s4] sm:$0x7]
    %v182 = vlaneseq
    %v183 = vshrl.u32 %v182, 7
    %v184 = vsub.s32 0, %v183
    %v185 = vrot.slane %v180, %v184
    %v186 = vlaneseq
    %v187 = vshrl.u32 %v186, 7
    %v188 = vsub.s32 1, %v187
    %v189 = vrot.slane %v180, %v188
    %v190 = vlaneseq
    %v191 = vshrl.u32 %v190, 7
    %v192 = vsub.s32 2, %v191
    %v193 = vrot.slane %v180, %v192
    %197 = vmatprep.subr.mxu0 %v133
    %198 = vmatpush1.msra.mxu0 %v132
    %199 = vmatprep.subr.mxu0 %v136
    %200 = vmatpush1.msra.mxu0 %v135
    %201 = vmatprep.subr.mxu0 %v139
    %202 = vmatpush1.msra.mxu0 %v138
    %203 = vmatprep.subr.mxu0 %v142
    %204 = vmatpush1.msra.mxu0 %v141
    %205 = vmatprep.subr.mxu0 %v145
    %206 = vmatpush1.msra.mxu0 %v144
    %207 = vmatprep.subr.mxu0 %v148
    %208 = vmatpush1.msra.mxu0 %v147
    %209 = vmatprep.subr.mxu0 %v151
    %210 = vmatpush1.msra.mxu0 %v150
    %211 = vmatprep.subr.mxu0 %v154
    %212 = vmatpush1.msra.mxu0 %v153
    %213 = vmatprep.subr.mxu0 %v157
    %214 = vmatpush1.msra.mxu0 %v156
    %215 = vmatprep.subr.mxu0 %v160
    %216 = vmatpush1.msra.mxu0 %v159
    %217 = vmatprep.subr.mxu0 %v163
    %218 = vmatpush1.msra.mxu0 %v162
    %219 = vmatprep.subr.mxu0 %v166
    %220 = vmatpush1.msra.mxu0 %v165
    %221 = vmatprep.subr.mxu0 %v169
    %222 = vmatpush1.msra.mxu0 %v168
    %223 = vmatprep.subr.mxu0 %v172
    %224 = vmatpush1.msra.mxu0 %v171
    %225 = vmatprep.subr.mxu0 %v175
    %226 = vmatpush1.msra.mxu0 %v174
    %227 = vmatprep.subr.mxu0 %v178
    %228 = vmatpush1.msra.mxu0 %v177
    %229 = vmatprep.subr.mxu0 0.0
    %230 = vmatpush1.msra.mxu0 0.0
    %231 = vmatprep.subr.mxu0 0.0
    %232 = vmatpush1.msra.mxu0 0.0
    %233 = vmatprep.subr.mxu0 0.0
    %234 = vmatpush1.msra.mxu0 0.0
    %235 = vmatprep.subr.mxu0 0.0
    %236 = vmatpush1.msra.mxu0 0.0
    %237 = vmatprep.subr.mxu0 0.0
    %238 = vmatpush1.msra.mxu0 0.0
    %239 = vmatprep.subr.mxu0 0.0
    %240 = vmatpush1.msra.mxu0 0.0
    %241 = vmatprep.subr.mxu0 0.0
    %242 = vmatpush1.msra.mxu0 0.0
    %243 = vmatprep.subr.mxu0 0.0
    %244 = vmatpush1.msra.mxu0 0.0
    %245 = vmatprep.subr.mxu0 0.0
    %246 = vmatpush1.msra.mxu0 0.0
    %247 = vmatprep.subr.mxu0 0.0
    %248 = vmatpush1.msra.mxu0 0.0
    %249 = vmatprep.subr.mxu0 0.0
    %250 = vmatpush1.msra.mxu0 0.0
    %251 = vmatprep.subr.mxu0 0.0
    %252 = vmatpush1.msra.mxu0 0.0
    %253 = vmatprep.subr.mxu0 0.0
    %254 = vmatpush1.msra.mxu0 0.0
    %255 = vmatprep.subr.mxu0 0.0
    %256 = vmatpush1.msra.mxu0 0.0
    %257 = vmatprep.subr.mxu0 0.0
    %258 = vmatpush1.msra.mxu0 0.0
    %259 = vmatprep.subr.mxu0 0.0
    %260 = vmatpush1.msra.mxu0 0.0
    %261 = vmatprep.mubr.f32.mxu0 0.0
    %262 = vmatmul.mubr.f32.gmra.mrb[0].mxu0 %v131
    %v263 = vpop.f32.mrb[0].mxu0
    %v264 = vadd.f32 %v185, %v263
    %v265 = vpop.f32.mrb[0].mxu0
    %v266 = vadd.f32 %v189, %v265
    %267 = vdwg.mxu0
    %268 = vmatprep.subr.mxu0 0.0
    %269 = vmatpush1.msra.mxu0 %v134
    %270 = vmatprep.subr.mxu0 0.0
    %271 = vmatpush1.msra.mxu0 %v137
    %272 = vmatprep.subr.mxu0 0.0
    %273 = vmatpush1.msra.mxu0 %v140
    %274 = vmatprep.subr.mxu0 0.0
    %275 = vmatpush1.msra.mxu0 %v143
    %276 = vmatprep.subr.mxu0 0.0
    %277 = vmatpush1.msra.mxu0 %v146
    %278 = vmatprep.subr.mxu0 0.0
    %279 = vmatpush1.msra.mxu0 %v149
    %280 = vmatprep.subr.mxu0 0.0
    %281 = vmatpush1.msra.mxu0 %v152
    %282 = vmatprep.subr.mxu0 0.0
    %283 = vmatpush1.msra.mxu0 %v155
    %284 = vmatprep.subr.mxu0 0.0
    %285 = vmatpush1.msra.mxu0 %v158
    %286 = vmatprep.subr.mxu0 0.0
    %287 = vmatpush1.msra.mxu0 %v161
    %288 = vmatprep.subr.mxu0 0.0
    %289 = vmatpush1.msra.mxu0 %v164
    %290 = vmatprep.subr.mxu0 0.0
    %291 = vmatpush1.msra.mxu0 %v167
    %292 = vmatprep.subr.mxu0 0.0
    %293 = vmatpush1.msra.mxu0 %v170
    %294 = vmatprep.subr.mxu0 0.0
    %295 = vmatpush1.msra.mxu0 %v173
    %296 = vmatprep.subr.mxu0 0.0
    %297 = vmatpush1.msra.mxu0 %v176
    %298 = vmatprep.subr.mxu0 0.0
    %299 = vmatpush1.msra.mxu0 %v179
    %300 = vmatprep.subr.mxu0 0.0
    %301 = vmatpush1.msra.mxu0 0.0
    %302 = vmatprep.subr.mxu0 0.0
    %303 = vmatpush1.msra.mxu0 0.0
    %304 = vmatprep.subr.mxu0 0.0
    %305 = vmatpush1.msra.mxu0 0.0
    %306 = vmatprep.subr.mxu0 0.0
    %307 = vmatpush1.msra.mxu0 0.0
    %308 = vmatprep.subr.mxu0 0.0
    %309 = vmatpush1.msra.mxu0 0.0
    %310 = vmatprep.subr.mxu0 0.0
    %311 = vmatpush1.msra.mxu0 0.0
    %312 = vmatprep.subr.mxu0 0.0
    %313 = vmatpush1.msra.mxu0 0.0
    %314 = vmatprep.subr.mxu0 0.0
    %315 = vmatpush1.msra.mxu0 0.0
    %316 = vmatprep.subr.mxu0 0.0
    %317 = vmatpush1.msra.mxu0 0.0
    %318 = vmatprep.subr.mxu0 0.0
    %319 = vmatpush1.msra.mxu0 0.0
    %320 = vmatprep.subr.mxu0 0.0
    %321 = vmatpush1.msra.mxu0 0.0
    %322 = vmatprep.subr.mxu0 0.0
    %323 = vmatpush1.msra.mxu0 0.0
    %324 = vmatprep.subr.mxu0 0.0
    %325 = vmatpush1.msra.mxu0 0.0
    %326 = vmatprep.subr.mxu0 0.0
    %327 = vmatpush1.msra.mxu0 0.0
    %328 = vmatprep.subr.mxu0 0.0
    %329 = vmatpush1.msra.mxu0 0.0
    %330 = vmatprep.subr.mxu0 0.0
    %331 = vmatpush1.msra.mxu0 0.0
    %332 = vmatprep.mubr.f32.mxu0 0.0
    %333 = vmatmul.mubr.f32.gmra.mrb[0].mxu0 %v131
    %v334 = vpop.f32.mrb[0].mxu0
    %v335 = vadd.f32 %v193, %v334
    %v336 = vpop.f32.mrb[0].mxu0
    %337 = vdwg.mxu0
    %v338 = vld [vmem:[%s1] sm:$0xff]
    %v339 = vld [vmem:[#allocation8] sm:$0xff]
    %v340 = vld [vmem:[#allocation8 + $0x8] sm:$0xff]
    %v341 = vld [vmem:[#allocation8 + $0x10] sm:$0xff]
    %v342 = vld [vmem:[#allocation8 + $0x18] sm:$0xff]
    %v343 = vld [vmem:[#allocation8 + $0x20] sm:$0xff]
    %v344 = vld [vmem:[#allocation8 + $0x28] sm:$0xff]
    %v345 = vld [vmem:[#allocation8 + $0x30] sm:$0xff]
    %v346 = vld [vmem:[#allocation8 + $0x38] sm:$0xff]
    %v347 = vld [vmem:[#allocation8 + $0x40] sm:$0xff]
    %v348 = vld [vmem:[#allocation8 + $0x48] sm:$0xff]
    %v349 = vld [vmem:[#allocation8 + $0x50] sm:$0xff]
    %v350 = vld [vmem:[#allocation8 + $0x58] sm:$0xff]
    %v351 = vld [vmem:[#allocation8 + $0x60] sm:$0xff]
    %v352 = vld [vmem:[#allocation8 + $0x68] sm:$0xff]
    %v353 = vld [vmem:[#allocation8 + $0x70] sm:$0xff]
    %v354 = vld [vmem:[#allocation8 + $0x78] sm:$0xff]
    %v355 = vld [vmem:[#allocation8 + $0x80] sm:$0xff]
    %v356 = vld [vmem:[#allocation8 + $0x88] sm:$0xff]
    %v357 = vld [vmem:[#allocation8 + $0x90] sm:$0xff]
    %v358 = vld [vmem:[#allocation8 + $0x98] sm:$0xff]
    %v359 = vld [vmem:[#allocation8 + $0xa0] sm:$0xff]
    %v360 = vld [vmem:[#allocation8 + $0xa8] sm:$0xff]
    %v361 = vld [vmem:[#allocation8 + $0xb0] sm:$0xff]
    %v362 = vld [vmem:[#allocation8 + $0xb8] sm:$0xff]
    %v363 = vld [vmem:[#allocation8 + $0xc0] sm:$0xff]
    %v364 = vld [vmem:[#allocation8 + $0xc8] sm:$0xff]
    %v365 = vld [vmem:[#allocation8 + $0xd0] sm:$0xff]
    %v366 = vld [vmem:[#allocation8 + $0xd8] sm:$0xff]
    %v367 = vld [vmem:[#allocation8 + $0xe0] sm:$0xff]
    %v368 = vld [vmem:[#allocation8 + $0xe8] sm:$0xff]
    %v369 = vld [vmem:[#allocation8 + $0xf0] sm:$0xff]
    %v370 = vld [vmem:[#allocation8 + $0xf8] sm:$0xff]
    %v371 = vld [vmem:[#allocation8 + $0x100] sm:$0xff]
    %v372 = vld [vmem:[#allocation8 + $0x108] sm:$0xff]
    %v373 = vld [vmem:[#allocation8 + $0x110] sm:$0xff]
    %v374 = vld [vmem:[#allocation8 + $0x118] sm:$0xff]
    %v375 = vld [vmem:[#allocation8 + $0x120] sm:$0xff]
    %v376 = vld [vmem:[#allocation8 + $0x128] sm:$0xff]
    %v377 = vld [vmem:[#allocation8 + $0x130] sm:$0xff]
    %v378 = vld [vmem:[#allocation8 + $0x138] sm:$0xff]
    %v379 = vld [vmem:[#allocation8 + $0x140] sm:$0xff]
    %v380 = vld [vmem:[#allocation8 + $0x148] sm:$0xff]
    %v381 = vld [vmem:[#allocation8 + $0x150] sm:$0xff]
    %v382 = vld [vmem:[#allocation8 + $0x158] sm:$0xff]
    %v383 = vld [vmem:[#allocation8 + $0x160] sm:$0xff]
    %v384 = vld [vmem:[#allocation8 + $0x168] sm:$0xff]
    %v385 = vld [vmem:[#allocation8 + $0x170] sm:$0xff]
    %v386 = vld [vmem:[#allocation8 + $0x178] sm:$0xff]
    %v387 = vld [vmem:[%s8] sm:$0x7]
    %v389 = vlaneseq
    %v390 = vshrl.u32 %v389, 7
    %v391 = vsub.s32 0, %v390
    %v392 = vrot.slane %v387, %v391
    %v393 = vlaneseq
    %v394 = vshrl.u32 %v393, 7
    %v395 = vsub.s32 1, %v394
    %v396 = vrot.slane %v387, %v395
    %v397 = vlaneseq
    %v398 = vshrl.u32 %v397, 7
    %v399 = vsub.s32 2, %v398
    %v400 = vrot.slane %v387, %v399
    %404 = vmatprep.subr.mxu0 %v340
    %405 = vmatpush1.msra.mxu0 %v339
    %406 = vmatprep.subr.mxu0 %v343
    %407 = vmatpush1.msra.mxu0 %v342
    %408 = vmatprep.subr.mxu0 %v346
    %409 = vmatpush1.msra.mxu0 %v345
    %410 = vmatprep.subr.mxu0 %v349
    %411 = vmatpush1.msra.mxu0 %v348
    %412 = vmatprep.subr.mxu0 %v352
    %413 = vmatpush1.msra.mxu0 %v351
    %414 = vmatprep.subr.mxu0 %v355
    %415 = vmatpush1.msra.mxu0 %v354
    %416 = vmatprep.subr.mxu0 %v358
    %417 = vmatpush1.msra.mxu0 %v357
    %418 = vmatprep.subr.mxu0 %v361
    %419 = vmatpush1.msra.mxu0 %v360
    %420 = vmatprep.subr.mxu0 %v364
    %421 = vmatpush1.msra.mxu0 %v363
    %422 = vmatprep.subr.mxu0 %v367
    %423 = vmatpush1.msra.mxu0 %v366
    %424 = vmatprep.subr.mxu0 %v370
    %425 = vmatpush1.msra.mxu0 %v369
    %426 = vmatprep.subr.mxu0 %v373
    %427 = vmatpush1.msra.mxu0 %v372
    %428 = vmatprep.subr.mxu0 %v376
    %429 = vmatpush1.msra.mxu0 %v375
    %430 = vmatprep.subr.mxu0 %v379
    %431 = vmatpush1.msra.mxu0 %v378
    %432 = vmatprep.subr.mxu0 %v382
    %433 = vmatpush1.msra.mxu0 %v381
    %434 = vmatprep.subr.mxu0 %v385
    %435 = vmatpush1.msra.mxu0 %v384
    %436 = vmatprep.subr.mxu0 0.0
    %437 = vmatpush1.msra.mxu0 0.0
    %438 = vmatprep.subr.mxu0 0.0
    %439 = vmatpush1.msra.mxu0 0.0
    %440 = vmatprep.subr.mxu0 0.0
    %441 = vmatpush1.msra.mxu0 0.0
    %442 = vmatprep.subr.mxu0 0.0
    %443 = vmatpush1.msra.mxu0 0.0
    %444 = vmatprep.subr.mxu0 0.0
    %445 = vmatpush1.msra.mxu0 0.0
    %446 = vmatprep.subr.mxu0 0.0
    %447 = vmatpush1.msra.mxu0 0.0
    %448 = vmatprep.subr.mxu0 0.0
    %449 = vmatpush1.msra.mxu0 0.0
    %450 = vmatprep.subr.mxu0 0.0
    %451 = vmatpush1.msra.mxu0 0.0
    %452 = vmatprep.subr.mxu0 0.0
    %453 = vmatpush1.msra.mxu0 0.0
    %454 = vmatprep.subr.mxu0 0.0
    %455 = vmatpush1.msra.mxu0 0.0
    %456 = vmatprep.subr.mxu0 0.0
    %457 = vmatpush1.msra.mxu0 0.0
    %458 = vmatprep.subr.mxu0 0.0
    %459 = vmatpush1.msra.mxu0 0.0
    %460 = vmatprep.subr.mxu0 0.0
    %461 = vmatpush1.msra.mxu0 0.0
    %462 = vmatprep.subr.mxu0 0.0
    %463 = vmatpush1.msra.mxu0 0.0
    %464 = vmatprep.subr.mxu0 0.0
    %465 = vmatpush1.msra.mxu0 0.0
    %466 = vmatprep.subr.mxu0 0.0
    %467 = vmatpush1.msra.mxu0 0.0
    %468 = vmatprep.mubr.f32.mxu0 0.0
    %469 = vmatmul.mubr.f32.gmra.mrb[0].mxu0 %v338
    %v470 = vpop.f32.mrb[0].mxu0
    %v471 = vadd.f32 %v392, %v470
    %v472 = vpop.f32.mrb[0].mxu0
    %v473 = vadd.f32 %v396, %v472
    %474 = vdwg.mxu0
    %475 = vmatprep.subr.mxu0 0.0
    %476 = vmatpush1.msra.mxu0 %v341
    %477 = vmatprep.subr.mxu0 0.0
    %478 = vmatpush1.msra.mxu0 %v344
    %479 = vmatprep.subr.mxu0 0.0
    %480 = vmatpush1.msra.mxu0 %v347
    %481 = vmatprep.subr.mxu0 0.0
    %482 = vmatpush1.msra.mxu0 %v350
    %483 = vmatprep.subr.mxu0 0.0
    %484 = vmatpush1.msra.mxu0 %v353
    %485 = vmatprep.subr.mxu0 0.0
    %486 = vmatpush1.msra.mxu0 %v356
    %487 = vmatprep.subr.mxu0 0.0
    %488 = vmatpush1.msra.mxu0 %v359
    %489 = vmatprep.subr.mxu0 0.0
    %490 = vmatpush1.msra.mxu0 %v362
    %491 = vmatprep.subr.mxu0 0.0
    %492 = vmatpush1.msra.mxu0 %v365
    %493 = vmatprep.subr.mxu0 0.0
    %494 = vmatpush1.msra.mxu0 %v368
    %495 = vmatprep.subr.mxu0 0.0
    %496 = vmatpush1.msra.mxu0 %v371
    %497 = vmatprep.subr.mxu0 0.0
    %498 = vmatpush1.msra.mxu0 %v374
    %499 = vmatprep.subr.mxu0 0.0
    %500 = vmatpush1.msra.mxu0 %v377
    %501 = vmatprep.subr.mxu0 0.0
    %502 = vmatpush1.msra.mxu0 %v380
    %503 = vmatprep.subr.mxu0 0.0
    %504 = vmatpush1.msra.mxu0 %v383
    %505 = vmatprep.subr.mxu0 0.0
    %506 = vmatpush1.msra.mxu0 %v386
    %507 = vmatprep.subr.mxu0 0.0
    %508 = vmatpush1.msra.mxu0 0.0
    %509 = vmatprep.subr.mxu0 0.0
    %510 = vmatpush1.msra.mxu0 0.0
    %511 = vmatprep.subr.mxu0 0.0
    %512 = vmatpush1.msra.mxu0 0.0
    %513 = vmatprep.subr.mxu0 0.0
    %514 = vmatpush1.msra.mxu0 0.0
    %515 = vmatprep.subr.mxu0 0.0
    %516 = vmatpush1.msra.mxu0 0.0
    %517 = vmatprep.subr.mxu0 0.0
    %518 = vmatpush1.msra.mxu0 0.0
    %519 = vmatprep.subr.mxu0 0.0
    %520 = vmatpush1.msra.mxu0 0.0
    %521 = vmatprep.subr.mxu0 0.0
    %522 = vmatpush1.msra.mxu0 0.0
    %523 = vmatprep.subr.mxu0 0.0
    %524 = vmatpush1.msra.mxu0 0.0
    %525 = vmatprep.subr.mxu0 0.0
    %526 = vmatpush1.msra.mxu0 0.0
    %527 = vmatprep.subr.mxu0 0.0
    %528 = vmatpush1.msra.mxu0 0.0
    %529 = vmatprep.subr.mxu0 0.0
    %530 = vmatpush1.msra.mxu0 0.0
    %531 = vmatprep.subr.mxu0 0.0
    %532 = vmatpush1.msra.mxu0 0.0
    %533 = vmatprep.subr.mxu0 0.0
    %534 = vmatpush1.msra.mxu0 0.0
    %535 = vmatprep.subr.mxu0 0.0
    %536 = vmatpush1.msra.mxu0 0.0
    %537 = vmatprep.subr.mxu0 0.0
    %538 = vmatpush1.msra.mxu0 0.0
    %539 = vmatprep.mubr.f32.mxu0 0.0
    %540 = vmatmul.mubr.f32.gmra.mrb[0].mxu0 %v338
    %v541 = vpop.f32.mrb[0].mxu0
    %v542 = vadd.f32 %v400, %v541
    %v543 = vpop.f32.mrb[0].mxu0
    %544 = vdwg.mxu0
    %v545 = vld [vmem:[#allocation5] sm:$0xff]
    %v546 = vld [vmem:[#allocation5 + $0x8] sm:$0xff]
    %v547 = vld [vmem:[#allocation5 + $0x10] sm:$0xff]
    %v548 = vld [vmem:[#allocation5 + $0x18] sm:$0xff]
    %v549 = vld [vmem:[#allocation5 + $0x20] sm:$0xff]
    %v550 = vld [vmem:[#allocation5 + $0x28] sm:$0xff]
    %v551 = vld [vmem:[#allocation5 + $0x30] sm:$0xff]
    %v552 = vld [vmem:[#allocation5 + $0x38] sm:$0xff]
    %v553 = vld [vmem:[#allocation5 + $0x40] sm:$0xff]
    %v554 = vld [vmem:[#allocation5 + $0x48] sm:$0xff]
    %v555 = vld [vmem:[#allocation5 + $0x50] sm:$0xff]
    %v556 = vld [vmem:[#allocation5 + $0x58] sm:$0xff]
    %v557 = vld [vmem:[#allocation5 + $0x60] sm:$0xff]
    %v558 = vld [vmem:[#allocation5 + $0x68] sm:$0xff]
    %v559 = vld [vmem:[#allocation5 + $0x70] sm:$0xff]
    %v560 = vld [vmem:[#allocation5 + $0x78] sm:$0xff]
    %v561 = vld [vmem:[#allocation5 + $0x80] sm:$0xff]
    %v562 = vld [vmem:[#allocation5 + $0x88] sm:$0xff]
    %v563 = vld [vmem:[#allocation5 + $0x90] sm:$0xff]
    %v564 = vld [vmem:[#allocation5 + $0x98] sm:$0xff]
    %v565 = vld [vmem:[#allocation5 + $0xa0] sm:$0xff]
    %v566 = vld [vmem:[#allocation5 + $0xa8] sm:$0xff]
    %v567 = vld [vmem:[#allocation5 + $0xb0] sm:$0xff]
    %v568 = vld [vmem:[#allocation5 + $0xb8] sm:$0xff]
    %v569 = vld [vmem:[#allocation5 + $0xc0] sm:$0xff]
    %v570 = vld [vmem:[#allocation5 + $0xc8] sm:$0xff]
    %v571 = vld [vmem:[#allocation5 + $0xd0] sm:$0xff]
    %v572 = vld [vmem:[#allocation5 + $0xd8] sm:$0xff]
    %v573 = vld [vmem:[#allocation5 + $0xe0] sm:$0xff]
    %v574 = vld [vmem:[#allocation5 + $0xe8] sm:$0xff]
    %v575 = vld [vmem:[#allocation5 + $0xf0] sm:$0xff]
    %v576 = vld [vmem:[#allocation5 + $0xf8] sm:$0xff]
    %v577 = vld [vmem:[#allocation5 + $0x100] sm:$0xff]
    %v578 = vld [vmem:[#allocation5 + $0x108] sm:$0xff]
    %v579 = vld [vmem:[#allocation5 + $0x110] sm:$0xff]
    %v580 = vld [vmem:[#allocation5 + $0x118] sm:$0xff]
    %v581 = vld [vmem:[#allocation5 + $0x120] sm:$0xff]
    %v582 = vld [vmem:[#allocation5 + $0x128] sm:$0xff]
    %v583 = vld [vmem:[#allocation5 + $0x130] sm:$0xff]
    %v584 = vld [vmem:[#allocation5 + $0x138] sm:$0xff]
    %v585 = vld [vmem:[#allocation5 + $0x140] sm:$0xff]
    %v586 = vld [vmem:[#allocation5 + $0x148] sm:$0xff]
    %v587 = vld [vmem:[#allocation5 + $0x150] sm:$0xff]
    %v588 = vld [vmem:[#allocation5 + $0x158] sm:$0xff]
    %v589 = vld [vmem:[#allocation5 + $0x160] sm:$0xff]
    %v590 = vld [vmem:[#allocation5 + $0x168] sm:$0xff]
    %v591 = vld [vmem:[#allocation5 + $0x170] sm:$0xff]
    %v592 = vld [vmem:[#allocation5 + $0x178] sm:$0xff]
    %593 = vmatprep.subr.mxu0 %v546
    %594 = vmatpush1.msra.mxu0 %v545
    %595 = vmatprep.subr.mxu0 %v549
    %596 = vmatpush1.msra.mxu0 %v548
    %597 = vmatprep.subr.mxu0 %v552
    %598 = vmatpush1.msra.mxu0 %v551
    %599 = vmatprep.subr.mxu0 %v555
    %600 = vmatpush1.msra.mxu0 %v554
    %601 = vmatprep.subr.mxu0 %v558
    %602 = vmatpush1.msra.mxu0 %v557
    %603 = vmatprep.subr.mxu0 %v561
    %604 = vmatpush1.msra.mxu0 %v560
    %605 = vmatprep.subr.mxu0 %v564
    %606 = vmatpush1.msra.mxu0 %v563
    %607 = vmatprep.subr.mxu0 %v567
    %608 = vmatpush1.msra.mxu0 %v566
    %609 = vmatprep.subr.mxu0 %v570
    %610 = vmatpush1.msra.mxu0 %v569
    %611 = vmatprep.subr.mxu0 %v573
    %612 = vmatpush1.msra.mxu0 %v572
    %613 = vmatprep.subr.mxu0 %v576
    %614 = vmatpush1.msra.mxu0 %v575
    %615 = vmatprep.subr.mxu0 %v579
    %616 = vmatpush1.msra.mxu0 %v578
    %617 = vmatprep.subr.mxu0 %v582
    %618 = vmatpush1.msra.mxu0 %v581
    %619 = vmatprep.subr.mxu0 %v585
    %620 = vmatpush1.msra.mxu0 %v584
    %621 = vmatprep.subr.mxu0 %v588
    %622 = vmatpush1.msra.mxu0 %v587
    %623 = vmatprep.subr.mxu0 %v591
    %624 = vmatpush1.msra.mxu0 %v590
    %625 = vmatprep.subr.mxu0 0.0
    %626 = vmatpush1.msra.mxu0 0.0
    %627 = vmatprep.subr.mxu0 0.0
    %628 = vmatpush1.msra.mxu0 0.0
    %629 = vmatprep.subr.mxu0 0.0
    %630 = vmatpush1.msra.mxu0 0.0
    %631 = vmatprep.subr.mxu0 0.0
    %632 = vmatpush1.msra.mxu0 0.0
    %633 = vmatprep.subr.mxu0 0.0
    %634 = vmatpush1.msra.mxu0 0.0
    %635 = vmatprep.subr.mxu0 0.0
    %636 = vmatpush1.msra.mxu0 0.0
    %637 = vmatprep.subr.mxu0 0.0
    %638 = vmatpush1.msra.mxu0 0.0
    %639 = vmatprep.subr.mxu0 0.0
    %640 = vmatpush1.msra.mxu0 0.0
    %641 = vmatprep.subr.mxu0 0.0
    %642 = vmatpush1.msra.mxu0 0.0
    %643 = vmatprep.subr.mxu0 0.0
    %644 = vmatpush1.msra.mxu0 0.0
    %645 = vmatprep.subr.mxu0 0.0
    %646 = vmatpush1.msra.mxu0 0.0
    %647 = vmatprep.subr.mxu0 0.0
    %648 = vmatpush1.msra.mxu0 0.0
    %649 = vmatprep.subr.mxu0 0.0
    %650 = vmatpush1.msra.mxu0 0.0
    %651 = vmatprep.subr.mxu0 0.0
    %652 = vmatpush1.msra.mxu0 0.0
    %653 = vmatprep.subr.mxu0 0.0
    %654 = vmatpush1.msra.mxu0 0.0
    %655 = vmatprep.subr.mxu0 0.0
    %656 = vmatpush1.msra.mxu0 0.0
    %657 = vmatprep.mubr.f32.mxu0 0.0
    %658 = vmatmul.mubr.f32.gmra.mrb[0].mxu0 0.0
    %v659 = vpop.f32.mrb[0].mxu0
    %v660 = vadd.f32 0.0, %v659
    %v661 = vpop.f32.mrb[0].mxu0
    %v662 = vadd.f32 0.0, %v661
    %663 = vdwg.mxu0
    %664 = vmatprep.subr.mxu0 0.0
    %665 = vmatpush1.msra.mxu0 %v547
    %666 = vmatprep.subr.mxu0 0.0
    %667 = vmatpush1.msra.mxu0 %v550
    %668 = vmatprep.subr.mxu0 0.0
    %669 = vmatpush1.msra.mxu0 %v553
    %670 = vmatprep.subr.mxu0 0.0
    %671 = vmatpush1.msra.mxu0 %v556
    %672 = vmatprep.subr.mxu0 0.0
    %673 = vmatpush1.msra.mxu0 %v559
    %674 = vmatprep.subr.mxu0 0.0
    %675 = vmatpush1.msra.mxu0 %v562
    %676 = vmatprep.subr.mxu0 0.0
    %677 = vmatpush1.msra.mxu0 %v565
    %678 = vmatprep.subr.mxu0 0.0
    %679 = vmatpush1.msra.mxu0 %v568
    %680 = vmatprep.subr.mxu0 0.0
    %681 = vmatpush1.msra.mxu0 %v571
    %682 = vmatprep.subr.mxu0 0.0
    %683 = vmatpush1.msra.mxu0 %v574
    %684 = vmatprep.subr.mxu0 0.0
    %685 = vmatpush1.msra.mxu0 %v577
    %686 = vmatprep.subr.mxu0 0.0
    %687 = vmatpush1.msra.mxu0 %v580
    %688 = vmatprep.subr.mxu0 0.0
    %689 = vmatpush1.msra.mxu0 %v583
    %690 = vmatprep.subr.mxu0 0.0
    %691 = vmatpush1.msra.mxu0 %v586
    %692 = vmatprep.subr.mxu0 0.0
    %693 = vmatpush1.msra.mxu0 %v589
    %694 = vmatprep.subr.mxu0 0.0
    %695 = vmatpush1.msra.mxu0 %v592
    %696 = vmatprep.subr.mxu0 0.0
    %697 = vmatpush1.msra.mxu0 0.0
    %698 = vmatprep.subr.mxu0 0.0
    %699 = vmatpush1.msra.mxu0 0.0
    %700 = vmatprep.subr.mxu0 0.0
    %701 = vmatpush1.msra.mxu0 0.0
    %702 = vmatprep.subr.mxu0 0.0
    %703 = vmatpush1.msra.mxu0 0.0
    %704 = vmatprep.subr.mxu0 0.0
    %705 = vmatpush1.msra.mxu0 0.0
    %706 = vmatprep.subr.mxu0 0.0
    %707 = vmatpush1.msra.mxu0 0.0
    %708 = vmatprep.subr.mxu0 0.0
    %709 = vmatpush1.msra.mxu0 0.0
    %710 = vmatprep.subr.mxu0 0.0
    %711 = vmatpush1.msra.mxu0 0.0
    %712 = vmatprep.subr.mxu0 0.0
    %713 = vmatpush1.msra.mxu0 0.0
    %714 = vmatprep.subr.mxu0 0.0
    %715 = vmatpush1.msra.mxu0 0.0
    %716 = vmatprep.subr.mxu0 0.0
    %717 = vmatpush1.msra.mxu0 0.0
    %718 = vmatprep.subr.mxu0 0.0
    %719 = vmatpush1.msra.mxu0 0.0
    %720 = vmatprep.subr.mxu0 0.0
    %721 = vmatpush1.msra.mxu0 0.0
    %722 = vmatprep.subr.mxu0 0.0
    %723 = vmatpush1.msra.mxu0 0.0
    %724 = vmatprep.subr.mxu0 0.0
    %725 = vmatpush1.msra.mxu0 0.0
    %726 = vmatprep.subr.mxu0 0.0
    %727 = vmatpush1.msra.mxu0 0.0
    %728 = vmatprep.mubr.f32.mxu0 0.0
    %729 = vmatmul.mubr.f32.gmra.mrb[0].mxu0 0.0
    %v730 = vpop.f32.mrb[0].mxu0
    %v731 = vadd.f32 0.0, %v730
    %v732 = vpop.f32.mrb[0].mxu0
    %733 = vdwg.mxu0
    %v734 = vadd.f32 %v264, %v660
    %v735 = vadd.f32 %v266, %v662
    %v736 = vxor.u32 %v734, 2147483648
    %v737 = vxor.u32 %v735, 2147483648
    %v738 = vmul.f32 %v736, 1.442695
    %v739 = vpow.pop %v738
    %v740 = vmul.f32 %v737, 1.442695
    %v741 = vpow.pop %v740
    %v742 = vadd.f32 %v739, 1.0
    %v743 = vadd.f32 %v741, 1.0
    %v744 = vrcp.pop %v742
    %v745 = vmul.f32 1.0, %v744
    %v746 = vrcp.pop %v743
    %v747 = vmul.f32 1.0, %v746
    %v748 = vld [vmem:[#allocation7] sm:$0x1]
    %v749 = vadd.f32 %v731, %v748
    %v750 = vmul.f32 %v745, %v749
    %v751 = vadd.f32 %v335, %v750
    %v752 = vtanh.pop %v751
    %v753 = vsub.f32 1.0, %v747
    %v754 = vmul.f32 %v753, %v752
    %v755 = vmul.f32 %v747, 0.0
    %v756 = vadd.f32 %v754, %v755
    %757 = vmatprep.subr.mxu0 %v546
    %758 = vmatpush1.msra.mxu0 %v545
    %759 = vmatprep.subr.mxu0 %v549
    %760 = vmatpush1.msra.mxu0 %v548
    %761 = vmatprep.subr.mxu0 %v552
    %762 = vmatpush1.msra.mxu0 %v551
    %763 = vmatprep.subr.mxu0 %v555
    %764 = vmatpush1.msra.mxu0 %v554
    %765 = vmatprep.subr.mxu0 %v558
    %766 = vmatpush1.msra.mxu0 %v557
    %767 = vmatprep.subr.mxu0 %v561
    %768 = vmatpush1.msra.mxu0 %v560
    %769 = vmatprep.subr.mxu0 %v564
    %770 = vmatpush1.msra.mxu0 %v563
    %771 = vmatprep.subr.mxu0 %v567
    %772 = vmatpush1.msra.mxu0 %v566
    %773 = vmatprep.subr.mxu0 %v570
    %774 = vmatpush1.msra.mxu0 %v569
    %775 = vmatprep.subr.mxu0 %v573
    %776 = vmatpush1.msra.mxu0 %v572
    %777 = vmatprep.subr.mxu0 %v576
    %778 = vmatpush1.msra.mxu0 %v575
    %779 = vmatprep.subr.mxu0 %v579
    %780 = vmatpush1.msra.mxu0 %v578
    %781 = vmatprep.subr.mxu0 %v582
    %782 = vmatpush1.msra.mxu0 %v581
    %783 = vmatprep.subr.mxu0 %v585
    %784 = vmatpush1.msra.mxu0 %v584
    %785 = vmatprep.subr.mxu0 %v588
    %786 = vmatpush1.msra.mxu0 %v587
    %787 = vmatprep.subr.mxu0 %v591
    %788 = vmatpush1.msra.mxu0 %v590
    %789 = vmatprep.subr.mxu0 0.0
    %790 = vmatpush1.msra.mxu0 0.0
    %791 = vmatprep.subr.mxu0 0.0
    %792 = vmatpush1.msra.mxu0 0.0
    %793 = vmatprep.subr.mxu0 0.0
    %794 = vmatpush1.msra.mxu0 0.0
    %795 = vmatprep.subr.mxu0 0.0
    %796 = vmatpush1.msra.mxu0 0.0
    %797 = vmatprep.subr.mxu0 0.0
    %798 = vmatpush1.msra.mxu0 0.0
    %799 = vmatprep.subr.mxu0 0.0
    %800 = vmatpush1.msra.mxu0 0.0
    %801 = vmatprep.subr.mxu0 0.0
    %802 = vmatpush1.msra.mxu0 0.0
    %803 = vmatprep.subr.mxu0 0.0
    %804 = vmatpush1.msra.mxu0 0.0
    %805 = vmatprep.subr.mxu0 0.0
    %806 = vmatpush1.msra.mxu0 0.0
    %807 = vmatprep.subr.mxu0 0.0
    %808 = vmatpush1.msra.mxu0 0.0
    %809 = vmatprep.subr.mxu0 0.0
    %810 = vmatpush1.msra.mxu0 0.0
    %811 = vmatprep.subr.mxu0 0.0
    %812 = vmatpush1.msra.mxu0 0.0
    %813 = vmatprep.subr.mxu0 0.0
    %814 = vmatpush1.msra.mxu0 0.0
    %815 = vmatprep.subr.mxu0 0.0
    %816 = vmatpush1.msra.mxu0 0.0
    %817 = vmatprep.subr.mxu0 0.0
    %818 = vmatpush1.msra.mxu0 0.0
    %819 = vmatprep.subr.mxu0 0.0
    %820 = vmatpush1.msra.mxu0 0.0
    %821 = vmatprep.mubr.f32.mxu0 0.0
    %822 = vmatmul.mubr.f32.gmra.mrb[0].mxu0 %v756
    %v823 = vpop.f32.mrb[0].mxu0
    %v824 = vadd.f32 0.0, %v823
    %v825 = vpop.f32.mrb[0].mxu0
    %v826 = vadd.f32 0.0, %v825
    %827 = vdwg.mxu0
    %828 = vmatprep.subr.mxu0 0.0
    %829 = vmatpush1.msra.mxu0 %v547
    %830 = vmatprep.subr.mxu0 0.0
    %831 = vmatpush1.msra.mxu0 %v550
    %832 = vmatprep.subr.mxu0 0.0
    %833 = vmatpush1.msra.mxu0 %v553
    %834 = vmatprep.subr.mxu0 0.0
    %835 = vmatpush1.msra.mxu0 %v556
    %836 = vmatprep.subr.mxu0 0.0
    %837 = vmatpush1.msra.mxu0 %v559
    %838 = vmatprep.subr.mxu0 0.0
    %839 = vmatpush1.msra.mxu0 %v562
    %840 = vmatprep.subr.mxu0 0.0
    %841 = vmatpush1.msra.mxu0 %v565
    %842 = vmatprep.subr.mxu0 0.0
    %843 = vmatpush1.msra.mxu0 %v568
    %844 = vmatprep.subr.mxu0 0.0
    %845 = vmatpush1.msra.mxu0 %v571
    %846 = vmatprep.subr.mxu0 0.0
    %847 = vmatpush1.msra.mxu0 %v574
    %848 = vmatprep.subr.mxu0 0.0
    %849 = vmatpush1.msra.mxu0 %v577
    %850 = vmatprep.subr.mxu0 0.0
    %851 = vmatpush1.msra.mxu0 %v580
    %852 = vmatprep.subr.mxu0 0.0
    %853 = vmatpush1.msra.mxu0 %v583
    %854 = vmatprep.subr.mxu0 0.0
    %855 = vmatpush1.msra.mxu0 %v586
    %856 = vmatprep.subr.mxu0 0.0
    %857 = vmatpush1.msra.mxu0 %v589
    %858 = vmatprep.subr.mxu0 0.0
    %859 = vmatpush1.msra.mxu0 %v592
    %860 = vmatprep.subr.mxu0 0.0
    %861 = vmatpush1.msra.mxu0 0.0
    %862 = vmatprep.subr.mxu0 0.0
    %863 = vmatpush1.msra.mxu0 0.0
    %864 = vmatprep.subr.mxu0 0.0
    %865 = vmatpush1.msra.mxu0 0.0
    %866 = vmatprep.subr.mxu0 0.0
    %867 = vmatpush1.msra.mxu0 0.0
    %868 = vmatprep.subr.mxu0 0.0
    %869 = vmatpush1.msra.mxu0 0.0
    %870 = vmatprep.subr.mxu0 0.0
    %871 = vmatpush1.msra.mxu0 0.0
    %872 = vmatprep.subr.mxu0 0.0
    %873 = vmatpush1.msra.mxu0 0.0
    %874 = vmatprep.subr.mxu0 0.0
    %875 = vmatpush1.msra.mxu0 0.0
    %876 = vmatprep.subr.mxu0 0.0
    %877 = vmatpush1.msra.mxu0 0.0
    %878 = vmatprep.subr.mxu0 0.0
    %879 = vmatpush1.msra.mxu0 0.0
    %880 = vmatprep.subr.mxu0 0.0
    %881 = vmatpush1.msra.mxu0 0.0
    %882 = vmatprep.subr.mxu0 0.0
    %883 = vmatpush1.msra.mxu0 0.0
    %884 = vmatprep.subr.mxu0 0.0
    %885 = vmatpush1.msra.mxu0 0.0
    %886 = vmatprep.subr.mxu0 0.0
    %887 = vmatpush1.msra.mxu0 0.0
    %888 = vmatprep.subr.mxu0 0.0
    %889 = vmatpush1.msra.mxu0 0.0
    %890 = vmatprep.subr.mxu0 0.0
    %891 = vmatpush1.msra.mxu0 0.0
    %892 = vmatprep.mubr.f32.mxu0 0.0
    %893 = vmatmul.mubr.f32.gmra.mrb[0].mxu0 %v756
    %v894 = vpop.f32.mrb[0].mxu0
    %v895 = vadd.f32 0.0, %v894
    %v896 = vpop.f32.mrb[0].mxu0
    %897 = vdwg.mxu0
    %v900 = vrot.slane %v824, 7
    %v901 = vrot.slane %v826, 7
    %v904 = vadd.f32 %v264, %v900
    %v905 = vadd.f32 %v266, %v901
    %v906 = vxor.u32 %v904, 2147483648
    %v907 = vxor.u32 %v905, 2147483648
    %v908 = vmul.f32 %v906, 1.442695
    %v909 = vpow.pop %v908
    %v910 = vmul.f32 %v907, 1.442695
    %v911 = vpow.pop %v910
    %v912 = vadd.f32 %v909, 1.0
    %v913 = vadd.f32 %v911, 1.0
    %v914 = vrcp.pop %v912
    %v915 = vmul.f32 1.0, %v914
    %v916 = vrcp.pop %v913
    %v917 = vmul.f32 1.0, %v916
    %v918 = vadd.f32 %v895, %v748
    %v920 = vrot.slane %v918, 7
    %v922 = vmul.f32 %v915, %v920
    %v923 = vadd.f32 %v335, %v922
    %v924 = vtanh.pop %v923
    %v925 = vsub.f32 1.0, %v917
    %v926 = vmul.f32 %v925, %v924
    %v928 = vrot.slane %v756, 7
    %v930 = vmul.f32 %v917, %v928
    %v931 = vadd.f32 %v926, %v930
    %v933 = vrot.slane %v931, 1
    %935 = vmatprep.subr.mxu0 %v546
    %936 = vmatpush1.msra.mxu0 %v545
    %937 = vmatprep.subr.mxu0 %v549
    %938 = vmatpush1.msra.mxu0 %v548
    %939 = vmatprep.subr.mxu0 %v552
    %940 = vmatpush1.msra.mxu0 %v551
    %941 = vmatprep.subr.mxu0 %v555
    %942 = vmatpush1.msra.mxu0 %v554
    %943 = vmatprep.subr.mxu0 %v558
    %944 = vmatpush1.msra.mxu0 %v557
    %945 = vmatprep.subr.mxu0 %v561
    %946 = vmatpush1.msra.mxu0 %v560
    %947 = vmatprep.subr.mxu0 %v564
    %948 = vmatpush1.msra.mxu0 %v563
    %949 = vmatprep.subr.mxu0 %v567
    %950 = vmatpush1.msra.mxu0 %v566
    %951 = vmatprep.subr.mxu0 %v570
    %952 = vmatpush1.msra.mxu0 %v569
    %953 = vmatprep.subr.mxu0 %v573
    %954 = vmatpush1.msra.mxu0 %v572
    %955 = vmatprep.subr.mxu0 %v576
    %956 = vmatpush1.msra.mxu0 %v575
    %957 = vmatprep.subr.mxu0 %v579
    %958 = vmatpush1.msra.mxu0 %v578
    %959 = vmatprep.subr.mxu0 %v582
    %960 = vmatpush1.msra.mxu0 %v581
    %961 = vmatprep.subr.mxu0 %v585
    %962 = vmatpush1.msra.mxu0 %v584
    %963 = vmatprep.subr.mxu0 %v588
    %964 = vmatpush1.msra.mxu0 %v587
    %965 = vmatprep.subr.mxu0 %v591
    %966 = vmatpush1.msra.mxu0 %v590
    %967 = vmatprep.subr.mxu0 0.0
    %968 = vmatpush1.msra.mxu0 0.0
    %969 = vmatprep.subr.mxu0 0.0
    %970 = vmatpush1.msra.mxu0 0.0
    %971 = vmatprep.subr.mxu0 0.0
    %972 = vmatpush1.msra.mxu0 0.0
    %973 = vmatprep.subr.mxu0 0.0
    %974 = vmatpush1.msra.mxu0 0.0
    %975 = vmatprep.subr.mxu0 0.0
    %976 = vmatpush1.msra.mxu0 0.0
    %977 = vmatprep.subr.mxu0 0.0
    %978 = vmatpush1.msra.mxu0 0.0
    %979 = vmatprep.subr.mxu0 0.0
    %980 = vmatpush1.msra.mxu0 0.0
    %981 = vmatprep.subr.mxu0 0.0
    %982 = vmatpush1.msra.mxu0 0.0
    %983 = vmatprep.subr.mxu0 0.0
    %984 = vmatpush1.msra.mxu0 0.0
    %985 = vmatprep.subr.mxu0 0.0
    %986 = vmatpush1.msra.mxu0 0.0
    %987 = vmatprep.subr.mxu0 0.0
    %988 = vmatpush1.msra.mxu0 0.0
    %989 = vmatprep.subr.mxu0 0.0
    %990 = vmatpush1.msra.mxu0 0.0
    %991 = vmatprep.subr.mxu0 0.0
    %992 = vmatpush1.msra.mxu0 0.0
    %993 = vmatprep.subr.mxu0 0.0
    %994 = vmatpush1.msra.mxu0 0.0
    %995 = vmatprep.subr.mxu0 0.0
    %996 = vmatpush1.msra.mxu0 0.0
    %997 = vmatprep.subr.mxu0 0.0
    %998 = vmatpush1.msra.mxu0 0.0
    %999 = vmatprep.mubr.f32.mxu0 0.0
    %1000 = vmatmul.mubr.f32.gmra.mrb[0].mxu0 %v933
    %v1001 = vpop.f32.mrb[0].mxu0
    %v1002 = vadd.f32 0.0, %v1001
    %v1003 = vpop.f32.mrb[0].mxu0
    %v1004 = vadd.f32 0.0, %v1003
    %1005 = vdwg.mxu0
    %1006 = vmatprep.subr.mxu0 0.0
    %1007 = vmatpush1.msra.mxu0 %v547
    %1008 = vmatprep.subr.mxu0 0.0
    %1009 = vmatpush1.msra.mxu0 %v550
    %1010 = vmatprep.subr.mxu0 0.0
    %1011 = vmatpush1.msra.mxu0 %v553
    %1012 = vmatprep.subr.mxu0 0.0
    %1013 = vmatpush1.msra.mxu0 %v556
    %1014 = vmatprep.subr.mxu0 0.0
    %1015 = vmatpush1.msra.mxu0 %v559
    %1016 = vmatprep.subr.mxu0 0.0
    %1017 = vmatpush1.msra.mxu0 %v562
    %1018 = vmatprep.subr.mxu0 0.0
    %1019 = vmatpush1.msra.mxu0 %v565
    %1020 = vmatprep.subr.mxu0 0.0
    %1021 = vmatpush1.msra.mxu0 %v568
    %1022 = vmatprep.subr.mxu0 0.0
    %1023 = vmatpush1.msra.mxu0 %v571
    %1024 = vmatprep.subr.mxu0 0.0
    %1025 = vmatpush1.msra.mxu0 %v574
    %1026 = vmatprep.subr.mxu0 0.0
    %1027 = vmatpush1.msra.mxu0 %v577
    %1028 = vmatprep.subr.mxu0 0.0
    %1029 = vmatpush1.msra.mxu0 %v580
    %1030 = vmatprep.subr.mxu0 0.0
    %1031 = vmatpush1.msra.mxu0 %v583
    %1032 = vmatprep.subr.mxu0 0.0
    %1033 = vmatpush1.msra.mxu0 %v586
    %1034 = vmatprep.subr.mxu0 0.0
    %1035 = vmatpush1.msra.mxu0 %v589
    %1036 = vmatprep.subr.mxu0 0.0
    %1037 = vmatpush1.msra.mxu0 %v592
    %1038 = vmatprep.subr.mxu0 0.0
    %1039 = vmatpush1.msra.mxu0 0.0
    %1040 = vmatprep.subr.mxu0 0.0
    %1041 = vmatpush1.msra.mxu0 0.0
    %1042 = vmatprep.subr.mxu0 0.0
    %1043 = vmatpush1.msra.mxu0 0.0
    %1044 = vmatprep.subr.mxu0 0.0
    %1045 = vmatpush1.msra.mxu0 0.0
    %1046 = vmatprep.subr.mxu0 0.0
    %1047 = vmatpush1.msra.mxu0 0.0
    %1048 = vmatprep.subr.mxu0 0.0
    %1049 = vmatpush1.msra.mxu0 0.0
    %1050 = vmatprep.subr.mxu0 0.0
    %1051 = vmatpush1.msra.mxu0 0.0
    %1052 = vmatprep.subr.mxu0 0.0
    %1053 = vmatpush1.msra.mxu0 0.0
    %1054 = vmatprep.subr.mxu0 0.0
    %1055 = vmatpush1.msra.mxu0 0.0
    %1056 = vmatprep.subr.mxu0 0.0
    %1057 = vmatpush1.msra.mxu0 0.0
    %1058 = vmatprep.subr.mxu0 0.0
    %1059 = vmatpush1.msra.mxu0 0.0
    %1060 = vmatprep.subr.mxu0 0.0
    %1061 = vmatpush1.msra.mxu0 0.0
    %1062 = vmatprep.subr.mxu0 0.0
    %1063 = vmatpush1.msra.mxu0 0.0
    %1064 = vmatprep.subr.mxu0 0.0
    %1065 = vmatpush1.msra.mxu0 0.0
    %1066 = vmatprep.subr.mxu0 0.0
    %1067 = vmatpush1.msra.mxu0 0.0
    %1068 = vmatprep.subr.mxu0 0.0
    %1069 = vmatpush1.msra.mxu0 0.0
    %1070 = vmatprep.mubr.f32.mxu0 0.0
    %1071 = vmatmul.mubr.f32.gmra.mrb[0].mxu0 %v933
    %v1072 = vpop.f32.mrb[0].mxu0
    %v1073 = vadd.f32 0.0, %v1072
    %v1074 = vpop.f32.mrb[0].mxu0
    %1075 = vdwg.mxu0
    %v1078 = vrot.slane %v1002, 6
    %v1079 = vrot.slane %v1004, 6
    %v1082 = vadd.f32 %v264, %v1078
    %v1083 = vadd.f32 %v266, %v1079
    %v1084 = vxor.u32 %v1082, 2147483648
    %v1085 = vxor.u32 %v1083, 2147483648
    %v1086 = vmul.f32 %v1084, 1.442695
    %v1087 = vpow.pop %v1086
    %v1088 = vmul.f32 %v1085, 1.442695
    %v1089 = vpow.pop %v1088
    %v1090 = vadd.f32 %v1087, 1.0
    %v1091 = vadd.f32 %v1089, 1.0
    %v1092 = vrcp.pop %v1090
    %v1093 = vmul.f32 1.0, %v1092
    %v1094 = vrcp.pop %v1091
    %v1095 = vmul.f32 1.0, %v1094
    %v1096 = vadd.f32 %v1073, %v748
    %v1098 = vrot.slane %v1096, 6
    %v1100 = vmul.f32 %v1093, %v1098
    %v1101 = vadd.f32 %v335, %v1100
    %v1102 = vtanh.pop %v1101
    %v1103 = vsub.f32 1.0, %v1095
    %v1104 = vmul.f32 %v1103, %v1102
    %v1105 = vrot.slane %v931, 7
    %v1107 = vmul.f32 %v1095, %v1105
    %v1108 = vadd.f32 %v1104, %v1107
    %v1110 = vrot.slane %v1108, 2
    %1112 = vmatprep.subr.mxu0 %v546
    %1113 = vmatpush1.msra.mxu0 %v545
    %1114 = vmatprep.subr.mxu0 %v549
    %1115 = vmatpush1.msra.mxu0 %v548
    %1116 = vmatprep.subr.mxu0 %v552
    %1117 = vmatpush1.msra.mxu0 %v551
    %1118 = vmatprep.subr.mxu0 %v555
    %1119 = vmatpush1.msra.mxu0 %v554
    %1120 = vmatprep.subr.mxu0 %v558
    %1121 = vmatpush1.msra.mxu0 %v557
    %1122 = vmatprep.subr.mxu0 %v561
    %1123 = vmatpush1.msra.mxu0 %v560
    %1124 = vmatprep.subr.mxu0 %v564
    %1125 = vmatpush1.msra.mxu0 %v563
    %1126 = vmatprep.subr.mxu0 %v567
    %1127 = vmatpush1.msra.mxu0 %v566
    %1128 = vmatprep.subr.mxu0 %v570
    %1129 = vmatpush1.msra.mxu0 %v569
    %1130 = vmatprep.subr.mxu0 %v573
    %1131 = vmatpush1.msra.mxu0 %v572
    %1132 = vmatprep.subr.mxu0 %v576
    %1133 = vmatpush1.msra.mxu0 %v575
    %1134 = vmatprep.subr.mxu0 %v579
    %1135 = vmatpush1.msra.mxu0 %v578
    %1136 = vmatprep.subr.mxu0 %v582
    %1137 = vmatpush1.msra.mxu0 %v581
    %1138 = vmatprep.subr.mxu0 %v585
    %1139 = vmatpush1.msra.mxu0 %v584
    %1140 = vmatprep.subr.mxu0 %v588
    %1141 = vmatpush1.msra.mxu0 %v587
    %1142 = vmatprep.subr.mxu0 %v591
    %1143 = vmatpush1.msra.mxu0 %v590
    %1144 = vmatprep.subr.mxu0 0.0
    %1145 = vmatpush1.msra.mxu0 0.0
    %1146 = vmatprep.subr.mxu0 0.0
    %1147 = vmatpush1.msra.mxu0 0.0
    %1148 = vmatprep.subr.mxu0 0.0
    %1149 = vmatpush1.msra.mxu0 0.0
    %1150 = vmatprep.subr.mxu0 0.0
    %1151 = vmatpush1.msra.mxu0 0.0
    %1152 = vmatprep.subr.mxu0 0.0
    %1153 = vmatpush1.msra.mxu0 0.0
    %1154 = vmatprep.subr.mxu0 0.0
    %1155 = vmatpush1.msra.mxu0 0.0
    %1156 = vmatprep.subr.mxu0 0.0
    %1157 = vmatpush1.msra.mxu0 0.0
    %1158 = vmatprep.subr.mxu0 0.0
    %1159 = vmatpush1.msra.mxu0 0.0
    %1160 = vmatprep.subr.mxu0 0.0
    %1161 = vmatpush1.msra.mxu0 0.0
    %1162 = vmatprep.subr.mxu0 0.0
    %1163 = vmatpush1.msra.mxu0 0.0
    %1164 = vmatprep.subr.mxu0 0.0
    %1165 = vmatpush1.msra.mxu0 0.0
    %1166 = vmatprep.subr.mxu0 0.0
    %1167 = vmatpush1.msra.mxu0 0.0
    %1168 = vmatprep.subr.mxu0 0.0
    %1169 = vmatpush1.msra.mxu0 0.0
    %1170 = vmatprep.subr.mxu0 0.0
    %1171 = vmatpush1.msra.mxu0 0.0
    %1172 = vmatprep.subr.mxu0 0.0
    %1173 = vmatpush1.msra.mxu0 0.0
    %1174 = vmatprep.subr.mxu0 0.0
    %1175 = vmatpush1.msra.mxu0 0.0
    %1176 = vmatprep.mubr.f32.mxu0 0.0
    %1177 = vmatmul.mubr.f32.gmra.mrb[0].mxu0 %v1110
    %v1178 = vpop.f32.mrb[0].mxu0
    %v1179 = vadd.f32 0.0, %v1178
    %v1180 = vpop.f32.mrb[0].mxu0
    %v1181 = vadd.f32 0.0, %v1180
    %1182 = vdwg.mxu0
    %1183 = vmatprep.subr.mxu0 0.0
    %1184 = vmatpush1.msra.mxu0 %v547
    %1185 = vmatprep.subr.mxu0 0.0
    %1186 = vmatpush1.msra.mxu0 %v550
    %1187 = vmatprep.subr.mxu0 0.0
    %1188 = vmatpush1.msra.mxu0 %v553
    %1189 = vmatprep.subr.mxu0 0.0
    %1190 = vmatpush1.msra.mxu0 %v556
    %1191 = vmatprep.subr.mxu0 0.0
    %1192 = vmatpush1.msra.mxu0 %v559
    %1193 = vmatprep.subr.mxu0 0.0
    %1194 = vmatpush1.msra.mxu0 %v562
    %1195 = vmatprep.subr.mxu0 0.0
    %1196 = vmatpush1.msra.mxu0 %v565
    %1197 = vmatprep.subr.mxu0 0.0
    %1198 = vmatpush1.msra.mxu0 %v568
    %1199 = vmatprep.subr.mxu0 0.0
    %1200 = vmatpush1.msra.mxu0 %v571
    %1201 = vmatprep.subr.mxu0 0.0
    %1202 = vmatpush1.msra.mxu0 %v574
    %1203 = vmatprep.subr.mxu0 0.0
    %1204 = vmatpush1.msra.mxu0 %v577
    %1205 = vmatprep.subr.mxu0 0.0
    %1206 = vmatpush1.msra.mxu0 %v580
    %1207 = vmatprep.subr.mxu0 0.0
    %1208 = vmatpush1.msra.mxu0 %v583
    %1209 = vmatprep.subr.mxu0 0.0
    %1210 = vmatpush1.msra.mxu0 %v586
    %1211 = vmatprep.subr.mxu0 0.0
    %1212 = vmatpush1.msra.mxu0 %v589
    %1213 = vmatprep.subr.mxu0 0.0
    %1214 = vmatpush1.msra.mxu0 %v592
    %1215 = vmatprep.subr.mxu0 0.0
    %1216 = vmatpush1.msra.mxu0 0.0
    %1217 = vmatprep.subr.mxu0 0.0
    %1218 = vmatpush1.msra.mxu0 0.0
    %1219 = vmatprep.subr.mxu0 0.0
    %1220 = vmatpush1.msra.mxu0 0.0
    %1221 = vmatprep.subr.mxu0 0.0
    %1222 = vmatpush1.msra.mxu0 0.0
    %1223 = vmatprep.subr.mxu0 0.0
    %1224 = vmatpush1.msra.mxu0 0.0
    %1225 = vmatprep.subr.mxu0 0.0
    %1226 = vmatpush1.msra.mxu0 0.0
    %1227 = vmatprep.subr.mxu0 0.0
    %1228 = vmatpush1.msra.mxu0 0.0
    %1229 = vmatprep.subr.mxu0 0.0
    %1230 = vmatpush1.msra.mxu0 0.0
    %1231 = vmatprep.subr.mxu0 0.0
    %1232 = vmatpush1.msra.mxu0 0.0
    %1233 = vmatprep.subr.mxu0 0.0
    %1234 = vmatpush1.msra.mxu0 0.0
    %1235 = vmatprep.subr.mxu0 0.0
    %1236 = vmatpush1.msra.mxu0 0.0
    %1237 = vmatprep.subr.mxu0 0.0
    %1238 = vmatpush1.msra.mxu0 0.0
    %1239 = vmatprep.subr.mxu0 0.0
    %1240 = vmatpush1.msra.mxu0 0.0
    %1241 = vmatprep.subr.mxu0 0.0
    %1242 = vmatpush1.msra.mxu0 0.0
    %1243 = vmatprep.subr.mxu0 0.0
    %1244 = vmatpush1.msra.mxu0 0.0
    %1245 = vmatprep.subr.mxu0 0.0
    %1246 = vmatpush1.msra.mxu0 0.0
    %1247 = vmatprep.mubr.f32.mxu0 0.0
    %1248 = vmatmul.mubr.f32.gmra.mrb[0].mxu0 %v1110
    %v1249 = vpop.f32.mrb[0].mxu0
    %v1250 = vadd.f32 0.0, %v1249
    %v1251 = vpop.f32.mrb[0].mxu0
    %1252 = vdwg.mxu0
    %v1255 = vrot.slane %v1179, 5
    %v1256 = vrot.slane %v1181, 5
    %v1259 = vadd.f32 %v264, %v1255
    %v1260 = vadd.f32 %v266, %v1256
    %v1261 = vxor.u32 %v1259, 2147483648
    %v1262 = vxor.u32 %v1260, 2147483648
    %v1263 = vmul.f32 %v1261, 1.442695
    %v1264 = vpow.pop %v1263
    %v1265 = vmul.f32 %v1262, 1.442695
    %v1266 = vpow.pop %v1265
    %v1267 = vadd.f32 %v1264, 1.0
    %v1268 = vadd.f32 %v1266, 1.0
    %v1269 = vrcp.pop %v1267
    %v1270 = vmul.f32 1.0, %v1269
    %v1271 = vrcp.pop %v1268
    %v1272 = vmul.f32 1.0, %v1271
    %v1273 = vadd.f32 %v1250, %v748
    %v1275 = vrot.slane %v1273, 5
    %v1277 = vmul.f32 %v1270, %v1275
    %v1278 = vadd.f32 %v335, %v1277
    %v1279 = vtanh.pop %v1278
    %v1280 = vsub.f32 1.0, %v1272
    %v1281 = vmul.f32 %v1280, %v1279
    %v1282 = vrot.slane %v1108, 7
    %v1284 = vmul.f32 %v1272, %v1282
    %v1285 = vadd.f32 %v1281, %v1284
    %v1287 = vrot.slane %v1285, 3
    %1289 = vmatprep.subr.mxu0 %v546
    %1290 = vmatpush1.msra.mxu0 %v545
    %1291 = vmatprep.subr.mxu0 %v549
    %1292 = vmatpush1.msra.mxu0 %v548
    %1293 = vmatprep.subr.mxu0 %v552
    %1294 = vmatpush1.msra.mxu0 %v551
    %1295 = vmatprep.subr.mxu0 %v555
    %1296 = vmatpush1.msra.mxu0 %v554
    %1297 = vmatprep.subr.mxu0 %v558
    %1298 = vmatpush1.msra.mxu0 %v557
    %1299 = vmatprep.subr.mxu0 %v561
    %1300 = vmatpush1.msra.mxu0 %v560
    %1301 = vmatprep.subr.mxu0 %v564
    %1302 = vmatpush1.msra.mxu0 %v563
    %1303 = vmatprep.subr.mxu0 %v567
    %1304 = vmatpush1.msra.mxu0 %v566
    %1305 = vmatprep.subr.mxu0 %v570
    %1306 = vmatpush1.msra.mxu0 %v569
    %1307 = vmatprep.subr.mxu0 %v573
    %1308 = vmatpush1.msra.mxu0 %v572
    %1309 = vmatprep.subr.mxu0 %v576
    %1310 = vmatpush1.msra.mxu0 %v575
    %1311 = vmatprep.subr.mxu0 %v579
    %1312 = vmatpush1.msra.mxu0 %v578
    %1313 = vmatprep.subr.mxu0 %v582
    %1314 = vmatpush1.msra.mxu0 %v581
    %1315 = vmatprep.subr.mxu0 %v585
    %1316 = vmatpush1.msra.mxu0 %v584
    %1317 = vmatprep.subr.mxu0 %v588
    %1318 = vmatpush1.msra.mxu0 %v587
    %1319 = vmatprep.subr.mxu0 %v591
    %1320 = vmatpush1.msra.mxu0 %v590
    %1321 = vmatprep.subr.mxu0 0.0
    %1322 = vmatpush1.msra.mxu0 0.0
    %1323 = vmatprep.subr.mxu0 0.0
    %1324 = vmatpush1.msra.mxu0 0.0
    %1325 = vmatprep.subr.mxu0 0.0
    %1326 = vmatpush1.msra.mxu0 0.0
    %1327 = vmatprep.subr.mxu0 0.0
    %1328 = vmatpush1.msra.mxu0 0.0
    %1329 = vmatprep.subr.mxu0 0.0
    %1330 = vmatpush1.msra.mxu0 0.0
    %1331 = vmatprep.subr.mxu0 0.0
    %1332 = vmatpush1.msra.mxu0 0.0
    %1333 = vmatprep.subr.mxu0 0.0
    %1334 = vmatpush1.msra.mxu0 0.0
    %1335 = vmatprep.subr.mxu0 0.0
    %1336 = vmatpush1.msra.mxu0 0.0
    %1337 = vmatprep.subr.mxu0 0.0
    %1338 = vmatpush1.msra.mxu0 0.0
    %1339 = vmatprep.subr.mxu0 0.0
    %1340 = vmatpush1.msra.mxu0 0.0
    %1341 = vmatprep.subr.mxu0 0.0
    %1342 = vmatpush1.msra.mxu0 0.0
    %1343 = vmatprep.subr.mxu0 0.0
    %1344 = vmatpush1.msra.mxu0 0.0
    %1345 = vmatprep.subr.mxu0 0.0
    %1346 = vmatpush1.msra.mxu0 0.0
    %1347 = vmatprep.subr.mxu0 0.0
    %1348 = vmatpush1.msra.mxu0 0.0
    %1349 = vmatprep.subr.mxu0 0.0
    %1350 = vmatpush1.msra.mxu0 0.0
    %1351 = vmatprep.subr.mxu0 0.0
    %1352 = vmatpush1.msra.mxu0 0.0
    %1353 = vmatprep.mubr.f32.mxu0 0.0
    %1354 = vmatmul.mubr.f32.gmra.mrb[0].mxu0 %v1287
    %v1355 = vpop.f32.mrb[0].mxu0
    %v1356 = vadd.f32 0.0, %v1355
    %v1357 = vpop.f32.mrb[0].mxu0
    %v1358 = vadd.f32 0.0, %v1357
    %1359 = vdwg.mxu0
    %1360 = vmatprep.subr.mxu0 0.0
    %1361 = vmatpush1.msra.mxu0 %v547
    %1362 = vmatprep.subr.mxu0 0.0
    %1363 = vmatpush1.msra.mxu0 %v550
    %1364 = vmatprep.subr.mxu0 0.0
    %1365 = vmatpush1.msra.mxu0 %v553
    %1366 = vmatprep.subr.mxu0 0.0
    %1367 = vmatpush1.msra.mxu0 %v556
    %1368 = vmatprep.subr.mxu0 0.0
    %1369 = vmatpush1.msra.mxu0 %v559
    %1370 = vmatprep.subr.mxu0 0.0
    %1371 = vmatpush1.msra.mxu0 %v562
    %1372 = vmatprep.subr.mxu0 0.0
    %1373 = vmatpush1.msra.mxu0 %v565
    %1374 = vmatprep.subr.mxu0 0.0
    %1375 = vmatpush1.msra.mxu0 %v568
    %1376 = vmatprep.subr.mxu0 0.0
    %1377 = vmatpush1.msra.mxu0 %v571
    %1378 = vmatprep.subr.mxu0 0.0
    %1379 = vmatpush1.msra.mxu0 %v574
    %1380 = vmatprep.subr.mxu0 0.0
    %1381 = vmatpush1.msra.mxu0 %v577
    %1382 = vmatprep.subr.mxu0 0.0
    %1383 = vmatpush1.msra.mxu0 %v580
    %1384 = vmatprep.subr.mxu0 0.0
    %1385 = vmatpush1.msra.mxu0 %v583
    %1386 = vmatprep.subr.mxu0 0.0
    %1387 = vmatpush1.msra.mxu0 %v586
    %1388 = vmatprep.subr.mxu0 0.0
    %1389 = vmatpush1.msra.mxu0 %v589
    %1390 = vmatprep.subr.mxu0 0.0
    %1391 = vmatpush1.msra.mxu0 %v592
    %1392 = vmatprep.subr.mxu0 0.0
    %1393 = vmatpush1.msra.mxu0 0.0
    %1394 = vmatprep.subr.mxu0 0.0
    %1395 = vmatpush1.msra.mxu0 0.0
    %1396 = vmatprep.subr.mxu0 0.0
    %1397 = vmatpush1.msra.mxu0 0.0
    %1398 = vmatprep.subr.mxu0 0.0
    %1399 = vmatpush1.msra.mxu0 0.0
    %1400 = vmatprep.subr.mxu0 0.0
    %1401 = vmatpush1.msra.mxu0 0.0
    %1402 = vmatprep.subr.mxu0 0.0
    %1403 = vmatpush1.msra.mxu0 0.0
    %1404 = vmatprep.subr.mxu0 0.0
    %1405 = vmatpush1.msra.mxu0 0.0
    %1406 = vmatprep.subr.mxu0 0.0
    %1407 = vmatpush1.msra.mxu0 0.0
    %1408 = vmatprep.subr.mxu0 0.0
    %1409 = vmatpush1.msra.mxu0 0.0
    %1410 = vmatprep.subr.mxu0 0.0
    %1411 = vmatpush1.msra.mxu0 0.0
    %1412 = vmatprep.subr.mxu0 0.0
    %1413 = vmatpush1.msra.mxu0 0.0
    %1414 = vmatprep.subr.mxu0 0.0
    %1415 = vmatpush1.msra.mxu0 0.0
    %1416 = vmatprep.subr.mxu0 0.0
    %1417 = vmatpush1.msra.mxu0 0.0
    %1418 = vmatprep.subr.mxu0 0.0
    %1419 = vmatpush1.msra.mxu0 0.0
    %1420 = vmatprep.subr.mxu0 0.0
    %1421 = vmatpush1.msra.mxu0 0.0
    %1422 = vmatprep.subr.mxu0 0.0
    %1423 = vmatpush1.msra.mxu0 0.0
    %1424 = vmatprep.mubr.f32.mxu0 0.0
    %1425 = vmatmul.mubr.f32.gmra.mrb[0].mxu0 %v1287
    %v1426 = vpop.f32.mrb[0].mxu0
    %v1427 = vadd.f32 0.0, %v1426
    %v1428 = vpop.f32.mrb[0].mxu0
    %1429 = vdwg.mxu0
    %v1432 = vrot.slane %v1356, 4
    %v1433 = vrot.slane %v1358, 4
    %v1436 = vadd.f32 %v264, %v1432
    %v1437 = vadd.f32 %v266, %v1433
    %v1438 = vxor.u32 %v1436, 2147483648
    %v1439 = vxor.u32 %v1437, 2147483648
    %v1440 = vmul.f32 %v1438, 1.442695
    %v1441 = vpow.pop %v1440
    %v1442 = vmul.f32 %v1439, 1.442695
    %v1443 = vpow.pop %v1442
    %v1444 = vadd.f32 %v1441, 1.0
    %v1445 = vadd.f32 %v1443, 1.0
    %v1446 = vrcp.pop %v1444
    %v1447 = vmul.f32 1.0, %v1446
    %v1448 = vrcp.pop %v1445
    %v1449 = vmul.f32 1.0, %v1448
    %v1450 = vadd.f32 %v1427, %v748
    %v1452 = vrot.slane %v1450, 4
    %v1454 = vmul.f32 %v1447, %v1452
    %v1455 = vadd.f32 %v335, %v1454
    %v1456 = vtanh.pop %v1455
    %v1457 = vsub.f32 1.0, %v1449
    %v1458 = vmul.f32 %v1457, %v1456
    %v1459 = vrot.slane %v1285, 7
    %v1461 = vmul.f32 %v1449, %v1459
    %v1462 = vadd.f32 %v1458, %v1461
    %v1464 = vrot.slane %v1462, 4
    %1466 = vmatprep.subr.mxu0 %v546
    %1467 = vmatpush1.msra.mxu0 %v545
    %1468 = vmatprep.subr.mxu0 %v549
    %1469 = vmatpush1.msra.mxu0 %v548
    %1470 = vmatprep.subr.mxu0 %v552
    %1471 = vmatpush1.msra.mxu0 %v551
    %1472 = vmatprep.subr.mxu0 %v555
    %1473 = vmatpush1.msra.mxu0 %v554
    %1474 = vmatprep.subr.mxu0 %v558
    %1475 = vmatpush1.msra.mxu0 %v557
    %1476 = vmatprep.subr.mxu0 %v561
    %1477 = vmatpush1.msra.mxu0 %v560
    %1478 = vmatprep.subr.mxu0 %v564
    %1479 = vmatpush1.msra.mxu0 %v563
    %1480 = vmatprep.subr.mxu0 %v567
    %1481 = vmatpush1.msra.mxu0 %v566
    %1482 = vmatprep.subr.mxu0 %v570
    %1483 = vmatpush1.msra.mxu0 %v569
    %1484 = vmatprep.subr.mxu0 %v573
    %1485 = vmatpush1.msra.mxu0 %v572
    %1486 = vmatprep.subr.mxu0 %v576
    %1487 = vmatpush1.msra.mxu0 %v575
    %1488 = vmatprep.subr.mxu0 %v579
    %1489 = vmatpush1.msra.mxu0 %v578
    %1490 = vmatprep.subr.mxu0 %v582
    %1491 = vmatpush1.msra.mxu0 %v581
    %1492 = vmatprep.subr.mxu0 %v585
    %1493 = vmatpush1.msra.mxu0 %v584
    %1494 = vmatprep.subr.mxu0 %v588
    %1495 = vmatpush1.msra.mxu0 %v587
    %1496 = vmatprep.subr.mxu0 %v591
    %1497 = vmatpush1.msra.mxu0 %v590
    %1498 = vmatprep.subr.mxu0 0.0
    %1499 = vmatpush1.msra.mxu0 0.0
    %1500 = vmatprep.subr.mxu0 0.0
    %1501 = vmatpush1.msra.mxu0 0.0
    %1502 = vmatprep.subr.mxu0 0.0
    %1503 = vmatpush1.msra.mxu0 0.0
    %1504 = vmatprep.subr.mxu0 0.0
    %1505 = vmatpush1.msra.mxu0 0.0
    %1506 = vmatprep.subr.mxu0 0.0
    %1507 = vmatpush1.msra.mxu0 0.0
    %1508 = vmatprep.subr.mxu0 0.0
    %1509 = vmatpush1.msra.mxu0 0.0
    %1510 = vmatprep.subr.mxu0 0.0
    %1511 = vmatpush1.msra.mxu0 0.0
    %1512 = vmatprep.subr.mxu0 0.0
    %1513 = vmatpush1.msra.mxu0 0.0
    %1514 = vmatprep.subr.mxu0 0.0
    %1515 = vmatpush1.msra.mxu0 0.0
    %1516 = vmatprep.subr.mxu0 0.0
    %1517 = vmatpush1.msra.mxu0 0.0
    %1518 = vmatprep.subr.mxu0 0.0
    %1519 = vmatpush1.msra.mxu0 0.0
    %1520 = vmatprep.subr.mxu0 0.0
    %1521 = vmatpush1.msra.mxu0 0.0
    %1522 = vmatprep.subr.mxu0 0.0
    %1523 = vmatpush1.msra.mxu0 0.0
    %1524 = vmatprep.subr.mxu0 0.0
    %1525 = vmatpush1.msra.mxu0 0.0
    %1526 = vmatprep.subr.mxu0 0.0
    %1527 = vmatpush1.msra.mxu0 0.0
    %1528 = vmatprep.subr.mxu0 0.0
    %1529 = vmatpush1.msra.mxu0 0.0
    %1530 = vmatprep.mubr.f32.mxu0 0.0
    %1531 = vmatmul.mubr.f32.gmra.mrb[0].mxu0 %v1464
    %v1532 = vpop.f32.mrb[0].mxu0
    %v1533 = vadd.f32 0.0, %v1532
    %v1534 = vpop.f32.mrb[0].mxu0
    %v1535 = vadd.f32 0.0, %v1534
    %1536 = vdwg.mxu0
    %1537 = vmatprep.subr.mxu0 0.0
    %1538 = vmatpush1.msra.mxu0 %v547
    %1539 = vmatprep.subr.mxu0 0.0
    %1540 = vmatpush1.msra.mxu0 %v550
    %1541 = vmatprep.subr.mxu0 0.0
    %1542 = vmatpush1.msra.mxu0 %v553
    %1543 = vmatprep.subr.mxu0 0.0
    %1544 = vmatpush1.msra.mxu0 %v556
    %1545 = vmatprep.subr.mxu0 0.0
    %1546 = vmatpush1.msra.mxu0 %v559
    %1547 = vmatprep.subr.mxu0 0.0
    %1548 = vmatpush1.msra.mxu0 %v562
    %1549 = vmatprep.subr.mxu0 0.0
    %1550 = vmatpush1.msra.mxu0 %v565
    %1551 = vmatprep.subr.mxu0 0.0
    %1552 = vmatpush1.msra.mxu0 %v568
    %1553 = vmatprep.subr.mxu0 0.0
    %1554 = vmatpush1.msra.mxu0 %v571
    %1555 = vmatprep.subr.mxu0 0.0
    %1556 = vmatpush1.msra.mxu0 %v574
    %1557 = vmatprep.subr.mxu0 0.0
    %1558 = vmatpush1.msra.mxu0 %v577
    %1559 = vmatprep.subr.mxu0 0.0
    %1560 = vmatpush1.msra.mxu0 %v580
    %1561 = vmatprep.subr.mxu0 0.0
    %1562 = vmatpush1.msra.mxu0 %v583
    %1563 = vmatprep.subr.mxu0 0.0
    %1564 = vmatpush1.msra.mxu0 %v586
    %1565 = vmatprep.subr.mxu0 0.0
    %1566 = vmatpush1.msra.mxu0 %v589
    %1567 = vmatprep.subr.mxu0 0.0
    %1568 = vmatpush1.msra.mxu0 %v592
    %1569 = vmatprep.subr.mxu0 0.0
    %1570 = vmatpush1.msra.mxu0 0.0
    %1571 = vmatprep.subr.mxu0 0.0
    %1572 = vmatpush1.msra.mxu0 0.0
    %1573 = vmatprep.subr.mxu0 0.0
    %1574 = vmatpush1.msra.mxu0 0.0
    %1575 = vmatprep.subr.mxu0 0.0
    %1576 = vmatpush1.msra.mxu0 0.0
    %1577 = vmatprep.subr.mxu0 0.0
    %1578 = vmatpush1.msra.mxu0 0.0
    %1579 = vmatprep.subr.mxu0 0.0
    %1580 = vmatpush1.msra.mxu0 0.0
    %1581 = vmatprep.subr.mxu0 0.0
    %1582 = vmatpush1.msra.mxu0 0.0
    %1583 = vmatprep.subr.mxu0 0.0
    %1584 = vmatpush1.msra.mxu0 0.0
    %1585 = vmatprep.subr.mxu0 0.0
    %1586 = vmatpush1.msra.mxu0 0.0
    %1587 = vmatprep.subr.mxu0 0.0
    %1588 = vmatpush1.msra.mxu0 0.0
    %1589 = vmatprep.subr.mxu0 0.0
    %1590 = vmatpush1.msra.mxu0 0.0
    %1591 = vmatprep.subr.mxu0 0.0
    %1592 = vmatpush1.msra.mxu0 0.0
    %1593 = vmatprep.subr.mxu0 0.0
    %1594 = vmatpush1.msra.mxu0 0.0
    %1595 = vmatprep.subr.mxu0 0.0
    %1596 = vmatpush1.msra.mxu0 0.0
    %1597 = vmatprep.subr.mxu0 0.0
    %1598 = vmatpush1.msra.mxu0 0.0
    %1599 = vmatprep.subr.mxu0 0.0
    %1600 = vmatpush1.msra.mxu0 0.0
    %1601 = vmatprep.mubr.f32.mxu0 0.0
    %1602 = vmatmul.mubr.f32.gmra.mrb[0].mxu0 %v1464
    %v1603 = vpop.f32.mrb[0].mxu0
    %v1604 = vadd.f32 0.0, %v1603
    %v1605 = vpop.f32.mrb[0].mxu0
    %1606 = vdwg.mxu0
    %v1609 = vrot.slane %v1533, 3
    %v1610 = vrot.slane %v1535, 3
    %v1613 = vadd.f32 %v264, %v1609
    %v1614 = vadd.f32 %v266, %v1610
    %v1615 = vxor.u32 %v1613, 2147483648
    %v1616 = vxor.u32 %v1614, 2147483648
    %v1617 = vmul.f32 %v1615, 1.442695
    %v1618 = vpow.pop %v1617
    %v1619 = vmul.f32 %v1616, 1.442695
    %v1620 = vpow.pop %v1619
    %v1621 = vadd.f32 %v1618, 1.0
    %v1622 = vadd.f32 %v1620, 1.0
    %v1623 = vrcp.pop %v1621
    %v1624 = vmul.f32 1.0, %v1623
    %v1625 = vrcp.pop %v1622
    %v1626 = vmul.f32 1.0, %v1625
    %v1627 = vadd.f32 %v1604, %v748
    %v1629 = vrot.slane %v1627, 3
    %v1631 = vmul.f32 %v1624, %v1629
    %v1632 = vadd.f32 %v335, %v1631
    %v1633 = vtanh.pop %v1632
    %v1634 = vsub.f32 1.0, %v1626
    %v1635 = vmul.f32 %v1634, %v1633
    %v1636 = vrot.slane %v1462, 7
    %v1638 = vmul.f32 %v1626, %v1636
    %v1639 = vadd.f32 %v1635, %v1638
    %v1641 = vrot.slane %v1639, 5
    %1643 = vmatprep.subr.mxu0 %v546
    %1644 = vmatpush1.msra.mxu0 %v545
    %1645 = vmatprep.subr.mxu0 %v549
    %1646 = vmatpush1.msra.mxu0 %v548
    %1647 = vmatprep.subr.mxu0 %v552
    %1648 = vmatpush1.msra.mxu0 %v551
    %1649 = vmatprep.subr.mxu0 %v555
    %1650 = vmatpush1.msra.mxu0 %v554
    %1651 = vmatprep.subr.mxu0 %v558
    %1652 = vmatpush1.msra.mxu0 %v557
    %1653 = vmatprep.subr.mxu0 %v561
    %1654 = vmatpush1.msra.mxu0 %v560
    %1655 = vmatprep.subr.mxu0 %v564
    %1656 = vmatpush1.msra.mxu0 %v563
    %1657 = vmatprep.subr.mxu0 %v567
    %1658 = vmatpush1.msra.mxu0 %v566
    %1659 = vmatprep.subr.mxu0 %v570
    %1660 = vmatpush1.msra.mxu0 %v569
    %1661 = vmatprep.subr.mxu0 %v573
    %1662 = vmatpush1.msra.mxu0 %v572
    %1663 = vmatprep.subr.mxu0 %v576
    %1664 = vmatpush1.msra.mxu0 %v575
    %1665 = vmatprep.subr.mxu0 %v579
    %1666 = vmatpush1.msra.mxu0 %v578
    %1667 = vmatprep.subr.mxu0 %v582
    %1668 = vmatpush1.msra.mxu0 %v581
    %1669 = vmatprep.subr.mxu0 %v585
    %1670 = vmatpush1.msra.mxu0 %v584
    %1671 = vmatprep.subr.mxu0 %v588
    %1672 = vmatpush1.msra.mxu0 %v587
    %1673 = vmatprep.subr.mxu0 %v591
    %1674 = vmatpush1.msra.mxu0 %v590
    %1675 = vmatprep.subr.mxu0 0.0
    %1676 = vmatpush1.msra.mxu0 0.0
    %1677 = vmatprep.subr.mxu0 0.0
    %1678 = vmatpush1.msra.mxu0 0.0
    %1679 = vmatprep.subr.mxu0 0.0
    %1680 = vmatpush1.msra.mxu0 0.0
    %1681 = vmatprep.subr.mxu0 0.0
    %1682 = vmatpush1.msra.mxu0 0.0
    %1683 = vmatprep.subr.mxu0 0.0
    %1684 = vmatpush1.msra.mxu0 0.0
    %1685 = vmatprep.subr.mxu0 0.0
    %1686 = vmatpush1.msra.mxu0 0.0
    %1687 = vmatprep.subr.mxu0 0.0
    %1688 = vmatpush1.msra.mxu0 0.0
    %1689 = vmatprep.subr.mxu0 0.0
    %1690 = vmatpush1.msra.mxu0 0.0
    %1691 = vmatprep.subr.mxu0 0.0
    %1692 = vmatpush1.msra.mxu0 0.0
    %1693 = vmatprep.subr.mxu0 0.0
    %1694 = vmatpush1.msra.mxu0 0.0
    %1695 = vmatprep.subr.mxu0 0.0
    %1696 = vmatpush1.msra.mxu0 0.0
    %1697 = vmatprep.subr.mxu0 0.0
    %1698 = vmatpush1.msra.mxu0 0.0
    %1699 = vmatprep.subr.mxu0 0.0
    %1700 = vmatpush1.msra.mxu0 0.0
    %1701 = vmatprep.subr.mxu0 0.0
    %1702 = vmatpush1.msra.mxu0 0.0
    %1703 = vmatprep.subr.mxu0 0.0
    %1704 = vmatpush1.msra.mxu0 0.0
    %1705 = vmatprep.subr.mxu0 0.0
    %1706 = vmatpush1.msra.mxu0 0.0
    %1707 = vmatprep.mubr.f32.mxu0 0.0
    %1708 = vmatmul.mubr.f32.gmra.mrb[0].mxu0 %v1641
    %v1709 = vpop.f32.mrb[0].mxu0
    %v1710 = vadd.f32 0.0, %v1709
    %v1711 = vpop.f32.mrb[0].mxu0
    %v1712 = vadd.f32 0.0, %v1711
    %1713 = vdwg.mxu0
    %1714 = vmatprep.subr.mxu0 0.0
    %1715 = vmatpush1.msra.mxu0 %v547
    %1716 = vmatprep.subr.mxu0 0.0
    %1717 = vmatpush1.msra.mxu0 %v550
    %1718 = vmatprep.subr.mxu0 0.0
    %1719 = vmatpush1.msra.mxu0 %v553
    %1720 = vmatprep.subr.mxu0 0.0
    %1721 = vmatpush1.msra.mxu0 %v556
    %1722 = vmatprep.subr.mxu0 0.0
    %1723 = vmatpush1.msra.mxu0 %v559
    %1724 = vmatprep.subr.mxu0 0.0
    %1725 = vmatpush1.msra.mxu0 %v562
    %1726 = vmatprep.subr.mxu0 0.0
    %1727 = vmatpush1.msra.mxu0 %v565
    %1728 = vmatprep.subr.mxu0 0.0
    %1729 = vmatpush1.msra.mxu0 %v568
    %1730 = vmatprep.subr.mxu0 0.0
    %1731 = vmatpush1.msra.mxu0 %v571
    %1732 = vmatprep.subr.mxu0 0.0
    %1733 = vmatpush1.msra.mxu0 %v574
    %1734 = vmatprep.subr.mxu0 0.0
    %1735 = vmatpush1.msra.mxu0 %v577
    %1736 = vmatprep.subr.mxu0 0.0
    %1737 = vmatpush1.msra.mxu0 %v580
    %1738 = vmatprep.subr.mxu0 0.0
    %1739 = vmatpush1.msra.mxu0 %v583
    %1740 = vmatprep.subr.mxu0 0.0
    %1741 = vmatpush1.msra.mxu0 %v586
    %1742 = vmatprep.subr.mxu0 0.0
    %1743 = vmatpush1.msra.mxu0 %v589
    %1744 = vmatprep.subr.mxu0 0.0
    %1745 = vmatpush1.msra.mxu0 %v592
    %1746 = vmatprep.subr.mxu0 0.0
    %1747 = vmatpush1.msra.mxu0 0.0
    %1748 = vmatprep.subr.mxu0 0.0
    %1749 = vmatpush1.msra.mxu0 0.0
    %1750 = vmatprep.subr.mxu0 0.0
    %1751 = vmatpush1.msra.mxu0 0.0
    %1752 = vmatprep.subr.mxu0 0.0
    %1753 = vmatpush1.msra.mxu0 0.0
    %1754 = vmatprep.subr.mxu0 0.0
    %1755 = vmatpush1.msra.mxu0 0.0
    %1756 = vmatprep.subr.mxu0 0.0
    %1757 = vmatpush1.msra.mxu0 0.0
    %1758 = vmatprep.subr.mxu0 0.0
    %1759 = vmatpush1.msra.mxu0 0.0
    %1760 = vmatprep.subr.mxu0 0.0
    %1761 = vmatpush1.msra.mxu0 0.0
    %1762 = vmatprep.subr.mxu0 0.0
    %1763 = vmatpush1.msra.mxu0 0.0
    %1764 = vmatprep.subr.mxu0 0.0
    %1765 = vmatpush1.msra.mxu0 0.0
    %1766 = vmatprep.subr.mxu0 0.0
    %1767 = vmatpush1.msra.mxu0 0.0
    %1768 = vmatprep.subr.mxu0 0.0
    %1769 = vmatpush1.msra.mxu0 0.0
    %1770 = vmatprep.subr.mxu0 0.0
    %1771 = vmatpush1.msra.mxu0 0.0
    %1772 = vmatprep.subr.mxu0 0.0
    %1773 = vmatpush1.msra.mxu0 0.0
    %1774 = vmatprep.subr.mxu0 0.0
    %1775 = vmatpush1.msra.mxu0 0.0
    %1776 = vmatprep.subr.mxu0 0.0
    %1777 = vmatpush1.msra.mxu0 0.0
    %1778 = vmatprep.mubr.f32.mxu0 0.0
    %1779 = vmatmul.mubr.f32.gmra.mrb[0].mxu0 %v1641
    %v1780 = vpop.f32.mrb[0].mxu0
    %v1781 = vadd.f32 0.0, %v1780
    %v1782 = vpop.f32.mrb[0].mxu0
    %1783 = vdwg.mxu0
    %v1786 = vrot.slane %v1710, 2
    %v1787 = vrot.slane %v1712, 2
    %v1790 = vadd.f32 %v264, %v1786
    %v1791 = vadd.f32 %v266, %v1787
    %v1792 = vxor.u32 %v1790, 2147483648
    %v1793 = vxor.u32 %v1791, 2147483648
    %v1794 = vmul.f32 %v1792, 1.442695
    %v1795 = vpow.pop %v1794
    %v1796 = vmul.f32 %v1793, 1.442695
    %v1797 = vpow.pop %v1796
    %v1798 = vadd.f32 %v1795, 1.0
    %v1799 = vadd.f32 %v1797, 1.0
    %v1800 = vrcp.pop %v1798
    %v1801 = vmul.f32 1.0, %v1800
    %v1802 = vrcp.pop %v1799
    %v1803 = vmul.f32 1.0, %v1802
    %v1804 = vadd.f32 %v1781, %v748
    %v1806 = vrot.slane %v1804, 2
    %v1808 = vmul.f32 %v1801, %v1806
    %v1809 = vadd.f32 %v335, %v1808
    %v1810 = vtanh.pop %v1809
    %v1811 = vsub.f32 1.0, %v1803
    %v1812 = vmul.f32 %v1811, %v1810
    %v1813 = vrot.slane %v1639, 7
    %v1815 = vmul.f32 %v1803, %v1813
    %v1816 = vadd.f32 %v1812, %v1815
    %v1818 = vrot.slane %v1816, 6
    %1820 = vmatprep.subr.mxu0 %v546
    %1821 = vmatpush1.msra.mxu0 %v545
    %1822 = vmatprep.subr.mxu0 %v549
    %1823 = vmatpush1.msra.mxu0 %v548
    %1824 = vmatprep.subr.mxu0 %v552
    %1825 = vmatpush1.msra.mxu0 %v551
    %1826 = vmatprep.subr.mxu0 %v555
    %1827 = vmatpush1.msra.mxu0 %v554
    %1828 = vmatprep.subr.mxu0 %v558
    %1829 = vmatpush1.msra.mxu0 %v557
    %1830 = vmatprep.subr.mxu0 %v561
    %1831 = vmatpush1.msra.mxu0 %v560
    %1832 = vmatprep.subr.mxu0 %v564
    %1833 = vmatpush1.msra.mxu0 %v563
    %1834 = vmatprep.subr.mxu0 %v567
    %1835 = vmatpush1.msra.mxu0 %v566
    %1836 = vmatprep.subr.mxu0 %v570
    %1837 = vmatpush1.msra.mxu0 %v569
    %1838 = vmatprep.subr.mxu0 %v573
    %1839 = vmatpush1.msra.mxu0 %v572
    %1840 = vmatprep.subr.mxu0 %v576
    %1841 = vmatpush1.msra.mxu0 %v575
    %1842 = vmatprep.subr.mxu0 %v579
    %1843 = vmatpush1.msra.mxu0 %v578
    %1844 = vmatprep.subr.mxu0 %v582
    %1845 = vmatpush1.msra.mxu0 %v581
    %1846 = vmatprep.subr.mxu0 %v585
    %1847 = vmatpush1.msra.mxu0 %v584
    %1848 = vmatprep.subr.mxu0 %v588
    %1849 = vmatpush1.msra.mxu0 %v587
    %1850 = vmatprep.subr.mxu0 %v591
    %1851 = vmatpush1.msra.mxu0 %v590
    %1852 = vmatprep.subr.mxu0 0.0
    %1853 = vmatpush1.msra.mxu0 0.0
    %1854 = vmatprep.subr.mxu0 0.0
    %1855 = vmatpush1.msra.mxu0 0.0
    %1856 = vmatprep.subr.mxu0 0.0
    %1857 = vmatpush1.msra.mxu0 0.0
    %1858 = vmatprep.subr.mxu0 0.0
    %1859 = vmatpush1.msra.mxu0 0.0
    %1860 = vmatprep.subr.mxu0 0.0
    %1861 = vmatpush1.msra.mxu0 0.0
    %1862 = vmatprep.subr.mxu0 0.0
    %1863 = vmatpush1.msra.mxu0 0.0
    %1864 = vmatprep.subr.mxu0 0.0
    %1865 = vmatpush1.msra.mxu0 0.0
    %1866 = vmatprep.subr.mxu0 0.0
    %1867 = vmatpush1.msra.mxu0 0.0
    %1868 = vmatprep.subr.mxu0 0.0
    %1869 = vmatpush1.msra.mxu0 0.0
    %1870 = vmatprep.subr.mxu0 0.0
    %1871 = vmatpush1.msra.mxu0 0.0
    %1872 = vmatprep.subr.mxu0 0.0
    %1873 = vmatpush1.msra.mxu0 0.0
    %1874 = vmatprep.subr.mxu0 0.0
    %1875 = vmatpush1.msra.mxu0 0.0
    %1876 = vmatprep.subr.mxu0 0.0
    %1877 = vmatpush1.msra.mxu0 0.0
    %1878 = vmatprep.subr.mxu0 0.0
    %1879 = vmatpush1.msra.mxu0 0.0
    %1880 = vmatprep.subr.mxu0 0.0
    %1881 = vmatpush1.msra.mxu0 0.0
    %1882 = vmatprep.subr.mxu0 0.0
    %1883 = vmatpush1.msra.mxu0 0.0
    %1884 = vmatprep.mubr.f32.mxu0 0.0
    %1885 = vmatmul.mubr.f32.gmra.mrb[0].mxu0 %v1818
    %v1886 = vpop.f32.mrb[0].mxu0
    %v1887 = vadd.f32 0.0, %v1886
    %v1888 = vpop.f32.mrb[0].mxu0
    %v1889 = vadd.f32 0.0, %v1888
    %1890 = vdwg.mxu0
    %1891 = vmatprep.subr.mxu0 0.0
    %1892 = vmatpush1.msra.mxu0 %v547
    %1893 = vmatprep.subr.mxu0 0.0
    %1894 = vmatpush1.msra.mxu0 %v550
    %1895 = vmatprep.subr.mxu0 0.0
    %1896 = vmatpush1.msra.mxu0 %v553
    %1897 = vmatprep.subr.mxu0 0.0
    %1898 = vmatpush1.msra.mxu0 %v556
    %1899 = vmatprep.subr.mxu0 0.0
    %1900 = vmatpush1.msra.mxu0 %v559
    %1901 = vmatprep.subr.mxu0 0.0
    %1902 = vmatpush1.msra.mxu0 %v562
    %1903 = vmatprep.subr.mxu0 0.0
    %1904 = vmatpush1.msra.mxu0 %v565
    %1905 = vmatprep.subr.mxu0 0.0
    %1906 = vmatpush1.msra.mxu0 %v568
    %1907 = vmatprep.subr.mxu0 0.0
    %1908 = vmatpush1.msra.mxu0 %v571
    %1909 = vmatprep.subr.mxu0 0.0
    %1910 = vmatpush1.msra.mxu0 %v574
    %1911 = vmatprep.subr.mxu0 0.0
    %1912 = vmatpush1.msra.mxu0 %v577
    %1913 = vmatprep.subr.mxu0 0.0
    %1914 = vmatpush1.msra.mxu0 %v580
    %1915 = vmatprep.subr.mxu0 0.0
    %1916 = vmatpush1.msra.mxu0 %v583
    %1917 = vmatprep.subr.mxu0 0.0
    %1918 = vmatpush1.msra.mxu0 %v586
    %1919 = vmatprep.subr.mxu0 0.0
    %1920 = vmatpush1.msra.mxu0 %v589
    %1921 = vmatprep.subr.mxu0 0.0
    %1922 = vmatpush1.msra.mxu0 %v592
    %1923 = vmatprep.subr.mxu0 0.0
    %1924 = vmatpush1.msra.mxu0 0.0
    %1925 = vmatprep.subr.mxu0 0.0
    %1926 = vmatpush1.msra.mxu0 0.0
    %1927 = vmatprep.subr.mxu0 0.0
    %1928 = vmatpush1.msra.mxu0 0.0
    %1929 = vmatprep.subr.mxu0 0.0
    %1930 = vmatpush1.msra.mxu0 0.0
    %1931 = vmatprep.subr.mxu0 0.0
    %1932 = vmatpush1.msra.mxu0 0.0
    %1933 = vmatprep.subr.mxu0 0.0
    %1934 = vmatpush1.msra.mxu0 0.0
    %1935 = vmatprep.subr.mxu0 0.0
    %1936 = vmatpush1.msra.mxu0 0.0
    %1937 = vmatprep.subr.mxu0 0.0
    %1938 = vmatpush1.msra.mxu0 0.0
    %1939 = vmatprep.subr.mxu0 0.0
    %1940 = vmatpush1.msra.mxu0 0.0
    %1941 = vmatprep.subr.mxu0 0.0
    %1942 = vmatpush1.msra.mxu0 0.0
    %1943 = vmatprep.subr.mxu0 0.0
    %1944 = vmatpush1.msra.mxu0 0.0
    %1945 = vmatprep.subr.mxu0 0.0
    %1946 = vmatpush1.msra.mxu0 0.0
    %1947 = vmatprep.subr.mxu0 0.0
    %1948 = vmatpush1.msra.mxu0 0.0
    %1949 = vmatprep.subr.mxu0 0.0
    %1950 = vmatpush1.msra.mxu0 0.0
    %1951 = vmatprep.subr.mxu0 0.0
    %1952 = vmatpush1.msra.mxu0 0.0
    %1953 = vmatprep.subr.mxu0 0.0
    %1954 = vmatpush1.msra.mxu0 0.0
    %1955 = vmatprep.mubr.f32.mxu0 0.0
    %1956 = vmatmul.mubr.f32.gmra.mrb[0].mxu0 %v1818
    %v1957 = vpop.f32.mrb[0].mxu0
    %v1958 = vadd.f32 0.0, %v1957
    %v1959 = vpop.f32.mrb[0].mxu0
    %1960 = vdwg.mxu0
    %v1963 = vrot.slane %v1887, 1
    %v1964 = vrot.slane %v1889, 1
    %v1967 = vadd.f32 %v264, %v1963
    %v1968 = vadd.f32 %v266, %v1964
    %v1969 = vxor.u32 %v1967, 2147483648
    %v1970 = vxor.u32 %v1968, 2147483648
    %v1971 = vmul.f32 %v1969, 1.442695
    %v1972 = vpow.pop %v1971
    %v1973 = vmul.f32 %v1970, 1.442695
    %v1974 = vpow.pop %v1973
    %v1975 = vadd.f32 %v1972, 1.0
    %v1976 = vadd.f32 %v1974, 1.0
    %v1977 = vrcp.pop %v1975
    %v1978 = vmul.f32 1.0, %v1977
    %v1979 = vrcp.pop %v1976
    %v1980 = vmul.f32 1.0, %v1979
    %v1981 = vadd.f32 %v1958, %v748
    %v1983 = vrot.slane %v1981, 1
    %v1985 = vmul.f32 %v1978, %v1983
    %v1986 = vadd.f32 %v335, %v1985
    %v1987 = vtanh.pop %v1986
    %v1988 = vsub.f32 1.0, %v1980
    %v1989 = vmul.f32 %v1988, %v1987
    %v1990 = vrot.slane %v1816, 7
    %v1992 = vmul.f32 %v1980, %v1990
    %v1993 = vadd.f32 %v1989, %v1992
    %v1994 = vld [vmem:[#allocation10] sm:$0xff]
    %v1995 = vld [vmem:[#allocation10 + $0x8] sm:$0xff]
    %v1996 = vld [vmem:[#allocation10 + $0x10] sm:$0xff]
    %v1997 = vld [vmem:[#allocation10 + $0x18] sm:$0xff]
    %v1998 = vld [vmem:[#allocation10 + $0x20] sm:$0xff]
    %v1999 = vld [vmem:[#allocation10 + $0x28] sm:$0xff]
    %v2000 = vld [vmem:[#allocation10 + $0x30] sm:$0xff]
    %v2001 = vld [vmem:[#allocation10 + $0x38] sm:$0xff]
    %v2002 = vld [vmem:[#allocation10 + $0x40] sm:$0xff]
    %v2003 = vld [vmem:[#allocation10 + $0x48] sm:$0xff]
    %v2004 = vld [vmem:[#allocation10 + $0x50] sm:$0xff]
    %v2005 = vld [vmem:[#allocation10 + $0x58] sm:$0xff]
    %v2006 = vld [vmem:[#allocation10 + $0x60] sm:$0xff]
    %v2007 = vld [vmem:[#allocation10 + $0x68] sm:$0xff]
    %v2008 = vld [vmem:[#allocation10 + $0x70] sm:$0xff]
    %v2009 = vld [vmem:[#allocation10 + $0x78] sm:$0xff]
    %v2010 = vld [vmem:[#allocation10 + $0x80] sm:$0xff]
    %v2011 = vld [vmem:[#allocation10 + $0x88] sm:$0xff]
    %v2012 = vld [vmem:[#allocation10 + $0x90] sm:$0xff]
    %v2013 = vld [vmem:[#allocation10 + $0x98] sm:$0xff]
    %v2014 = vld [vmem:[#allocation10 + $0xa0] sm:$0xff]
    %v2015 = vld [vmem:[#allocation10 + $0xa8] sm:$0xff]
    %v2016 = vld [vmem:[#allocation10 + $0xb0] sm:$0xff]
    %v2017 = vld [vmem:[#allocation10 + $0xb8] sm:$0xff]
    %v2018 = vld [vmem:[#allocation10 + $0xc0] sm:$0xff]
    %v2019 = vld [vmem:[#allocation10 + $0xc8] sm:$0xff]
    %v2020 = vld [vmem:[#allocation10 + $0xd0] sm:$0xff]
    %v2021 = vld [vmem:[#allocation10 + $0xd8] sm:$0xff]
    %v2022 = vld [vmem:[#allocation10 + $0xe0] sm:$0xff]
    %v2023 = vld [vmem:[#allocation10 + $0xe8] sm:$0xff]
    %v2024 = vld [vmem:[#allocation10 + $0xf0] sm:$0xff]
    %v2025 = vld [vmem:[#allocation10 + $0xf8] sm:$0xff]
    %v2026 = vld [vmem:[#allocation10 + $0x100] sm:$0xff]
    %v2027 = vld [vmem:[#allocation10 + $0x108] sm:$0xff]
    %v2028 = vld [vmem:[#allocation10 + $0x110] sm:$0xff]
    %v2029 = vld [vmem:[#allocation10 + $0x118] sm:$0xff]
    %v2030 = vld [vmem:[#allocation10 + $0x120] sm:$0xff]
    %v2031 = vld [vmem:[#allocation10 + $0x128] sm:$0xff]
    %v2032 = vld [vmem:[#allocation10 + $0x130] sm:$0xff]
    %v2033 = vld [vmem:[#allocation10 + $0x138] sm:$0xff]
    %v2034 = vld [vmem:[#allocation10 + $0x140] sm:$0xff]
    %v2035 = vld [vmem:[#allocation10 + $0x148] sm:$0xff]
    %v2036 = vld [vmem:[#allocation10 + $0x150] sm:$0xff]
    %v2037 = vld [vmem:[#allocation10 + $0x158] sm:$0xff]
    %v2038 = vld [vmem:[#allocation10 + $0x160] sm:$0xff]
    %v2039 = vld [vmem:[#allocation10 + $0x168] sm:$0xff]
    %v2040 = vld [vmem:[#allocation10 + $0x170] sm:$0xff]
    %v2041 = vld [vmem:[#allocation10 + $0x178] sm:$0xff]
    %v2043 = vrot.slane %v1993, 7
    %2045 = vmatprep.subr.mxu0 %v1995
    %2046 = vmatpush1.msra.mxu0 %v1994
    %2047 = vmatprep.subr.mxu0 %v1998
    %2048 = vmatpush1.msra.mxu0 %v1997
    %2049 = vmatprep.subr.mxu0 %v2001
    %2050 = vmatpush1.msra.mxu0 %v2000
    %2051 = vmatprep.subr.mxu0 %v2004
    %2052 = vmatpush1.msra.mxu0 %v2003
    %2053 = vmatprep.subr.mxu0 %v2007
    %2054 = vmatpush1.msra.mxu0 %v2006
    %2055 = vmatprep.subr.mxu0 %v2010
    %2056 = vmatpush1.msra.mxu0 %v2009
    %2057 = vmatprep.subr.mxu0 %v2013
    %2058 = vmatpush1.msra.mxu0 %v2012
    %2059 = vmatprep.subr.mxu0 %v2016
    %2060 = vmatpush1.msra.mxu0 %v2015
    %2061 = vmatprep.subr.mxu0 %v2019
    %2062 = vmatpush1.msra.mxu0 %v2018
    %2063 = vmatprep.subr.mxu0 %v2022
    %2064 = vmatpush1.msra.mxu0 %v2021
    %2065 = vmatprep.subr.mxu0 %v2025
    %2066 = vmatpush1.msra.mxu0 %v2024
    %2067 = vmatprep.subr.mxu0 %v2028
    %2068 = vmatpush1.msra.mxu0 %v2027
    %2069 = vmatprep.subr.mxu0 %v2031
    %2070 = vmatpush1.msra.mxu0 %v2030
    %2071 = vmatprep.subr.mxu0 %v2034
    %2072 = vmatpush1.msra.mxu0 %v2033
    %2073 = vmatprep.subr.mxu0 %v2037
    %2074 = vmatpush1.msra.mxu0 %v2036
    %2075 = vmatprep.subr.mxu0 %v2040
    %2076 = vmatpush1.msra.mxu0 %v2039
    %2077 = vmatprep.subr.mxu0 0.0
    %2078 = vmatpush1.msra.mxu0 0.0
    %2079 = vmatprep.subr.mxu0 0.0
    %2080 = vmatpush1.msra.mxu0 0.0
    %2081 = vmatprep.subr.mxu0 0.0
    %2082 = vmatpush1.msra.mxu0 0.0
    %2083 = vmatprep.subr.mxu0 0.0
    %2084 = vmatpush1.msra.mxu0 0.0
    %2085 = vmatprep.subr.mxu0 0.0
    %2086 = vmatpush1.msra.mxu0 0.0
    %2087 = vmatprep.subr.mxu0 0.0
    %2088 = vmatpush1.msra.mxu0 0.0
    %2089 = vmatprep.subr.mxu0 0.0
    %2090 = vmatpush1.msra.mxu0 0.0
    %2091 = vmatprep.subr.mxu0 0.0
    %2092 = vmatpush1.msra.mxu0 0.0
    %2093 = vmatprep.subr.mxu0 0.0
    %2094 = vmatpush1.msra.mxu0 0.0
    %2095 = vmatprep.subr.mxu0 0.0
    %2096 = vmatpush1.msra.mxu0 0.0
    %2097 = vmatprep.subr.mxu0 0.0
    %2098 = vmatpush1.msra.mxu0 0.0
    %2099 = vmatprep.subr.mxu0 0.0
    %2100 = vmatpush1.msra.mxu0 0.0
    %2101 = vmatprep.subr.mxu0 0.0
    %2102 = vmatpush1.msra.mxu0 0.0
    %2103 = vmatprep.subr.mxu0 0.0
    %2104 = vmatpush1.msra.mxu0 0.0
    %2105 = vmatprep.subr.mxu0 0.0
    %2106 = vmatpush1.msra.mxu0 0.0
    %2107 = vmatprep.subr.mxu0 0.0
    %2108 = vmatpush1.msra.mxu0 0.0
    %2109 = vmatprep.mubr.f32.mxu0 0.0
    %2110 = vmatmul.mubr.f32.gmra.mrb[0].mxu0 %v2043
    %v2111 = vpop.f32.mrb[0].mxu0
    %v2112 = vadd.f32 0.0, %v2111
    %v2113 = vpop.f32.mrb[0].mxu0
    %v2114 = vadd.f32 0.0, %v2113
    %2115 = vdwg.mxu0
    %2116 = vmatprep.subr.mxu0 0.0
    %2117 = vmatpush1.msra.mxu0 %v1996
    %2118 = vmatprep.subr.mxu0 0.0
    %2119 = vmatpush1.msra.mxu0 %v1999
    %2120 = vmatprep.subr.mxu0 0.0
    %2121 = vmatpush1.msra.mxu0 %v2002
    %2122 = vmatprep.subr.mxu0 0.0
    %2123 = vmatpush1.msra.mxu0 %v2005
    %2124 = vmatprep.subr.mxu0 0.0
    %2125 = vmatpush1.msra.mxu0 %v2008
    %2126 = vmatprep.subr.mxu0 0.0
    %2127 = vmatpush1.msra.mxu0 %v2011
    %2128 = vmatprep.subr.mxu0 0.0
    %2129 = vmatpush1.msra.mxu0 %v2014
    %2130 = vmatprep.subr.mxu0 0.0
    %2131 = vmatpush1.msra.mxu0 %v2017
    %2132 = vmatprep.subr.mxu0 0.0
    %2133 = vmatpush1.msra.mxu0 %v2020
    %2134 = vmatprep.subr.mxu0 0.0
    %2135 = vmatpush1.msra.mxu0 %v2023
    %2136 = vmatprep.subr.mxu0 0.0
    %2137 = vmatpush1.msra.mxu0 %v2026
    %2138 = vmatprep.subr.mxu0 0.0
    %2139 = vmatpush1.msra.mxu0 %v2029
    %2140 = vmatprep.subr.mxu0 0.0
    %2141 = vmatpush1.msra.mxu0 %v2032
    %2142 = vmatprep.subr.mxu0 0.0
    %2143 = vmatpush1.msra.mxu0 %v2035
    %2144 = vmatprep.subr.mxu0 0.0
    %2145 = vmatpush1.msra.mxu0 %v2038
    %2146 = vmatprep.subr.mxu0 0.0
    %2147 = vmatpush1.msra.mxu0 %v2041
    %2148 = vmatprep.subr.mxu0 0.0
    %2149 = vmatpush1.msra.mxu0 0.0
    %2150 = vmatprep.subr.mxu0 0.0
    %2151 = vmatpush1.msra.mxu0 0.0
    %2152 = vmatprep.subr.mxu0 0.0
    %2153 = vmatpush1.msra.mxu0 0.0
    %2154 = vmatprep.subr.mxu0 0.0
    %2155 = vmatpush1.msra.mxu0 0.0
    %2156 = vmatprep.subr.mxu0 0.0
    %2157 = vmatpush1.msra.mxu0 0.0
    %2158 = vmatprep.subr.mxu0 0.0
    %2159 = vmatpush1.msra.mxu0 0.0
    %2160 = vmatprep.subr.mxu0 0.0
    %2161 = vmatpush1.msra.mxu0 0.0
    %2162 = vmatprep.subr.mxu0 0.0
    %2163 = vmatpush1.msra.mxu0 0.0
    %2164 = vmatprep.subr.mxu0 0.0
    %2165 = vmatpush1.msra.mxu0 0.0
    %2166 = vmatprep.subr.mxu0 0.0
    %2167 = vmatpush1.msra.mxu0 0.0
    %2168 = vmatprep.subr.mxu0 0.0
    %2169 = vmatpush1.msra.mxu0 0.0
    %2170 = vmatprep.subr.mxu0 0.0
    %2171 = vmatpush1.msra.mxu0 0.0
    %2172 = vmatprep.subr.mxu0 0.0
    %2173 = vmatpush1.msra.mxu0 0.0
    %2174 = vmatprep.subr.mxu0 0.0
    %2175 = vmatpush1.msra.mxu0 0.0
    %2176 = vmatprep.subr.mxu0 0.0
    %2177 = vmatpush1.msra.mxu0 0.0
    %2178 = vmatprep.subr.mxu0 0.0
    %2179 = vmatpush1.msra.mxu0 0.0
    %2180 = vmatprep.mubr.f32.mxu0 0.0
    %2181 = vmatmul.mubr.f32.gmra.mrb[0].mxu0 %v2043
    %v2182 = vpop.f32.mrb[0].mxu0
    %v2183 = vadd.f32 0.0, %v2182
    %v2184 = vpop.f32.mrb[0].mxu0
    %2185 = vdwg.mxu0
    %v2186 = vadd.f32 %v471, %v2112
    %v2187 = vadd.f32 %v473, %v2114
    %v2188 = vxor.u32 %v2186, 2147483648
    %v2189 = vxor.u32 %v2187, 2147483648
    %v2190 = vmul.f32 %v2188, 1.442695
    %v2191 = vpow.pop %v2190
    %v2192 = vmul.f32 %v2189, 1.442695
    %v2193 = vpow.pop %v2192
    %v2194 = vadd.f32 %v2191, 1.0
    %v2195 = vadd.f32 %v2193, 1.0
    %v2196 = vrcp.pop %v2194
    %v2197 = vmul.f32 1.0, %v2196
    %v2198 = vrcp.pop %v2195
    %v2199 = vmul.f32 1.0, %v2198
    %v2200 = vld [vmem:[#allocation11] sm:$0x1]
    %v2201 = vadd.f32 %v2183, %v2200
    %v2202 = vmul.f32 %v2197, %v2201
    %v2203 = vadd.f32 %v542, %v2202
    %v2204 = vtanh.pop %v2203
    %v2205 = vsub.f32 1.0, %v2199
    %v2206 = vmul.f32 %v2205, %v2204
    %v2207 = vmul.f32 %v2199, %v2043
    %v2208 = vadd.f32 %v2206, %v2207
    %2209 = vmatprep.subr.mxu0 %v1995
    %2210 = vmatpush1.msra.mxu0 %v1994
    %2211 = vmatprep.subr.mxu0 %v1998
    %2212 = vmatpush1.msra.mxu0 %v1997
    %2213 = vmatprep.subr.mxu0 %v2001
    %2214 = vmatpush1.msra.mxu0 %v2000
    %2215 = vmatprep.subr.mxu0 %v2004
    %2216 = vmatpush1.msra.mxu0 %v2003
    %2217 = vmatprep.subr.mxu0 %v2007
    %2218 = vmatpush1.msra.mxu0 %v2006
    %2219 = vmatprep.subr.mxu0 %v2010
    %2220 = vmatpush1.msra.mxu0 %v2009
    %2221 = vmatprep.subr.mxu0 %v2013
    %2222 = vmatpush1.msra.mxu0 %v2012
    %2223 = vmatprep.subr.mxu0 %v2016
    %2224 = vmatpush1.msra.mxu0 %v2015
    %2225 = vmatprep.subr.mxu0 %v2019
    %2226 = vmatpush1.msra.mxu0 %v2018
    %2227 = vmatprep.subr.mxu0 %v2022
    %2228 = vmatpush1.msra.mxu0 %v2021
    %2229 = vmatprep.subr.mxu0 %v2025
    %2230 = vmatpush1.msra.mxu0 %v2024
    %2231 = vmatprep.subr.mxu0 %v2028
    %2232 = vmatpush1.msra.mxu0 %v2027
    %2233 = vmatprep.subr.mxu0 %v2031
    %2234 = vmatpush1.msra.mxu0 %v2030
    %2235 = vmatprep.subr.mxu0 %v2034
    %2236 = vmatpush1.msra.mxu0 %v2033
    %2237 = vmatprep.subr.mxu0 %v2037
    %2238 = vmatpush1.msra.mxu0 %v2036
    %2239 = vmatprep.subr.mxu0 %v2040
    %2240 = vmatpush1.msra.mxu0 %v2039
    %2241 = vmatprep.subr.mxu0 0.0
    %2242 = vmatpush1.msra.mxu0 0.0
    %2243 = vmatprep.subr.mxu0 0.0
    %2244 = vmatpush1.msra.mxu0 0.0
    %2245 = vmatprep.subr.mxu0 0.0
    %2246 = vmatpush1.msra.mxu0 0.0
    %2247 = vmatprep.subr.mxu0 0.0
    %2248 = vmatpush1.msra.mxu0 0.0
    %2249 = vmatprep.subr.mxu0 0.0
    %2250 = vmatpush1.msra.mxu0 0.0
    %2251 = vmatprep.subr.mxu0 0.0
    %2252 = vmatpush1.msra.mxu0 0.0
    %2253 = vmatprep.subr.mxu0 0.0
    %2254 = vmatpush1.msra.mxu0 0.0
    %2255 = vmatprep.subr.mxu0 0.0
    %2256 = vmatpush1.msra.mxu0 0.0
    %2257 = vmatprep.subr.mxu0 0.0
    %2258 = vmatpush1.msra.mxu0 0.0
    %2259 = vmatprep.subr.mxu0 0.0
    %2260 = vmatpush1.msra.mxu0 0.0
    %2261 = vmatprep.subr.mxu0 0.0
    %2262 = vmatpush1.msra.mxu0 0.0
    %2263 = vmatprep.subr.mxu0 0.0
    %2264 = vmatpush1.msra.mxu0 0.0
    %2265 = vmatprep.subr.mxu0 0.0
    %2266 = vmatpush1.msra.mxu0 0.0
    %2267 = vmatprep.subr.mxu0 0.0
    %2268 = vmatpush1.msra.mxu0 0.0
    %2269 = vmatprep.subr.mxu0 0.0
    %2270 = vmatpush1.msra.mxu0 0.0
    %2271 = vmatprep.subr.mxu0 0.0
    %2272 = vmatpush1.msra.mxu0 0.0
    %2273 = vmatprep.mubr.f32.mxu0 0.0
    %2274 = vmatmul.mubr.f32.gmra.mrb[0].mxu0 %v2208
    %v2275 = vpop.f32.mrb[0].mxu0
    %v2276 = vadd.f32 0.0, %v2275
    %v2277 = vpop.f32.mrb[0].mxu0
    %v2278 = vadd.f32 0.0, %v2277
    %2279 = vdwg.mxu0
    %2280 = vmatprep.subr.mxu0 0.0
    %2281 = vmatpush1.msra.mxu0 %v1996
    %2282 = vmatprep.subr.mxu0 0.0
    %2283 = vmatpush1.msra.mxu0 %v1999
    %2284 = vmatprep.subr.mxu0 0.0
    %2285 = vmatpush1.msra.mxu0 %v2002
    %2286 = vmatprep.subr.mxu0 0.0
    %2287 = vmatpush1.msra.mxu0 %v2005
    %2288 = vmatprep.subr.mxu0 0.0
    %2289 = vmatpush1.msra.mxu0 %v2008
    %2290 = vmatprep.subr.mxu0 0.0
    %2291 = vmatpush1.msra.mxu0 %v2011
    %2292 = vmatprep.subr.mxu0 0.0
    %2293 = vmatpush1.msra.mxu0 %v2014
    %2294 = vmatprep.subr.mxu0 0.0
    %2295 = vmatpush1.msra.mxu0 %v2017
    %2296 = vmatprep.subr.mxu0 0.0
    %2297 = vmatpush1.msra.mxu0 %v2020
    %2298 = vmatprep.subr.mxu0 0.0
    %2299 = vmatpush1.msra.mxu0 %v2023
    %2300 = vmatprep.subr.mxu0 0.0
    %2301 = vmatpush1.msra.mxu0 %v2026
    %2302 = vmatprep.subr.mxu0 0.0
    %2303 = vmatpush1.msra.mxu0 %v2029
    %2304 = vmatprep.subr.mxu0 0.0
    %2305 = vmatpush1.msra.mxu0 %v2032
    %2306 = vmatprep.subr.mxu0 0.0
    %2307 = vmatpush1.msra.mxu0 %v2035
    %2308 = vmatprep.subr.mxu0 0.0
    %2309 = vmatpush1.msra.mxu0 %v2038
    %2310 = vmatprep.subr.mxu0 0.0
    %2311 = vmatpush1.msra.mxu0 %v2041
    %2312 = vmatprep.subr.mxu0 0.0
    %2313 = vmatpush1.msra.mxu0 0.0
    %2314 = vmatprep.subr.mxu0 0.0
    %2315 = vmatpush1.msra.mxu0 0.0
    %2316 = vmatprep.subr.mxu0 0.0
    %2317 = vmatpush1.msra.mxu0 0.0
    %2318 = vmatprep.subr.mxu0 0.0
    %2319 = vmatpush1.msra.mxu0 0.0
    %2320 = vmatprep.subr.mxu0 0.0
    %2321 = vmatpush1.msra.mxu0 0.0
    %2322 = vmatprep.subr.mxu0 0.0
    %2323 = vmatpush1.msra.mxu0 0.0
    %2324 = vmatprep.subr.mxu0 0.0
    %2325 = vmatpush1.msra.mxu0 0.0
    %2326 = vmatprep.subr.mxu0 0.0
    %2327 = vmatpush1.msra.mxu0 0.0
    %2328 = vmatprep.subr.mxu0 0.0
    %2329 = vmatpush1.msra.mxu0 0.0
    %2330 = vmatprep.subr.mxu0 0.0
    %2331 = vmatpush1.msra.mxu0 0.0
    %2332 = vmatprep.subr.mxu0 0.0
    %2333 = vmatpush1.msra.mxu0 0.0
    %2334 = vmatprep.subr.mxu0 0.0
    %2335 = vmatpush1.msra.mxu0 0.0
    %2336 = vmatprep.subr.mxu0 0.0
    %2337 = vmatpush1.msra.mxu0 0.0
    %2338 = vmatprep.subr.mxu0 0.0
    %2339 = vmatpush1.msra.mxu0 0.0
    %2340 = vmatprep.subr.mxu0 0.0
    %2341 = vmatpush1.msra.mxu0 0.0
    %2342 = vmatprep.subr.mxu0 0.0
    %2343 = vmatpush1.msra.mxu0 0.0
    %2344 = vmatprep.mubr.f32.mxu0 0.0
    %2345 = vmatmul.mubr.f32.gmra.mrb[0].mxu0 %v2208
    %v2346 = vpop.f32.mrb[0].mxu0
    %v2347 = vadd.f32 0.0, %v2346
    %v2348 = vpop.f32.mrb[0].mxu0
    %2349 = vdwg.mxu0
    %v2352 = vrot.slane %v2276, 7
    %v2353 = vrot.slane %v2278, 7
    %v2356 = vadd.f32 %v471, %v2352
    %v2357 = vadd.f32 %v473, %v2353
    %v2358 = vxor.u32 %v2356, 2147483648
    %v2359 = vxor.u32 %v2357, 2147483648
    %v2360 = vmul.f32 %v2358, 1.442695
    %v2361 = vpow.pop %v2360
    %v2362 = vmul.f32 %v2359, 1.442695
    %v2363 = vpow.pop %v2362
    %v2364 = vadd.f32 %v2361, 1.0
    %v2365 = vadd.f32 %v2363, 1.0
    %v2366 = vrcp.pop %v2364
    %v2367 = vmul.f32 1.0, %v2366
    %v2368 = vrcp.pop %v2365
    %v2369 = vmul.f32 1.0, %v2368
    %v2370 = vadd.f32 %v2347, %v2200
    %v2372 = vrot.slane %v2370, 7
    %v2374 = vmul.f32 %v2367, %v2372
    %v2375 = vadd.f32 %v542, %v2374
    %v2376 = vtanh.pop %v2375
    %v2377 = vsub.f32 1.0, %v2369
    %v2378 = vmul.f32 %v2377, %v2376
    %v2380 = vrot.slane %v2208, 7
    %v2382 = vmul.f32 %v2369, %v2380
    %v2383 = vadd.f32 %v2378, %v2382
    %v2385 = vrot.slane %v2383, 1
    %2387 = vmatprep.subr.mxu0 %v1995
    %2388 = vmatpush1.msra.mxu0 %v1994
    %2389 = vmatprep.subr.mxu0 %v1998
    %2390 = vmatpush1.msra.mxu0 %v1997
    %2391 = vmatprep.subr.mxu0 %v2001
    %2392 = vmatpush1.msra.mxu0 %v2000
    %2393 = vmatprep.subr.mxu0 %v2004
    %2394 = vmatpush1.msra.mxu0 %v2003
    %2395 = vmatprep.subr.mxu0 %v2007
    %2396 = vmatpush1.msra.mxu0 %v2006
    %2397 = vmatprep.subr.mxu0 %v2010
    %2398 = vmatpush1.msra.mxu0 %v2009
    %2399 = vmatprep.subr.mxu0 %v2013
    %2400 = vmatpush1.msra.mxu0 %v2012
    %2401 = vmatprep.subr.mxu0 %v2016
    %2402 = vmatpush1.msra.mxu0 %v2015
    %2403 = vmatprep.subr.mxu0 %v2019
    %2404 = vmatpush1.msra.mxu0 %v2018
    %2405 = vmatprep.subr.mxu0 %v2022
    %2406 = vmatpush1.msra.mxu0 %v2021
    %2407 = vmatprep.subr.mxu0 %v2025
    %2408 = vmatpush1.msra.mxu0 %v2024
    %2409 = vmatprep.subr.mxu0 %v2028
    %2410 = vmatpush1.msra.mxu0 %v2027
    %2411 = vmatprep.subr.mxu0 %v2031
    %2412 = vmatpush1.msra.mxu0 %v2030
    %2413 = vmatprep.subr.mxu0 %v2034
    %2414 = vmatpush1.msra.mxu0 %v2033
    %2415 = vmatprep.subr.mxu0 %v2037
    %2416 = vmatpush1.msra.mxu0 %v2036
    %2417 = vmatprep.subr.mxu0 %v2040
    %2418 = vmatpush1.msra.mxu0 %v2039
    %2419 = vmatprep.subr.mxu0 0.0
    %2420 = vmatpush1.msra.mxu0 0.0
    %2421 = vmatprep.subr.mxu0 0.0
    %2422 = vmatpush1.msra.mxu0 0.0
    %2423 = vmatprep.subr.mxu0 0.0
    %2424 = vmatpush1.msra.mxu0 0.0
    %2425 = vmatprep.subr.mxu0 0.0
    %2426 = vmatpush1.msra.mxu0 0.0
    %2427 = vmatprep.subr.mxu0 0.0
    %2428 = vmatpush1.msra.mxu0 0.0
    %2429 = vmatprep.subr.mxu0 0.0
    %2430 = vmatpush1.msra.mxu0 0.0
    %2431 = vmatprep.subr.mxu0 0.0
    %2432 = vmatpush1.msra.mxu0 0.0
    %2433 = vmatprep.subr.mxu0 0.0
    %2434 = vmatpush1.msra.mxu0 0.0
    %2435 = vmatprep.subr.mxu0 0.0
    %2436 = vmatpush1.msra.mxu0 0.0
    %2437 = vmatprep.subr.mxu0 0.0
    %2438 = vmatpush1.msra.mxu0 0.0
    %2439 = vmatprep.subr.mxu0 0.0
    %2440 = vmatpush1.msra.mxu0 0.0
    %2441 = vmatprep.subr.mxu0 0.0
    %2442 = vmatpush1.msra.mxu0 0.0
    %2443 = vmatprep.subr.mxu0 0.0
    %2444 = vmatpush1.msra.mxu0 0.0
    %2445 = vmatprep.subr.mxu0 0.0
    %2446 = vmatpush1.msra.mxu0 0.0
    %2447 = vmatprep.subr.mxu0 0.0
    %2448 = vmatpush1.msra.mxu0 0.0
    %2449 = vmatprep.subr.mxu0 0.0
    %2450 = vmatpush1.msra.mxu0 0.0
    %2451 = vmatprep.mubr.f32.mxu0 0.0
    %2452 = vmatmul.mubr.f32.gmra.mrb[0].mxu0 %v2385
    %v2453 = vpop.f32.mrb[0].mxu0
    %v2454 = vadd.f32 0.0, %v2453
    %v2455 = vpop.f32.mrb[0].mxu0
    %v2456 = vadd.f32 0.0, %v2455
    %2457 = vdwg.mxu0
    %2458 = vmatprep.subr.mxu0 0.0
    %2459 = vmatpush1.msra.mxu0 %v1996
    %2460 = vmatprep.subr.mxu0 0.0
    %2461 = vmatpush1.msra.mxu0 %v1999
    %2462 = vmatprep.subr.mxu0 0.0
    %2463 = vmatpush1.msra.mxu0 %v2002
    %2464 = vmatprep.subr.mxu0 0.0
    %2465 = vmatpush1.msra.mxu0 %v2005
    %2466 = vmatprep.subr.mxu0 0.0
    %2467 = vmatpush1.msra.mxu0 %v2008
    %2468 = vmatprep.subr.mxu0 0.0
    %2469 = vmatpush1.msra.mxu0 %v2011
    %2470 = vmatprep.subr.mxu0 0.0
    %2471 = vmatpush1.msra.mxu0 %v2014
    %2472 = vmatprep.subr.mxu0 0.0
    %2473 = vmatpush1.msra.mxu0 %v2017
    %2474 = vmatprep.subr.mxu0 0.0
    %2475 = vmatpush1.msra.mxu0 %v2020
    %2476 = vmatprep.subr.mxu0 0.0
    %2477 = vmatpush1.msra.mxu0 %v2023
    %2478 = vmatprep.subr.mxu0 0.0
    %2479 = vmatpush1.msra.mxu0 %v2026
    %2480 = vmatprep.subr.mxu0 0.0
    %2481 = vmatpush1.msra.mxu0 %v2029
    %2482 = vmatprep.subr.mxu0 0.0
    %2483 = vmatpush1.msra.mxu0 %v2032
    %2484 = vmatprep.subr.mxu0 0.0
    %2485 = vmatpush1.msra.mxu0 %v2035
    %2486 = vmatprep.subr.mxu0 0.0
    %2487 = vmatpush1.msra.mxu0 %v2038
    %2488 = vmatprep.subr.mxu0 0.0
    %2489 = vmatpush1.msra.mxu0 %v2041
    %2490 = vmatprep.subr.mxu0 0.0
    %2491 = vmatpush1.msra.mxu0 0.0
    %2492 = vmatprep.subr.mxu0 0.0
    %2493 = vmatpush1.msra.mxu0 0.0
    %2494 = vmatprep.subr.mxu0 0.0
    %2495 = vmatpush1.msra.mxu0 0.0
    %2496 = vmatprep.subr.mxu0 0.0
    %2497 = vmatpush1.msra.mxu0 0.0
    %2498 = vmatprep.subr.mxu0 0.0
    %2499 = vmatpush1.msra.mxu0 0.0
    %2500 = vmatprep.subr.mxu0 0.0
    %2501 = vmatpush1.msra.mxu0 0.0
    %2502 = vmatprep.subr.mxu0 0.0
    %2503 = vmatpush1.msra.mxu0 0.0
    %2504 = vmatprep.subr.mxu0 0.0
    %2505 = vmatpush1.msra.mxu0 0.0
    %2506 = vmatprep.subr.mxu0 0.0
    %2507 = vmatpush1.msra.mxu0 0.0
    %2508 = vmatprep.subr.mxu0 0.0
    %2509 = vmatpush1.msra.mxu0 0.0
    %2510 = vmatprep.subr.mxu0 0.0
    %2511 = vmatpush1.msra.mxu0 0.0
    %2512 = vmatprep.subr.mxu0 0.0
    %2513 = vmatpush1.msra.mxu0 0.0
    %2514 = vmatprep.subr.mxu0 0.0
    %2515 = vmatpush1.msra.mxu0 0.0
    %2516 = vmatprep.subr.mxu0 0.0
    %2517 = vmatpush1.msra.mxu0 0.0
    %2518 = vmatprep.subr.mxu0 0.0
    %2519 = vmatpush1.msra.mxu0 0.0
    %2520 = vmatprep.subr.mxu0 0.0
    %2521 = vmatpush1.msra.mxu0 0.0
    %2522 = vmatprep.mubr.f32.mxu0 0.0
    %2523 = vmatmul.mubr.f32.gmra.mrb[0].mxu0 %v2385
    %v2524 = vpop.f32.mrb[0].mxu0
    %v2525 = vadd.f32 0.0, %v2524
    %v2526 = vpop.f32.mrb[0].mxu0
    %2527 = vdwg.mxu0
    %v2530 = vrot.slane %v2454, 6
    %v2531 = vrot.slane %v2456, 6
    %v2534 = vadd.f32 %v471, %v2530
    %v2535 = vadd.f32 %v473, %v2531
    %v2536 = vxor.u32 %v2534, 2147483648
    %v2537 = vxor.u32 %v2535, 2147483648
    %v2538 = vmul.f32 %v2536, 1.442695
    %v2539 = vpow.pop %v2538
    %v2540 = vmul.f32 %v2537, 1.442695
    %v2541 = vpow.pop %v2540
    %v2542 = vadd.f32 %v2539, 1.0
    %v2543 = vadd.f32 %v2541, 1.0
    %v2544 = vrcp.pop %v2542
    %v2545 = vmul.f32 1.0, %v2544
    %v2546 = vrcp.pop %v2543
    %v2547 = vmul.f32 1.0, %v2546
    %v2548 = vadd.f32 %v2525, %v2200
    %v2550 = vrot.slane %v2548, 6
    %v2552 = vmul.f32 %v2545, %v2550
    %v2553 = vadd.f32 %v542, %v2552
    %v2554 = vtanh.pop %v2553
    %v2555 = vsub.f32 1.0, %v2547
    %v2556 = vmul.f32 %v2555, %v2554
    %v2557 = vrot.slane %v2383, 7
    %v2559 = vmul.f32 %v2547, %v2557
    %v2560 = vadd.f32 %v2556, %v2559
    %v2562 = vrot.slane %v2560, 2
    %2564 = vmatprep.subr.mxu0 %v1995
    %2565 = vmatpush1.msra.mxu0 %v1994
    %2566 = vmatprep.subr.mxu0 %v1998
    %2567 = vmatpush1.msra.mxu0 %v1997
    %2568 = vmatprep.subr.mxu0 %v2001
    %2569 = vmatpush1.msra.mxu0 %v2000
    %2570 = vmatprep.subr.mxu0 %v2004
    %2571 = vmatpush1.msra.mxu0 %v2003
    %2572 = vmatprep.subr.mxu0 %v2007
    %2573 = vmatpush1.msra.mxu0 %v2006
    %2574 = vmatprep.subr.mxu0 %v2010
    %2575 = vmatpush1.msra.mxu0 %v2009
    %2576 = vmatprep.subr.mxu0 %v2013
    %2577 = vmatpush1.msra.mxu0 %v2012
    %2578 = vmatprep.subr.mxu0 %v2016
    %2579 = vmatpush1.msra.mxu0 %v2015
    %2580 = vmatprep.subr.mxu0 %v2019
    %2581 = vmatpush1.msra.mxu0 %v2018
    %2582 = vmatprep.subr.mxu0 %v2022
    %2583 = vmatpush1.msra.mxu0 %v2021
    %2584 = vmatprep.subr.mxu0 %v2025
    %2585 = vmatpush1.msra.mxu0 %v2024
    %2586 = vmatprep.subr.mxu0 %v2028
    %2587 = vmatpush1.msra.mxu0 %v2027
    %2588 = vmatprep.subr.mxu0 %v2031
    %2589 = vmatpush1.msra.mxu0 %v2030
    %2590 = vmatprep.subr.mxu0 %v2034
    %2591 = vmatpush1.msra.mxu0 %v2033
    %2592 = vmatprep.subr.mxu0 %v2037
    %2593 = vmatpush1.msra.mxu0 %v2036
    %2594 = vmatprep.subr.mxu0 %v2040
    %2595 = vmatpush1.msra.mxu0 %v2039
    %2596 = vmatprep.subr.mxu0 0.0
    %2597 = vmatpush1.msra.mxu0 0.0
    %2598 = vmatprep.subr.mxu0 0.0
    %2599 = vmatpush1.msra.mxu0 0.0
    %2600 = vmatprep.subr.mxu0 0.0
    %2601 = vmatpush1.msra.mxu0 0.0
    %2602 = vmatprep.subr.mxu0 0.0
    %2603 = vmatpush1.msra.mxu0 0.0
    %2604 = vmatprep.subr.mxu0 0.0
    %2605 = vmatpush1.msra.mxu0 0.0
    %2606 = vmatprep.subr.mxu0 0.0
    %2607 = vmatpush1.msra.mxu0 0.0
    %2608 = vmatprep.subr.mxu0 0.0
    %2609 = vmatpush1.msra.mxu0 0.0
    %2610 = vmatprep.subr.mxu0 0.0
    %2611 = vmatpush1.msra.mxu0 0.0
    %2612 = vmatprep.subr.mxu0 0.0
    %2613 = vmatpush1.msra.mxu0 0.0
    %2614 = vmatprep.subr.mxu0 0.0
    %2615 = vmatpush1.msra.mxu0 0.0
    %2616 = vmatprep.subr.mxu0 0.0
    %2617 = vmatpush1.msra.mxu0 0.0
    %2618 = vmatprep.subr.mxu0 0.0
    %2619 = vmatpush1.msra.mxu0 0.0
    %2620 = vmatprep.subr.mxu0 0.0
    %2621 = vmatpush1.msra.mxu0 0.0
    %2622 = vmatprep.subr.mxu0 0.0
    %2623 = vmatpush1.msra.mxu0 0.0
    %2624 = vmatprep.subr.mxu0 0.0
    %2625 = vmatpush1.msra.mxu0 0.0
    %2626 = vmatprep.subr.mxu0 0.0
    %2627 = vmatpush1.msra.mxu0 0.0
    %2628 = vmatprep.mubr.f32.mxu0 0.0
    %2629 = vmatmul.mubr.f32.gmra.mrb[0].mxu0 %v2562
    %v2630 = vpop.f32.mrb[0].mxu0
    %v2631 = vadd.f32 0.0, %v2630
    %v2632 = vpop.f32.mrb[0].mxu0
    %v2633 = vadd.f32 0.0, %v2632
    %2634 = vdwg.mxu0
    %2635 = vmatprep.subr.mxu0 0.0
    %2636 = vmatpush1.msra.mxu0 %v1996
    %2637 = vmatprep.subr.mxu0 0.0
    %2638 = vmatpush1.msra.mxu0 %v1999
    %2639 = vmatprep.subr.mxu0 0.0
    %2640 = vmatpush1.msra.mxu0 %v2002
    %2641 = vmatprep.subr.mxu0 0.0
    %2642 = vmatpush1.msra.mxu0 %v2005
    %2643 = vmatprep.subr.mxu0 0.0
    %2644 = vmatpush1.msra.mxu0 %v2008
    %2645 = vmatprep.subr.mxu0 0.0
    %2646 = vmatpush1.msra.mxu0 %v2011
    %2647 = vmatprep.subr.mxu0 0.0
    %2648 = vmatpush1.msra.mxu0 %v2014
    %2649 = vmatprep.subr.mxu0 0.0
    %2650 = vmatpush1.msra.mxu0 %v2017
    %2651 = vmatprep.subr.mxu0 0.0
    %2652 = vmatpush1.msra.mxu0 %v2020
    %2653 = vmatprep.subr.mxu0 0.0
    %2654 = vmatpush1.msra.mxu0 %v2023
    %2655 = vmatprep.subr.mxu0 0.0
    %2656 = vmatpush1.msra.mxu0 %v2026
    %2657 = vmatprep.subr.mxu0 0.0
    %2658 = vmatpush1.msra.mxu0 %v2029
    %2659 = vmatprep.subr.mxu0 0.0
    %2660 = vmatpush1.msra.mxu0 %v2032
    %2661 = vmatprep.subr.mxu0 0.0
    %2662 = vmatpush1.msra.mxu0 %v2035
    %2663 = vmatprep.subr.mxu0 0.0
    %2664 = vmatpush1.msra.mxu0 %v2038
    %2665 = vmatprep.subr.mxu0 0.0
    %2666 = vmatpush1.msra.mxu0 %v2041
    %2667 = vmatprep.subr.mxu0 0.0
    %2668 = vmatpush1.msra.mxu0 0.0
    %2669 = vmatprep.subr.mxu0 0.0
    %2670 = vmatpush1.msra.mxu0 0.0
    %2671 = vmatprep.subr.mxu0 0.0
    %2672 = vmatpush1.msra.mxu0 0.0
    %2673 = vmatprep.subr.mxu0 0.0
    %2674 = vmatpush1.msra.mxu0 0.0
    %2675 = vmatprep.subr.mxu0 0.0
    %2676 = vmatpush1.msra.mxu0 0.0
    %2677 = vmatprep.subr.mxu0 0.0
    %2678 = vmatpush1.msra.mxu0 0.0
    %2679 = vmatprep.subr.mxu0 0.0
    %2680 = vmatpush1.msra.mxu0 0.0
    %2681 = vmatprep.subr.mxu0 0.0
    %2682 = vmatpush1.msra.mxu0 0.0
    %2683 = vmatprep.subr.mxu0 0.0
    %2684 = vmatpush1.msra.mxu0 0.0
    %2685 = vmatprep.subr.mxu0 0.0
    %2686 = vmatpush1.msra.mxu0 0.0
    %2687 = vmatprep.subr.mxu0 0.0
    %2688 = vmatpush1.msra.mxu0 0.0
    %2689 = vmatprep.subr.mxu0 0.0
    %2690 = vmatpush1.msra.mxu0 0.0
    %2691 = vmatprep.subr.mxu0 0.0
    %2692 = vmatpush1.msra.mxu0 0.0
    %2693 = vmatprep.subr.mxu0 0.0
    %2694 = vmatpush1.msra.mxu0 0.0
    %2695 = vmatprep.subr.mxu0 0.0
    %2696 = vmatpush1.msra.mxu0 0.0
    %2697 = vmatprep.subr.mxu0 0.0
    %2698 = vmatpush1.msra.mxu0 0.0
    %2699 = vmatprep.mubr.f32.mxu0 0.0
    %2700 = vmatmul.mubr.f32.gmra.mrb[0].mxu0 %v2562
    %v2701 = vpop.f32.mrb[0].mxu0
    %v2702 = vadd.f32 0.0, %v2701
    %v2703 = vpop.f32.mrb[0].mxu0
    %2704 = vdwg.mxu0
    %v2707 = vrot.slane %v2631, 5
    %v2708 = vrot.slane %v2633, 5
    %v2711 = vadd.f32 %v471, %v2707
    %v2712 = vadd.f32 %v473, %v2708
    %v2713 = vxor.u32 %v2711, 2147483648
    %v2714 = vxor.u32 %v2712, 2147483648
    %v2715 = vmul.f32 %v2713, 1.442695
    %v2716 = vpow.pop %v2715
    %v2717 = vmul.f32 %v2714, 1.442695
    %v2718 = vpow.pop %v2717
    %v2719 = vadd.f32 %v2716, 1.0
    %v2720 = vadd.f32 %v2718, 1.0
    %v2721 = vrcp.pop %v2719
    %v2722 = vmul.f32 1.0, %v2721
    %v2723 = vrcp.pop %v2720
    %v2724 = vmul.f32 1.0, %v2723
    %v2725 = vadd.f32 %v2702, %v2200
    %v2727 = vrot.slane %v2725, 5
    %v2729 = vmul.f32 %v2722, %v2727
    %v2730 = vadd.f32 %v542, %v2729
    %v2731 = vtanh.pop %v2730
    %v2732 = vsub.f32 1.0, %v2724
    %v2733 = vmul.f32 %v2732, %v2731
    %v2734 = vrot.slane %v2560, 7
    %v2736 = vmul.f32 %v2724, %v2734
    %v2737 = vadd.f32 %v2733, %v2736
    %v2739 = vrot.slane %v2737, 3
    %2741 = vmatprep.subr.mxu0 %v1995
    %2742 = vmatpush1.msra.mxu0 %v1994
    %2743 = vmatprep.subr.mxu0 %v1998
    %2744 = vmatpush1.msra.mxu0 %v1997
    %2745 = vmatprep.subr.mxu0 %v2001
    %2746 = vmatpush1.msra.mxu0 %v2000
    %2747 = vmatprep.subr.mxu0 %v2004
    %2748 = vmatpush1.msra.mxu0 %v2003
    %2749 = vmatprep.subr.mxu0 %v2007
    %2750 = vmatpush1.msra.mxu0 %v2006
    %2751 = vmatprep.subr.mxu0 %v2010
    %2752 = vmatpush1.msra.mxu0 %v2009
    %2753 = vmatprep.subr.mxu0 %v2013
    %2754 = vmatpush1.msra.mxu0 %v2012
    %2755 = vmatprep.subr.mxu0 %v2016
    %2756 = vmatpush1.msra.mxu0 %v2015
    %2757 = vmatprep.subr.mxu0 %v2019
    %2758 = vmatpush1.msra.mxu0 %v2018
    %2759 = vmatprep.subr.mxu0 %v2022
    %2760 = vmatpush1.msra.mxu0 %v2021
    %2761 = vmatprep.subr.mxu0 %v2025
    %2762 = vmatpush1.msra.mxu0 %v2024
    %2763 = vmatprep.subr.mxu0 %v2028
    %2764 = vmatpush1.msra.mxu0 %v2027
    %2765 = vmatprep.subr.mxu0 %v2031
    %2766 = vmatpush1.msra.mxu0 %v2030
    %2767 = vmatprep.subr.mxu0 %v2034
    %2768 = vmatpush1.msra.mxu0 %v2033
    %2769 = vmatprep.subr.mxu0 %v2037
    %2770 = vmatpush1.msra.mxu0 %v2036
    %2771 = vmatprep.subr.mxu0 %v2040
    %2772 = vmatpush1.msra.mxu0 %v2039
    %2773 = vmatprep.subr.mxu0 0.0
    %2774 = vmatpush1.msra.mxu0 0.0
    %2775 = vmatprep.subr.mxu0 0.0
    %2776 = vmatpush1.msra.mxu0 0.0
    %2777 = vmatprep.subr.mxu0 0.0
    %2778 = vmatpush1.msra.mxu0 0.0
    %2779 = vmatprep.subr.mxu0 0.0
    %2780 = vmatpush1.msra.mxu0 0.0
    %2781 = vmatprep.subr.mxu0 0.0
    %2782 = vmatpush1.msra.mxu0 0.0
    %2783 = vmatprep.subr.mxu0 0.0
    %2784 = vmatpush1.msra.mxu0 0.0
    %2785 = vmatprep.subr.mxu0 0.0
    %2786 = vmatpush1.msra.mxu0 0.0
    %2787 = vmatprep.subr.mxu0 0.0
    %2788 = vmatpush1.msra.mxu0 0.0
    %2789 = vmatprep.subr.mxu0 0.0
    %2790 = vmatpush1.msra.mxu0 0.0
    %2791 = vmatprep.subr.mxu0 0.0
    %2792 = vmatpush1.msra.mxu0 0.0
    %2793 = vmatprep.subr.mxu0 0.0
    %2794 = vmatpush1.msra.mxu0 0.0
    %2795 = vmatprep.subr.mxu0 0.0
    %2796 = vmatpush1.msra.mxu0 0.0
    %2797 = vmatprep.subr.mxu0 0.0
    %2798 = vmatpush1.msra.mxu0 0.0
    %2799 = vmatprep.subr.mxu0 0.0
    %2800 = vmatpush1.msra.mxu0 0.0
    %2801 = vmatprep.subr.mxu0 0.0
    %2802 = vmatpush1.msra.mxu0 0.0
    %2803 = vmatprep.subr.mxu0 0.0
    %2804 = vmatpush1.msra.mxu0 0.0
    %2805 = vmatprep.mubr.f32.mxu0 0.0
    %2806 = vmatmul.mubr.f32.gmra.mrb[0].mxu0 %v2739
    %v2807 = vpop.f32.mrb[0].mxu0
    %v2808 = vadd.f32 0.0, %v2807
    %v2809 = vpop.f32.mrb[0].mxu0
    %v2810 = vadd.f32 0.0, %v2809
    %2811 = vdwg.mxu0
    %2812 = vmatprep.subr.mxu0 0.0
    %2813 = vmatpush1.msra.mxu0 %v1996
    %2814 = vmatprep.subr.mxu0 0.0
    %2815 = vmatpush1.msra.mxu0 %v1999
    %2816 = vmatprep.subr.mxu0 0.0
    %2817 = vmatpush1.msra.mxu0 %v2002
    %2818 = vmatprep.subr.mxu0 0.0
    %2819 = vmatpush1.msra.mxu0 %v2005
    %2820 = vmatprep.subr.mxu0 0.0
    %2821 = vmatpush1.msra.mxu0 %v2008
    %2822 = vmatprep.subr.mxu0 0.0
    %2823 = vmatpush1.msra.mxu0 %v2011
    %2824 = vmatprep.subr.mxu0 0.0
    %2825 = vmatpush1.msra.mxu0 %v2014
    %2826 = vmatprep.subr.mxu0 0.0
    %2827 = vmatpush1.msra.mxu0 %v2017
    %2828 = vmatprep.subr.mxu0 0.0
    %2829 = vmatpush1.msra.mxu0 %v2020
    %2830 = vmatprep.subr.mxu0 0.0
    %2831 = vmatpush1.msra.mxu0 %v2023
    %2832 = vmatprep.subr.mxu0 0.0
    %2833 = vmatpush1.msra.mxu0 %v2026
    %2834 = vmatprep.subr.mxu0 0.0
    %2835 = vmatpush1.msra.mxu0 %v2029
    %2836 = vmatprep.subr.mxu0 0.0
    %2837 = vmatpush1.msra.mxu0 %v2032
    %2838 = vmatprep.subr.mxu0 0.0
    %2839 = vmatpush1.msra.mxu0 %v2035
    %2840 = vmatprep.subr.mxu0 0.0
    %2841 = vmatpush1.msra.mxu0 %v2038
    %2842 = vmatprep.subr.mxu0 0.0
    %2843 = vmatpush1.msra.mxu0 %v2041
    %2844 = vmatprep.subr.mxu0 0.0
    %2845 = vmatpush1.msra.mxu0 0.0
    %2846 = vmatprep.subr.mxu0 0.0
    %2847 = vmatpush1.msra.mxu0 0.0
    %2848 = vmatprep.subr.mxu0 0.0
    %2849 = vmatpush1.msra.mxu0 0.0
    %2850 = vmatprep.subr.mxu0 0.0
    %2851 = vmatpush1.msra.mxu0 0.0
    %2852 = vmatprep.subr.mxu0 0.0
    %2853 = vmatpush1.msra.mxu0 0.0
    %2854 = vmatprep.subr.mxu0 0.0
    %2855 = vmatpush1.msra.mxu0 0.0
    %2856 = vmatprep.subr.mxu0 0.0
    %2857 = vmatpush1.msra.mxu0 0.0
    %2858 = vmatprep.subr.mxu0 0.0
    %2859 = vmatpush1.msra.mxu0 0.0
    %2860 = vmatprep.subr.mxu0 0.0
    %2861 = vmatpush1.msra.mxu0 0.0
    %2862 = vmatprep.subr.mxu0 0.0
    %2863 = vmatpush1.msra.mxu0 0.0
    %2864 = vmatprep.subr.mxu0 0.0
    %2865 = vmatpush1.msra.mxu0 0.0
    %2866 = vmatprep.subr.mxu0 0.0
    %2867 = vmatpush1.msra.mxu0 0.0
    %2868 = vmatprep.subr.mxu0 0.0
    %2869 = vmatpush1.msra.mxu0 0.0
    %2870 = vmatprep.subr.mxu0 0.0
    %2871 = vmatpush1.msra.mxu0 0.0
    %2872 = vmatprep.subr.mxu0 0.0
    %2873 = vmatpush1.msra.mxu0 0.0
    %2874 = vmatprep.subr.mxu0 0.0
    %2875 = vmatpush1.msra.mxu0 0.0
    %2876 = vmatprep.mubr.f32.mxu0 0.0
    %2877 = vmatmul.mubr.f32.gmra.mrb[0].mxu0 %v2739
    %v2878 = vpop.f32.mrb[0].mxu0
    %v2879 = vadd.f32 0.0, %v2878
    %v2880 = vpop.f32.mrb[0].mxu0
    %2881 = vdwg.mxu0
    %v2884 = vrot.slane %v2808, 4
    %v2885 = vrot.slane %v2810, 4
    %v2888 = vadd.f32 %v471, %v2884
    %v2889 = vadd.f32 %v473, %v2885
    %v2890 = vxor.u32 %v2888, 2147483648
    %v2891 = vxor.u32 %v2889, 2147483648
    %v2892 = vmul.f32 %v2890, 1.442695
    %v2893 = vpow.pop %v2892
    %v2894 = vmul.f32 %v2891, 1.442695
    %v2895 = vpow.pop %v2894
    %v2896 = vadd.f32 %v2893, 1.0
    %v2897 = vadd.f32 %v2895, 1.0
    %v2898 = vrcp.pop %v2896
    %v2899 = vmul.f32 1.0, %v2898
    %v2900 = vrcp.pop %v2897
    %v2901 = vmul.f32 1.0, %v2900
    %v2902 = vadd.f32 %v2879, %v2200
    %v2904 = vrot.slane %v2902, 4
    %v2906 = vmul.f32 %v2899, %v2904
    %v2907 = vadd.f32 %v542, %v2906
    %v2908 = vtanh.pop %v2907
    %v2909 = vsub.f32 1.0, %v2901
    %v2910 = vmul.f32 %v2909, %v2908
    %v2911 = vrot.slane %v2737, 7
    %v2913 = vmul.f32 %v2901, %v2911
    %v2914 = vadd.f32 %v2910, %v2913
    %v2916 = vrot.slane %v2914, 4
    %2918 = vmatprep.subr.mxu0 %v1995
    %2919 = vmatpush1.msra.mxu0 %v1994
    %2920 = vmatprep.subr.mxu0 %v1998
    %2921 = vmatpush1.msra.mxu0 %v1997
    %2922 = vmatprep.subr.mxu0 %v2001
    %2923 = vmatpush1.msra.mxu0 %v2000
    %2924 = vmatprep.subr.mxu0 %v2004
    %2925 = vmatpush1.msra.mxu0 %v2003
    %2926 = vmatprep.subr.mxu0 %v2007
    %2927 = vmatpush1.msra.mxu0 %v2006
    %2928 = vmatprep.subr.mxu0 %v2010
    %2929 = vmatpush1.msra.mxu0 %v2009
    %2930 = vmatprep.subr.mxu0 %v2013
    %2931 = vmatpush1.msra.mxu0 %v2012
    %2932 = vmatprep.subr.mxu0 %v2016
    %2933 = vmatpush1.msra.mxu0 %v2015
    %2934 = vmatprep.subr.mxu0 %v2019
    %2935 = vmatpush1.msra.mxu0 %v2018
    %2936 = vmatprep.subr.mxu0 %v2022
    %2937 = vmatpush1.msra.mxu0 %v2021
    %2938 = vmatprep.subr.mxu0 %v2025
    %2939 = vmatpush1.msra.mxu0 %v2024
    %2940 = vmatprep.subr.mxu0 %v2028
    %2941 = vmatpush1.msra.mxu0 %v2027
    %2942 = vmatprep.subr.mxu0 %v2031
    %2943 = vmatpush1.msra.mxu0 %v2030
    %2944 = vmatprep.subr.mxu0 %v2034
    %2945 = vmatpush1.msra.mxu0 %v2033
    %2946 = vmatprep.subr.mxu0 %v2037
    %2947 = vmatpush1.msra.mxu0 %v2036
    %2948 = vmatprep.subr.mxu0 %v2040
    %2949 = vmatpush1.msra.mxu0 %v2039
    %2950 = vmatprep.subr.mxu0 0.0
    %2951 = vmatpush1.msra.mxu0 0.0
    %2952 = vmatprep.subr.mxu0 0.0
    %2953 = vmatpush1.msra.mxu0 0.0
    %2954 = vmatprep.subr.mxu0 0.0
    %2955 = vmatpush1.msra.mxu0 0.0
    %2956 = vmatprep.subr.mxu0 0.0
    %2957 = vmatpush1.msra.mxu0 0.0
    %2958 = vmatprep.subr.mxu0 0.0
    %2959 = vmatpush1.msra.mxu0 0.0
    %2960 = vmatprep.subr.mxu0 0.0
    %2961 = vmatpush1.msra.mxu0 0.0
    %2962 = vmatprep.subr.mxu0 0.0
    %2963 = vmatpush1.msra.mxu0 0.0
    %2964 = vmatprep.subr.mxu0 0.0
    %2965 = vmatpush1.msra.mxu0 0.0
    %2966 = vmatprep.subr.mxu0 0.0
    %2967 = vmatpush1.msra.mxu0 0.0
    %2968 = vmatprep.subr.mxu0 0.0
    %2969 = vmatpush1.msra.mxu0 0.0
    %2970 = vmatprep.subr.mxu0 0.0
    %2971 = vmatpush1.msra.mxu0 0.0
    %2972 = vmatprep.subr.mxu0 0.0
    %2973 = vmatpush1.msra.mxu0 0.0
    %2974 = vmatprep.subr.mxu0 0.0
    %2975 = vmatpush1.msra.mxu0 0.0
    %2976 = vmatprep.subr.mxu0 0.0
    %2977 = vmatpush1.msra.mxu0 0.0
    %2978 = vmatprep.subr.mxu0 0.0
    %2979 = vmatpush1.msra.mxu0 0.0
    %2980 = vmatprep.subr.mxu0 0.0
    %2981 = vmatpush1.msra.mxu0 0.0
    %2982 = vmatprep.mubr.f32.mxu0 0.0
    %2983 = vmatmul.mubr.f32.gmra.mrb[0].mxu0 %v2916
    %v2984 = vpop.f32.mrb[0].mxu0
    %v2985 = vadd.f32 0.0, %v2984
    %v2986 = vpop.f32.mrb[0].mxu0
    %v2987 = vadd.f32 0.0, %v2986
    %2988 = vdwg.mxu0
    %2989 = vmatprep.subr.mxu0 0.0
    %2990 = vmatpush1.msra.mxu0 %v1996
    %2991 = vmatprep.subr.mxu0 0.0
    %2992 = vmatpush1.msra.mxu0 %v1999
    %2993 = vmatprep.subr.mxu0 0.0
    %2994 = vmatpush1.msra.mxu0 %v2002
    %2995 = vmatprep.subr.mxu0 0.0
    %2996 = vmatpush1.msra.mxu0 %v2005
    %2997 = vmatprep.subr.mxu0 0.0
    %2998 = vmatpush1.msra.mxu0 %v2008
    %2999 = vmatprep.subr.mxu0 0.0
    %3000 = vmatpush1.msra.mxu0 %v2011
    %3001 = vmatprep.subr.mxu0 0.0
    %3002 = vmatpush1.msra.mxu0 %v2014
    %3003 = vmatprep.subr.mxu0 0.0
    %3004 = vmatpush1.msra.mxu0 %v2017
    %3005 = vmatprep.subr.mxu0 0.0
    %3006 = vmatpush1.msra.mxu0 %v2020
    %3007 = vmatprep.subr.mxu0 0.0
    %3008 = vmatpush1.msra.mxu0 %v2023
    %3009 = vmatprep.subr.mxu0 0.0
    %3010 = vmatpush1.msra.mxu0 %v2026
    %3011 = vmatprep.subr.mxu0 0.0
    %3012 = vmatpush1.msra.mxu0 %v2029
    %3013 = vmatprep.subr.mxu0 0.0
    %3014 = vmatpush1.msra.mxu0 %v2032
    %3015 = vmatprep.subr.mxu0 0.0
    %3016 = vmatpush1.msra.mxu0 %v2035
    %3017 = vmatprep.subr.mxu0 0.0
    %3018 = vmatpush1.msra.mxu0 %v2038
    %3019 = vmatprep.subr.mxu0 0.0
    %3020 = vmatpush1.msra.mxu0 %v2041
    %3021 = vmatprep.subr.mxu0 0.0
    %3022 = vmatpush1.msra.mxu0 0.0
    %3023 = vmatprep.subr.mxu0 0.0
    %3024 = vmatpush1.msra.mxu0 0.0
    %3025 = vmatprep.subr.mxu0 0.0
    %3026 = vmatpush1.msra.mxu0 0.0
    %3027 = vmatprep.subr.mxu0 0.0
    %3028 = vmatpush1.msra.mxu0 0.0
    %3029 = vmatprep.subr.mxu0 0.0
    %3030 = vmatpush1.msra.mxu0 0.0
    %3031 = vmatprep.subr.mxu0 0.0
    %3032 = vmatpush1.msra.mxu0 0.0
    %3033 = vmatprep.subr.mxu0 0.0
    %3034 = vmatpush1.msra.mxu0 0.0
    %3035 = vmatprep.subr.mxu0 0.0
    %3036 = vmatpush1.msra.mxu0 0.0
    %3037 = vmatprep.subr.mxu0 0.0
    %3038 = vmatpush1.msra.mxu0 0.0
    %3039 = vmatprep.subr.mxu0 0.0
    %3040 = vmatpush1.msra.mxu0 0.0
    %3041 = vmatprep.subr.mxu0 0.0
    %3042 = vmatpush1.msra.mxu0 0.0
    %3043 = vmatprep.subr.mxu0 0.0
    %3044 = vmatpush1.msra.mxu0 0.0
    %3045 = vmatprep.subr.mxu0 0.0
    %3046 = vmatpush1.msra.mxu0 0.0
    %3047 = vmatprep.subr.mxu0 0.0
    %3048 = vmatpush1.msra.mxu0 0.0
    %3049 = vmatprep.subr.mxu0 0.0
    %3050 = vmatpush1.msra.mxu0 0.0
    %3051 = vmatprep.subr.mxu0 0.0
    %3052 = vmatpush1.msra.mxu0 0.0
    %3053 = vmatprep.mubr.f32.mxu0 0.0
    %3054 = vmatmul.mubr.f32.gmra.mrb[0].mxu0 %v2916
    %v3055 = vpop.f32.mrb[0].mxu0
    %v3056 = vadd.f32 0.0, %v3055
    %v3057 = vpop.f32.mrb[0].mxu0
    %3058 = vdwg.mxu0
    %v3061 = vrot.slane %v2985, 3
    %v3062 = vrot.slane %v2987, 3
    %v3065 = vadd.f32 %v471, %v3061
    %v3066 = vadd.f32 %v473, %v3062
    %v3067 = vxor.u32 %v3065, 2147483648
    %v3068 = vxor.u32 %v3066, 2147483648
    %v3069 = vmul.f32 %v3067, 1.442695
    %v3070 = vpow.pop %v3069
    %v3071 = vmul.f32 %v3068, 1.442695
    %v3072 = vpow.pop %v3071
    %v3073 = vadd.f32 %v3070, 1.0
    %v3074 = vadd.f32 %v3072, 1.0
    %v3075 = vrcp.pop %v3073
    %v3076 = vmul.f32 1.0, %v3075
    %v3077 = vrcp.pop %v3074
    %v3078 = vmul.f32 1.0, %v3077
    %v3079 = vadd.f32 %v3056, %v2200
    %v3081 = vrot.slane %v3079, 3
    %v3083 = vmul.f32 %v3076, %v3081
    %v3084 = vadd.f32 %v542, %v3083
    %v3085 = vtanh.pop %v3084
    %v3086 = vsub.f32 1.0, %v3078
    %v3087 = vmul.f32 %v3086, %v3085
    %v3088 = vrot.slane %v2914, 7
    %v3090 = vmul.f32 %v3078, %v3088
    %v3091 = vadd.f32 %v3087, %v3090
    %v3093 = vrot.slane %v3091, 5
    %3095 = vmatprep.subr.mxu0 %v1995
    %3096 = vmatpush1.msra.mxu0 %v1994
    %3097 = vmatprep.subr.mxu0 %v1998
    %3098 = vmatpush1.msra.mxu0 %v1997
    %3099 = vmatprep.subr.mxu0 %v2001
    %3100 = vmatpush1.msra.mxu0 %v2000
    %3101 = vmatprep.subr.mxu0 %v2004
    %3102 = vmatpush1.msra.mxu0 %v2003
    %3103 = vmatprep.subr.mxu0 %v2007
    %3104 = vmatpush1.msra.mxu0 %v2006
    %3105 = vmatprep.subr.mxu0 %v2010
    %3106 = vmatpush1.msra.mxu0 %v2009
    %3107 = vmatprep.subr.mxu0 %v2013
    %3108 = vmatpush1.msra.mxu0 %v2012
    %3109 = vmatprep.subr.mxu0 %v2016
    %3110 = vmatpush1.msra.mxu0 %v2015
    %3111 = vmatprep.subr.mxu0 %v2019
    %3112 = vmatpush1.msra.mxu0 %v2018
    %3113 = vmatprep.subr.mxu0 %v2022
    %3114 = vmatpush1.msra.mxu0 %v2021
    %3115 = vmatprep.subr.mxu0 %v2025
    %3116 = vmatpush1.msra.mxu0 %v2024
    %3117 = vmatprep.subr.mxu0 %v2028
    %3118 = vmatpush1.msra.mxu0 %v2027
    %3119 = vmatprep.subr.mxu0 %v2031
    %3120 = vmatpush1.msra.mxu0 %v2030
    %3121 = vmatprep.subr.mxu0 %v2034
    %3122 = vmatpush1.msra.mxu0 %v2033
    %3123 = vmatprep.subr.mxu0 %v2037
    %3124 = vmatpush1.msra.mxu0 %v2036
    %3125 = vmatprep.subr.mxu0 %v2040
    %3126 = vmatpush1.msra.mxu0 %v2039
    %3127 = vmatprep.subr.mxu0 0.0
    %3128 = vmatpush1.msra.mxu0 0.0
    %3129 = vmatprep.subr.mxu0 0.0
    %3130 = vmatpush1.msra.mxu0 0.0
    %3131 = vmatprep.subr.mxu0 0.0
    %3132 = vmatpush1.msra.mxu0 0.0
    %3133 = vmatprep.subr.mxu0 0.0
    %3134 = vmatpush1.msra.mxu0 0.0
    %3135 = vmatprep.subr.mxu0 0.0
    %3136 = vmatpush1.msra.mxu0 0.0
    %3137 = vmatprep.subr.mxu0 0.0
    %3138 = vmatpush1.msra.mxu0 0.0
    %3139 = vmatprep.subr.mxu0 0.0
    %3140 = vmatpush1.msra.mxu0 0.0
    %3141 = vmatprep.subr.mxu0 0.0
    %3142 = vmatpush1.msra.mxu0 0.0
    %3143 = vmatprep.subr.mxu0 0.0
    %3144 = vmatpush1.msra.mxu0 0.0
    %3145 = vmatprep.subr.mxu0 0.0
    %3146 = vmatpush1.msra.mxu0 0.0
    %3147 = vmatprep.subr.mxu0 0.0
    %3148 = vmatpush1.msra.mxu0 0.0
    %3149 = vmatprep.subr.mxu0 0.0
    %3150 = vmatpush1.msra.mxu0 0.0
    %3151 = vmatprep.subr.mxu0 0.0
    %3152 = vmatpush1.msra.mxu0 0.0
    %3153 = vmatprep.subr.mxu0 0.0
    %3154 = vmatpush1.msra.mxu0 0.0
    %3155 = vmatprep.subr.mxu0 0.0
    %3156 = vmatpush1.msra.mxu0 0.0
    %3157 = vmatprep.subr.mxu0 0.0
    %3158 = vmatpush1.msra.mxu0 0.0
    %3159 = vmatprep.mubr.f32.mxu0 0.0
    %3160 = vmatmul.mubr.f32.gmra.mrb[0].mxu0 %v3093
    %v3161 = vpop.f32.mrb[0].mxu0
    %v3162 = vadd.f32 0.0, %v3161
    %v3163 = vpop.f32.mrb[0].mxu0
    %v3164 = vadd.f32 0.0, %v3163
    %3165 = vdwg.mxu0
    %3166 = vmatprep.subr.mxu0 0.0
    %3167 = vmatpush1.msra.mxu0 %v1996
    %3168 = vmatprep.subr.mxu0 0.0
    %3169 = vmatpush1.msra.mxu0 %v1999
    %3170 = vmatprep.subr.mxu0 0.0
    %3171 = vmatpush1.msra.mxu0 %v2002
    %3172 = vmatprep.subr.mxu0 0.0
    %3173 = vmatpush1.msra.mxu0 %v2005
    %3174 = vmatprep.subr.mxu0 0.0
    %3175 = vmatpush1.msra.mxu0 %v2008
    %3176 = vmatprep.subr.mxu0 0.0
    %3177 = vmatpush1.msra.mxu0 %v2011
    %3178 = vmatprep.subr.mxu0 0.0
    %3179 = vmatpush1.msra.mxu0 %v2014
    %3180 = vmatprep.subr.mxu0 0.0
    %3181 = vmatpush1.msra.mxu0 %v2017
    %3182 = vmatprep.subr.mxu0 0.0
    %3183 = vmatpush1.msra.mxu0 %v2020
    %3184 = vmatprep.subr.mxu0 0.0
    %3185 = vmatpush1.msra.mxu0 %v2023
    %3186 = vmatprep.subr.mxu0 0.0
    %3187 = vmatpush1.msra.mxu0 %v2026
    %3188 = vmatprep.subr.mxu0 0.0
    %3189 = vmatpush1.msra.mxu0 %v2029
    %3190 = vmatprep.subr.mxu0 0.0
    %3191 = vmatpush1.msra.mxu0 %v2032
    %3192 = vmatprep.subr.mxu0 0.0
    %3193 = vmatpush1.msra.mxu0 %v2035
    %3194 = vmatprep.subr.mxu0 0.0
    %3195 = vmatpush1.msra.mxu0 %v2038
    %3196 = vmatprep.subr.mxu0 0.0
    %3197 = vmatpush1.msra.mxu0 %v2041
    %3198 = vmatprep.subr.mxu0 0.0
    %3199 = vmatpush1.msra.mxu0 0.0
    %3200 = vmatprep.subr.mxu0 0.0
    %3201 = vmatpush1.msra.mxu0 0.0
    %3202 = vmatprep.subr.mxu0 0.0
    %3203 = vmatpush1.msra.mxu0 0.0
    %3204 = vmatprep.subr.mxu0 0.0
    %3205 = vmatpush1.msra.mxu0 0.0
    %3206 = vmatprep.subr.mxu0 0.0
    %3207 = vmatpush1.msra.mxu0 0.0
    %3208 = vmatprep.subr.mxu0 0.0
    %3209 = vmatpush1.msra.mxu0 0.0
    %3210 = vmatprep.subr.mxu0 0.0
    %3211 = vmatpush1.msra.mxu0 0.0
    %3212 = vmatprep.subr.mxu0 0.0
    %3213 = vmatpush1.msra.mxu0 0.0
    %3214 = vmatprep.subr.mxu0 0.0
    %3215 = vmatpush1.msra.mxu0 0.0
    %3216 = vmatprep.subr.mxu0 0.0
    %3217 = vmatpush1.msra.mxu0 0.0
    %3218 = vmatprep.subr.mxu0 0.0
    %3219 = vmatpush1.msra.mxu0 0.0
    %3220 = vmatprep.subr.mxu0 0.0
    %3221 = vmatpush1.msra.mxu0 0.0
    %3222 = vmatprep.subr.mxu0 0.0
    %3223 = vmatpush1.msra.mxu0 0.0
    %3224 = vmatprep.subr.mxu0 0.0
    %3225 = vmatpush1.msra.mxu0 0.0
    %3226 = vmatprep.subr.mxu0 0.0
    %3227 = vmatpush1.msra.mxu0 0.0
    %3228 = vmatprep.subr.mxu0 0.0
    %3229 = vmatpush1.msra.mxu0 0.0
    %3230 = vmatprep.mubr.f32.mxu0 0.0
    %3231 = vmatmul.mubr.f32.gmra.mrb[0].mxu0 %v3093
    %v3232 = vpop.f32.mrb[0].mxu0
    %v3233 = vadd.f32 0.0, %v3232
    %v3234 = vpop.f32.mrb[0].mxu0
    %3235 = vdwg.mxu0
    %v3238 = vrot.slane %v3162, 2
    %v3239 = vrot.slane %v3164, 2
    %v3242 = vadd.f32 %v471, %v3238
    %v3243 = vadd.f32 %v473, %v3239
    %v3244 = vxor.u32 %v3242, 2147483648
    %v3245 = vxor.u32 %v3243, 2147483648
    %v3246 = vmul.f32 %v3244, 1.442695
    %v3247 = vpow.pop %v3246
    %v3248 = vmul.f32 %v3245, 1.442695
    %v3249 = vpow.pop %v3248
    %v3250 = vadd.f32 %v3247, 1.0
    %v3251 = vadd.f32 %v3249, 1.0
    %v3252 = vrcp.pop %v3250
    %v3253 = vmul.f32 1.0, %v3252
    %v3254 = vrcp.pop %v3251
    %v3255 = vmul.f32 1.0, %v3254
    %v3256 = vadd.f32 %v3233, %v2200
    %v3258 = vrot.slane %v3256, 2
    %v3260 = vmul.f32 %v3253, %v3258
    %v3261 = vadd.f32 %v542, %v3260
    %v3262 = vtanh.pop %v3261
    %v3263 = vsub.f32 1.0, %v3255
    %v3264 = vmul.f32 %v3263, %v3262
    %v3265 = vrot.slane %v3091, 7
    %v3267 = vmul.f32 %v3255, %v3265
    %v3268 = vadd.f32 %v3264, %v3267
    %v3270 = vrot.slane %v3268, 6
    %3272 = vmatprep.subr.mxu0 %v1995
    %3273 = vmatpush1.msra.mxu0 %v1994
    %3274 = vmatprep.subr.mxu0 %v1998
    %3275 = vmatpush1.msra.mxu0 %v1997
    %3276 = vmatprep.subr.mxu0 %v2001
    %3277 = vmatpush1.msra.mxu0 %v2000
    %3278 = vmatprep.subr.mxu0 %v2004
    %3279 = vmatpush1.msra.mxu0 %v2003
    %3280 = vmatprep.subr.mxu0 %v2007
    %3281 = vmatpush1.msra.mxu0 %v2006
    %3282 = vmatprep.subr.mxu0 %v2010
    %3283 = vmatpush1.msra.mxu0 %v2009
    %3284 = vmatprep.subr.mxu0 %v2013
    %3285 = vmatpush1.msra.mxu0 %v2012
    %3286 = vmatprep.subr.mxu0 %v2016
    %3287 = vmatpush1.msra.mxu0 %v2015
    %3288 = vmatprep.subr.mxu0 %v2019
    %3289 = vmatpush1.msra.mxu0 %v2018
    %3290 = vmatprep.subr.mxu0 %v2022
    %3291 = vmatpush1.msra.mxu0 %v2021
    %3292 = vmatprep.subr.mxu0 %v2025
    %3293 = vmatpush1.msra.mxu0 %v2024
    %3294 = vmatprep.subr.mxu0 %v2028
    %3295 = vmatpush1.msra.mxu0 %v2027
    %3296 = vmatprep.subr.mxu0 %v2031
    %3297 = vmatpush1.msra.mxu0 %v2030
    %3298 = vmatprep.subr.mxu0 %v2034
    %3299 = vmatpush1.msra.mxu0 %v2033
    %3300 = vmatprep.subr.mxu0 %v2037
    %3301 = vmatpush1.msra.mxu0 %v2036
    %3302 = vmatprep.subr.mxu0 %v2040
    %3303 = vmatpush1.msra.mxu0 %v2039
    %3304 = vmatprep.subr.mxu0 0.0
    %3305 = vmatpush1.msra.mxu0 0.0
    %3306 = vmatprep.subr.mxu0 0.0
    %3307 = vmatpush1.msra.mxu0 0.0
    %3308 = vmatprep.subr.mxu0 0.0
    %3309 = vmatpush1.msra.mxu0 0.0
    %3310 = vmatprep.subr.mxu0 0.0
    %3311 = vmatpush1.msra.mxu0 0.0
    %3312 = vmatprep.subr.mxu0 0.0
    %3313 = vmatpush1.msra.mxu0 0.0
    %3314 = vmatprep.subr.mxu0 0.0
    %3315 = vmatpush1.msra.mxu0 0.0
    %3316 = vmatprep.subr.mxu0 0.0
    %3317 = vmatpush1.msra.mxu0 0.0
    %3318 = vmatprep.subr.mxu0 0.0
    %3319 = vmatpush1.msra.mxu0 0.0
    %3320 = vmatprep.subr.mxu0 0.0
    %3321 = vmatpush1.msra.mxu0 0.0
    %3322 = vmatprep.subr.mxu0 0.0
    %3323 = vmatpush1.msra.mxu0 0.0
    %3324 = vmatprep.subr.mxu0 0.0
    %3325 = vmatpush1.msra.mxu0 0.0
    %3326 = vmatprep.subr.mxu0 0.0
    %3327 = vmatpush1.msra.mxu0 0.0
    %3328 = vmatprep.subr.mxu0 0.0
    %3329 = vmatpush1.msra.mxu0 0.0
    %3330 = vmatprep.subr.mxu0 0.0
    %3331 = vmatpush1.msra.mxu0 0.0
    %3332 = vmatprep.subr.mxu0 0.0
    %3333 = vmatpush1.msra.mxu0 0.0
    %3334 = vmatprep.subr.mxu0 0.0
    %3335 = vmatpush1.msra.mxu0 0.0
    %3336 = vmatprep.mubr.f32.mxu0 0.0
    %3337 = vmatmul.mubr.f32.gmra.mrb[0].mxu0 %v3270
    %v3338 = vpop.f32.mrb[0].mxu0
    %v3339 = vadd.f32 0.0, %v3338
    %v3340 = vpop.f32.mrb[0].mxu0
    %v3341 = vadd.f32 0.0, %v3340
    %3342 = vdwg.mxu0
    %3343 = vmatprep.subr.mxu0 0.0
    %3344 = vmatpush1.msra.mxu0 %v1996
    %3345 = vmatprep.subr.mxu0 0.0
    %3346 = vmatpush1.msra.mxu0 %v1999
    %3347 = vmatprep.subr.mxu0 0.0
    %3348 = vmatpush1.msra.mxu0 %v2002
    %3349 = vmatprep.subr.mxu0 0.0
    %3350 = vmatpush1.msra.mxu0 %v2005
    %3351 = vmatprep.subr.mxu0 0.0
    %3352 = vmatpush1.msra.mxu0 %v2008
    %3353 = vmatprep.subr.mxu0 0.0
    %3354 = vmatpush1.msra.mxu0 %v2011
    %3355 = vmatprep.subr.mxu0 0.0
    %3356 = vmatpush1.msra.mxu0 %v2014
    %3357 = vmatprep.subr.mxu0 0.0
    %3358 = vmatpush1.msra.mxu0 %v2017
    %3359 = vmatprep.subr.mxu0 0.0
    %3360 = vmatpush1.msra.mxu0 %v2020
    %3361 = vmatprep.subr.mxu0 0.0
    %3362 = vmatpush1.msra.mxu0 %v2023
    %3363 = vmatprep.subr.mxu0 0.0
    %3364 = vmatpush1.msra.mxu0 %v2026
    %3365 = vmatprep.subr.mxu0 0.0
    %3366 = vmatpush1.msra.mxu0 %v2029
    %3367 = vmatprep.subr.mxu0 0.0
    %3368 = vmatpush1.msra.mxu0 %v2032
    %3369 = vmatprep.subr.mxu0 0.0
    %3370 = vmatpush1.msra.mxu0 %v2035
    %3371 = vmatprep.subr.mxu0 0.0
    %3372 = vmatpush1.msra.mxu0 %v2038
    %3373 = vmatprep.subr.mxu0 0.0
    %3374 = vmatpush1.msra.mxu0 %v2041
    %3375 = vmatprep.subr.mxu0 0.0
    %3376 = vmatpush1.msra.mxu0 0.0
    %3377 = vmatprep.subr.mxu0 0.0
    %3378 = vmatpush1.msra.mxu0 0.0
    %3379 = vmatprep.subr.mxu0 0.0
    %3380 = vmatpush1.msra.mxu0 0.0
    %3381 = vmatprep.subr.mxu0 0.0
    %3382 = vmatpush1.msra.mxu0 0.0
    %3383 = vmatprep.subr.mxu0 0.0
    %3384 = vmatpush1.msra.mxu0 0.0
    %3385 = vmatprep.subr.mxu0 0.0
    %3386 = vmatpush1.msra.mxu0 0.0
    %3387 = vmatprep.subr.mxu0 0.0
    %3388 = vmatpush1.msra.mxu0 0.0
    %3389 = vmatprep.subr.mxu0 0.0
    %3390 = vmatpush1.msra.mxu0 0.0
    %3391 = vmatprep.subr.mxu0 0.0
    %3392 = vmatpush1.msra.mxu0 0.0
    %3393 = vmatprep.subr.mxu0 0.0
    %3394 = vmatpush1.msra.mxu0 0.0
    %3395 = vmatprep.subr.mxu0 0.0
    %3396 = vmatpush1.msra.mxu0 0.0
    %3397 = vmatprep.subr.mxu0 0.0
    %3398 = vmatpush1.msra.mxu0 0.0
    %3399 = vmatprep.subr.mxu0 0.0
    %3400 = vmatpush1.msra.mxu0 0.0
    %3401 = vmatprep.subr.mxu0 0.0
    %3402 = vmatpush1.msra.mxu0 0.0
    %3403 = vmatprep.subr.mxu0 0.0
    %3404 = vmatpush1.msra.mxu0 0.0
    %3405 = vmatprep.subr.mxu0 0.0
    %3406 = vmatpush1.msra.mxu0 0.0
    %3407 = vmatprep.mubr.f32.mxu0 0.0
    %3408 = vmatmul.mubr.f32.gmra.mrb[0].mxu0 %v3270
    %v3409 = vpop.f32.mrb[0].mxu0
    %v3410 = vadd.f32 0.0, %v3409
    %v3411 = vpop.f32.mrb[0].mxu0
    %3412 = vdwg.mxu0
    %v3415 = vrot.slane %v3339, 1
    %v3416 = vrot.slane %v3341, 1
    %v3419 = vadd.f32 %v471, %v3415
    %v3420 = vadd.f32 %v473, %v3416
    %v3421 = vxor.u32 %v3419, 2147483648
    %v3422 = vxor.u32 %v3420, 2147483648
    %v3423 = vmul.f32 %v3421, 1.442695
    %v3424 = vpow.pop %v3423
    %v3425 = vmul.f32 %v3422, 1.442695
    %v3426 = vpow.pop %v3425
    %v3427 = vadd.f32 %v3424, 1.0
    %v3428 = vadd.f32 %v3426, 1.0
    %v3429 = vrcp.pop %v3427
    %v3430 = vmul.f32 1.0, %v3429
    %v3431 = vrcp.pop %v3428
    %v3432 = vmul.f32 1.0, %v3431
    %v3433 = vadd.f32 %v3410, %v2200
    %v3435 = vrot.slane %v3433, 1
    %v3437 = vmul.f32 %v3430, %v3435
    %v3438 = vadd.f32 %v542, %v3437
    %v3439 = vtanh.pop %v3438
    %v3440 = vsub.f32 1.0, %v3432
    %v3441 = vmul.f32 %v3440, %v3439
    %v3442 = vrot.slane %v3268, 7
    %v3444 = vmul.f32 %v3432, %v3442
    %v3445 = vadd.f32 %v3441, %v3444
    %vm3446 = vcmask 1040384
    %v3447 = vsel %vm3446, %v2208, %v2383
    %vm3448 = vcmask 1041408
    %v3449 = vsel %vm3448, %v3447, %v2560
    %vm3450 = vcmask 1042432
    %v3451 = vsel %vm3450, %v3449, %v2737
    %vm3452 = vcmask 1043456
    %v3453 = vsel %vm3452, %v3451, %v2914
    %vm3454 = vcmask 1044480
    %v3455 = vsel %vm3454, %v3453, %v3091
    %vm3456 = vcmask 1045504
    %v3457 = vsel %vm3456, %v3455, %v3268
    %vm3458 = vcmask 1046528
    %v3459 = vsel %vm3458, %v3457, %v3445
    %v3460 = vld [vmem:[%s10] sm:$0xff]
    %v3461 = vld [vmem:[%s10 + $0x8] sm:$0xff]
    %v3462 = vld [vmem:[%s10 + $0x10] sm:$0xff]
    %v3463 = vld [vmem:[%s10 + $0x18] sm:$0xff]
    %v3464 = vld [vmem:[%s10 + $0x20] sm:$0xff]
    %v3465 = vld [vmem:[%s10 + $0x28] sm:$0xff]
    %v3466 = vld [vmem:[%s10 + $0x30] sm:$0xff]
    %v3467 = vld [vmem:[%s10 + $0x38] sm:$0xff]
    %v3468 = vld [vmem:[%s10 + $0x40] sm:$0xff]
    %v3469 = vld [vmem:[%s10 + $0x48] sm:$0xff]
    %v3470 = vld [vmem:[%s10 + $0x50] sm:$0xff]
    %v3471 = vld [vmem:[%s10 + $0x58] sm:$0xff]
    %v3472 = vld [vmem:[%s10 + $0x60] sm:$0xff]
    %v3473 = vld [vmem:[%s10 + $0x68] sm:$0xff]
    %v3474 = vld [vmem:[%s10 + $0x70] sm:$0xff]
    %v3475 = vld [vmem:[%s10 + $0x78] sm:$0xff]
    %v3476 = vld [vmem:[%s10 + $0x80] sm:$0xff]
    %v3477 = vld [vmem:[%s10 + $0x88] sm:$0xff]
    %v3478 = vld [vmem:[%s10 + $0x90] sm:$0xff]
    %v3479 = vld [vmem:[%s10 + $0x98] sm:$0xff]
    %v3480 = vld [vmem:[%s10 + $0xa0] sm:$0xff]
    %v3481 = vld [vmem:[%s10 + $0xa8] sm:$0xff]
    %v3482 = vld [vmem:[%s10 + $0xb0] sm:$0xff]
    %v3483 = vld [vmem:[%s10 + $0xb8] sm:$0xff]
    %v3484 = vld [vmem:[%s10 + $0xc0] sm:$0xff]
    %v3485 = vld [vmem:[%s10 + $0xc8] sm:$0xff]
    %v3486 = vld [vmem:[%s10 + $0xd0] sm:$0xff]
    %v3487 = vld [vmem:[%s10 + $0xd8] sm:$0xff]
    %v3488 = vld [vmem:[%s10 + $0xe0] sm:$0xff]
    %v3489 = vld [vmem:[%s10 + $0xe8] sm:$0xff]
    %v3490 = vld [vmem:[%s10 + $0xf0] sm:$0xff]
    %v3491 = vld [vmem:[%s10 + $0xf8] sm:$0xff]
    %v3492 = vld [vmem:[#allocation13] sm:$0x3]
    %v3494 = vlaneseq
    %v3495 = vshrl.u32 %v3494, 7
    %v3496 = vsub.s32 0, %v3495
    %v3497 = vrot.slane %v3492, %v3496
    %v3498 = vlaneseq
    %v3499 = vshrl.u32 %v3498, 7
    %v3500 = vsub.s32 1, %v3499
    %v3501 = vrot.slane %v3492, %v3500
    %3504 = vmatprep.subr.mxu0 %v3461
    %3505 = vmatpush1.msra.mxu0 %v3460
    %3506 = vmatprep.subr.mxu0 %v3463
    %3507 = vmatpush1.msra.mxu0 %v3462
    %3508 = vmatprep.subr.mxu0 %v3465
    %3509 = vmatpush1.msra.mxu0 %v3464
    %3510 = vmatprep.subr.mxu0 %v3467
    %3511 = vmatpush1.msra.mxu0 %v3466
    %3512 = vmatprep.subr.mxu0 %v3469
    %3513 = vmatpush1.msra.mxu0 %v3468
    %3514 = vmatprep.subr.mxu0 %v3471
    %3515 = vmatpush1.msra.mxu0 %v3470
    %3516 = vmatprep.subr.mxu0 %v3473
    %3517 = vmatpush1.msra.mxu0 %v3472
    %3518 = vmatprep.subr.mxu0 %v3475
    %3519 = vmatpush1.msra.mxu0 %v3474
    %3520 = vmatprep.subr.mxu0 %v3477
    %3521 = vmatpush1.msra.mxu0 %v3476
    %3522 = vmatprep.subr.mxu0 %v3479
    %3523 = vmatpush1.msra.mxu0 %v3478
    %3524 = vmatprep.subr.mxu0 %v3481
    %3525 = vmatpush1.msra.mxu0 %v3480
    %3526 = vmatprep.subr.mxu0 %v3483
    %3527 = vmatpush1.msra.mxu0 %v3482
    %3528 = vmatprep.subr.mxu0 %v3485
    %3529 = vmatpush1.msra.mxu0 %v3484
    %3530 = vmatprep.subr.mxu0 %v3487
    %3531 = vmatpush1.msra.mxu0 %v3486
    %3532 = vmatprep.subr.mxu0 %v3489
    %3533 = vmatpush1.msra.mxu0 %v3488
    %3534 = vmatprep.subr.mxu0 %v3491
    %3535 = vmatpush1.msra.mxu0 %v3490
    %3536 = vmatprep.subr.mxu0 0.0
    %3537 = vmatpush1.msra.mxu0 0.0
    %3538 = vmatprep.subr.mxu0 0.0
    %3539 = vmatpush1.msra.mxu0 0.0
    %3540 = vmatprep.subr.mxu0 0.0
    %3541 = vmatpush1.msra.mxu0 0.0
    %3542 = vmatprep.subr.mxu0 0.0
    %3543 = vmatpush1.msra.mxu0 0.0
    %3544 = vmatprep.subr.mxu0 0.0
    %3545 = vmatpush1.msra.mxu0 0.0
    %3546 = vmatprep.subr.mxu0 0.0
    %3547 = vmatpush1.msra.mxu0 0.0
    %3548 = vmatprep.subr.mxu0 0.0
    %3549 = vmatpush1.msra.mxu0 0.0
    %3550 = vmatprep.subr.mxu0 0.0
    %3551 = vmatpush1.msra.mxu0 0.0
    %3552 = vmatprep.subr.mxu0 0.0
    %3553 = vmatpush1.msra.mxu0 0.0
    %3554 = vmatprep.subr.mxu0 0.0
    %3555 = vmatpush1.msra.mxu0 0.0
    %3556 = vmatprep.subr.mxu0 0.0
    %3557 = vmatpush1.msra.mxu0 0.0
    %3558 = vmatprep.subr.mxu0 0.0
    %3559 = vmatpush1.msra.mxu0 0.0
    %3560 = vmatprep.subr.mxu0 0.0
    %3561 = vmatpush1.msra.mxu0 0.0
    %3562 = vmatprep.subr.mxu0 0.0
    %3563 = vmatpush1.msra.mxu0 0.0
    %3564 = vmatprep.subr.mxu0 0.0
    %3565 = vmatpush1.msra.mxu0 0.0
    %3566 = vmatprep.subr.mxu0 0.0
    %3567 = vmatpush1.msra.mxu0 0.0
    %3568 = vmatprep.mubr.f32.mxu0 0.0
    %3569 = vmatmul.mubr.f32.gmra.mrb[0].mxu0 %v3459
    %v3570 = vpop.f32.mrb[0].mxu0
    %v3571 = vadd.f32 %v3497, %v3570
    %v3572 = vpop.f32.mrb[0].mxu0
    %v3573 = vadd.f32 %v3501, %v3572
    %3574 = vdwg.mxu0
    %3575 = vst [vmem:[#allocation14] sm:$0xff] %v3571
    %3576 = vst [vmem:[#allocation14 + $0x8] sm:$0xff] %v3573
    // Predicated region
    $region78: #{seq2seq_forward.1} parent=1 // pred_check
      _
    $region79: #{seq2seq_forward.1} parent=1 // pred_check_branch
      %3578 = sbr.rel (0) target = $region81
    $region80: #{seq2seq_forward.1} parent=1 // pred_region
      %s3580 = ssub.s32 256, 256
      %3581 = vsyncadd [#allocation4], %s3580
      %s3583 = sshll.u32 [#allocation14], 4
      %s3584 = int_to_ptr.vmem [resolvable:$true] %s3583
      %3586 = dma.vmem_to_hbm [thread:$0]  %s3584, 256, %s12, [#allocation4]
    $region81: #{seq2seq_forward.1} parent=1 // pred_fallthru
      _
    // Predicated region
    $region82: #{seq2seq_forward.1} parent=1 // pred_check
      _
    $region83: #{seq2seq_forward.1} parent=1 // pred_check_branch
      %3588 = sbr.rel (0) target = $region85
    $region84: #{seq2seq_forward.1} parent=1 // pred_region
      %3589 = dma.done [#allocation4], 256
    $region85: #{seq2seq_forward.1} parent=1 // pred_fallthru
      _
    %3590 = vsyncpa [#allocation3], 1
    %3591 = vsyncpa [#allocation6], 1
    %3592 = vsyncpa [#allocation9], 1
    %3593 = vsyncpa [#allocation12], 1
    %3594 = vsyncpa [#allocation4], 1

</llo_original>
